<compile_context>
chip_gen: v7x
topology: tpu7x:2x2x1
jax: 0.10.0
libtpu: 0.0.40
codegen_flags: <defaults>
</compile_context>

<pallas_src>
import jax
import jax.numpy as jnp
from jax.experimental import pallas as pl
from jax.experimental.pallas import tpu as pltpu


# ----------------------------------------------------------------------------
# helpers
# ----------------------------------------------------------------------------
def _layernorm(x, gamma, beta, eps=1e-5):
    mu = jnp.mean(x, axis=-1, keepdims=True)
    var = jnp.mean((x - mu) ** 2, axis=-1, keepdims=True)
    return (x - mu) * jax.lax.rsqrt(var + eps) * gamma + beta


# ----------------------------------------------------------------------------
# Kernel A: fused PER-ENTITY branch computation
#   inputs : roi_features tile, text-embedding tile, all weights (bf16 mats,
#            f32 biases / LN params)
#   outputs: sub-branch table row tile, obj-branch table row tile  (both f32,
#            lane-dense 128-wide)
# ----------------------------------------------------------------------------
def _entity_kernel(
    roi_ref, emb_ref,
    postw_ref, postb_ref,                      # post_emb
    ws1_ref, bs1_ref, ws2_ref, bs2_ref,        # W_sub MLP
    wo1_ref, bo1_ref, wo2_ref, bo2_ref,        # W_obj MLP
    v1_ref, bv1_ref, v2_ref, bv2_ref,          # vis2sem
    wgs_ref, bgs_ref, wgo_ref, bgo_ref,        # gate_sub / gate_obj (fused cat)
    ls_ref, bls_ref, lo_ref, blo_ref,          # linear_sub / linear_obj
    gam_s_ref, bet_s_ref, gam_o_ref, bet_o_ref,  # norm_sub / norm_obj
    sub_out_ref, obj_out_ref,
):
    f32 = jnp.float32
    bf16 = jnp.bfloat16
    mlp = sub_out_ref.shape[-1]
    tile = roi_ref.shape[0]

    # --- post_emb (fused): (tile, in_ch) @ (in_ch, 2*mlp) + b -------------
    rep = jnp.dot(roi_ref[...], postw_ref[...],
                  preferred_element_type=f32) + postb_ref[...]
    # entity_rep.view(N, 2, mlp): index 0 -> obj_rep, index 1 -> sub_rep
    obj_rep = rep[:, :mlp].astype(bf16)
    sub_rep = rep[:, mlp:].astype(bf16)

    emb = emb_ref[...]  # bf16 text embedding

    # --- W_sub / W_obj : MLP(embed_dim, mlp//2, mlp, 2) -------------------
    s_h = jnp.maximum(
        jnp.dot(emb, ws1_ref[...], preferred_element_type=f32) + bs1_ref[...], 0.0)
    s_embed = jnp.dot(s_h.astype(bf16), ws2_ref[...],
                      preferred_element_type=f32) + bs2_ref[...]
    o_h = jnp.maximum(
        jnp.dot(emb, wo1_ref[...], preferred_element_type=f32) + bo1_ref[...], 0.0)
    o_embed = jnp.dot(o_h.astype(bf16), wo2_ref[...],
                      preferred_element_type=f32) + bo2_ref[...]

    # --- vis2sem, batched over stacked [sub_rep; obj_rep] rows ------------
    v_in = jnp.concatenate([sub_rep, obj_rep], axis=0)          # (2*tile, mlp)
    v_h = jnp.maximum(
        jnp.dot(v_in, v1_ref[...], preferred_element_type=f32) + bv1_ref[...], 0.0)
    sem = jnp.dot(v_h.astype(bf16), v2_ref[...],
                  preferred_element_type=f32) + bv2_ref[...]
    sem_sub = sem[:tile]
    sem_obj = sem[tile:]

    # --- gates: sigmoid(Linear(cat(embed, sem))) -- one fused K=2*mlp matmul
    gate_s = jax.nn.sigmoid(
        jnp.dot(jnp.concatenate([s_embed, sem_sub], axis=-1).astype(bf16),
                wgs_ref[...], preferred_element_type=f32) + bgs_ref[...])
    gate_o = jax.nn.sigmoid(
        jnp.dot(jnp.concatenate([o_embed, sem_obj], axis=-1).astype(bf16),
                wgo_ref[...], preferred_element_type=f32) + bgo_ref[...])

    sub = s_embed + sem_sub * gate_s
    obj = o_embed + sem_obj * gate_o

    # --- residual linear + LayerNorm (dropout = identity at inference) ----
    sub = _layernorm(
        jnp.maximum(jnp.dot(sub.astype(bf16), ls_ref[...],
                            preferred_element_type=f32) + bls_ref[...], 0.0) + sub,
        gam_s_ref[...], bet_s_ref[...])
    obj = _layernorm(
        jnp.maximum(jnp.dot(obj.astype(bf16), lo_ref[...],
                            preferred_element_type=f32) + blo_ref[...], 0.0) + obj,
        gam_o_ref[...], bet_o_ref[...])

    sub_out_ref[...] = sub
    obj_out_ref[...] = obj


_MAT_KEYS = ["post_w", "ws1", "ws2", "wo1", "wo2", "v1", "v2",
             "wgs", "wgo", "ls", "lo"]


def pallas_entity_branches(roi_features, entity_embeds, params, *, tile=128):
    """Compute the sub- and obj-branch feature for every entity."""
    n, in_ch = roi_features.shape
    embed_dim = entity_embeds.shape[1]
    mlp = params["ls"].shape[0]

    n_pad = max(tile, ((n + tile - 1) // tile) * tile)
    pad = n_pad - n
    roi = roi_features
    emb = entity_embeds
    if pad:
        roi = jnp.pad(roi, ((0, pad), (0, 0)))
        emb = jnp.pad(emb, ((0, pad), (0, 0)))
    roi = roi.astype(jnp.bfloat16)
    emb = emb.astype(jnp.bfloat16)

    # bf16 matmul weights, f32 biases / LayerNorm params
    mats = {k: params[k].astype(jnp.bfloat16) for k in _MAT_KEYS}
    weights = [
        mats["post_w"], params["post_b"],
        mats["ws1"], params["bs1"], mats["ws2"], params["bs2"],
        mats["wo1"], params["bo1"], mats["wo2"], params["bo2"],
        mats["v1"], params["bv1"], mats["v2"], params["bv2"],
        mats["wgs"], params["bgs"], mats["wgo"], params["bgo"],
        mats["ls"], params["bls"], mats["lo"], params["blo"],
        params["gam_s"], params["bet_s"], params["gam_o"], params["bet_o"],
    ]

    def row_spec(cols):
        return pl.BlockSpec((tile, cols), lambda i: (i, 0))

    def w_spec(w):
        # grid-invariant full-array weight block
        return pl.BlockSpec(w.shape, lambda i: (0, 0))

    # TODO(synk): at production PENet dims (mlp_dim 2048-4096) the resident
    # weight set no longer fits v7x's 64 MiB VMEM; add K/N tiling grid axes
    # for the big weights (v1/v2/wgs/wgo/ls/lo) with a f32 VMEM accumulator.
    in_specs = [row_spec(in_ch), row_spec(embed_dim)] + [w_spec(w) for w in weights]

    sub_tbl, obj_tbl = pl.pallas_call(
        _entity_kernel,
        out_shape=(jax.ShapeDtypeStruct((n_pad, mlp), jnp.float32),
                   jax.ShapeDtypeStruct((n_pad, mlp), jnp.float32)),
        grid_spec=pltpu.PrefetchScalarGridSpec(
            num_scalar_prefetch=0,
            grid=(n_pad // tile,),
            in_specs=in_specs,
            out_specs=[row_spec(mlp), row_spec(mlp)],
        ),
        compiler_params=pltpu.CompilerParams(
            dimension_semantics=("parallel",)),
    )(roi, emb, *weights)

    return sub_tbl[:n], obj_tbl[:n]


# ----------------------------------------------------------------------------
# Kernel B: per-pair fusion_func(sub, obj) = relu(sub+obj) - (sub-obj)^2
# ----------------------------------------------------------------------------
def _fusion_kernel(s_ref, o_ref, out_ref):
    s = s_ref[...]
    o = o_ref[...]
    out_ref[...] = jnp.maximum(s + o, 0.0) - (s - o) ** 2


def pallas_pair_fusion(sub_pairs, obj_pairs, *, tile=128):
    n, mlp = sub_pairs.shape
    n_pad = max(tile, ((n + tile - 1) // tile) * tile)
    pad = n_pad - n
    s = sub_pairs
    o = obj_pairs
    if pad:
        s = jnp.pad(s, ((0, pad), (0, 0)))
        o = jnp.pad(o, ((0, pad), (0, 0)))

    out = pl.pallas_call(
        _fusion_kernel,
        out_shape=jax.ShapeDtypeStruct((n_pad, mlp), jnp.float32),
        grid_spec=pltpu.PrefetchScalarGridSpec(
            num_scalar_prefetch=0,
            grid=(n_pad // tile,),
            in_specs=[pl.BlockSpec((tile, mlp), lambda i: (i, 0)),
                      pl.BlockSpec((tile, mlp), lambda i: (i, 0))],
            out_specs=pl.BlockSpec((tile, mlp), lambda i: (i, 0)),
        ),
        compiler_params=pltpu.CompilerParams(
            dimension_semantics=("parallel",)),
    )(s, o)
    return out[:n]


# ----------------------------------------------------------------------------
# Parameter construction (deterministic, synthetic)
# ----------------------------------------------------------------------------
def make_params(key, in_channels, embed_dim, mlp_dim, num_obj_classes):
    ks = jax.random.split(key, 32)
    s = 0.02

    def rnd(k, shape):
        return (s * jax.random.normal(k, shape)).astype(jnp.float32)

    p = {}
    # post_emb : Linear(in_channels, 2*mlp_dim)
    p["post_w"] = rnd(ks[0], (in_channels, 2 * mlp_dim))
    p["post_b"] = rnd(ks[1], (1, 2 * mlp_dim))
    # obj_embed : Embedding(num_obj_classes, embed_dim)   (synthetic "GloVe")
    p["obj_embed_w"] = rnd(ks[2], (num_obj_classes, embed_dim))
    # W_sub / W_obj : MLP(embed_dim, mlp//2, mlp, 2)
    p["ws1"] = rnd(ks[3], (embed_dim, mlp_dim // 2)); p["bs1"] = rnd(ks[4], (1, mlp_dim // 2))
    p["ws2"] = rnd(ks[5], (mlp_dim // 2, mlp_dim));  p["bs2"] = rnd(ks[6], (1, mlp_dim))
    p["wo1"] = rnd(ks[7], (embed_dim, mlp_dim // 2)); p["bo1"] = rnd(ks[8], (1, mlp_dim // 2))
    p["wo2"] = rnd(ks[9], (mlp_dim // 2, mlp_dim));  p["bo2"] = rnd(ks[10], (1, mlp_dim))
    # vis2sem : Linear(mlp, 2*mlp) -> ReLU -> Dropout(id) -> Linear(2*mlp, mlp)
    p["v1"] = rnd(ks[11], (mlp_dim, 2 * mlp_dim)); p["bv1"] = rnd(ks[12], (1, 2 * mlp_dim))
    p["v2"] = rnd(ks[13], (2 * mlp_dim, mlp_dim)); p["bv2"] = rnd(ks[14], (1, mlp_dim))
    # gate_sub / gate_obj : Linear(2*mlp, mlp) on cat([embed, sem])
    # (rows [0:mlp] act on embed, rows [mlp:2*mlp] on sem — matches cat order)
    p["wgs"] = rnd(ks[15], (2 * mlp_dim, mlp_dim)); p["bgs"] = rnd(ks[16], (1, mlp_dim))
    p["wgo"] = rnd(ks[17], (2 * mlp_dim, mlp_dim)); p["bgo"] = rnd(ks[18], (1, mlp_dim))
    # linear_sub / linear_obj
    p["ls"] = rnd(ks[19], (mlp_dim, mlp_dim)); p["bls"] = rnd(ks[20], (1, mlp_dim))
    p["lo"] = rnd(ks[21], (mlp_dim, mlp_dim)); p["blo"] = rnd(ks[22], (1, mlp_dim))
    # LayerNorms
    p["gam_s"] = jnp.ones((1, mlp_dim), jnp.float32); p["bet_s"] = jnp.zeros((1, mlp_dim), jnp.float32)
    p["gam_o"] = jnp.ones((1, mlp_dim), jnp.float32); p["bet_o"] = jnp.zeros((1, mlp_dim), jnp.float32)
    return p


# ----------------------------------------------------------------------------
# Forward pass (PENetContext.forward, inference, use_gt_box branch)
# ----------------------------------------------------------------------------
def penet_context_forward(params, roi_features, obj_labels, rel_pair_idxs,
                          num_objs, num_obj_classes, mlp_dim):
    # encode_obj_labels: one-hot dists, predictions are the GT labels
    entity_dists = jax.nn.one_hot(obj_labels, num_obj_classes, dtype=jnp.float32)
    entity_preds = obj_labels

    # text embeddings of predicted labels (tiny table lookup, plain JAX)
    entity_embeds = params["obj_embed_w"][entity_preds]

    # per-entity sub/obj branch features (fused Pallas kernel; includes post_emb)
    sub_tbl, obj_tbl = pallas_entity_branches(roi_features, entity_embeds, params)

    # build global pair indices (per-image local idx + image offset)
    offsets = []
    off = 0
    for n in num_objs:
        offsets.append(off)
        off += n
    si = jnp.concatenate([p[:, 0] + o for p, o in zip(rel_pair_idxs, offsets)], axis=0)
    oi = jnp.concatenate([p[:, 1] + o for p, o in zip(rel_pair_idxs, offsets)], axis=0)

    # gather per-pair rows from the per-entity tables
    # TODO(synk): for very large n_pairs this gather could move in-kernel via
    # scalar-prefetched indices + manual DMA gather to avoid the HBM round trip.
    sub_pairs = jnp.take(sub_tbl, si, axis=0)
    obj_pairs = jnp.take(obj_tbl, oi, axis=0)

    # per-pair fusion_func (Pallas elementwise kernel)
    fusion_so = pallas_pair_fusion(sub_pairs, obj_pairs)

    # split entity_preds per image (mirrors torch .split)
    preds_split = [entity_preds[o:o + n] for n, o in zip(num_objs, offsets)]

    # TODO(synk): refine_obj_labels / nms_per_cls branch (obj_decode=True) is
    # data-dependent per-class NMS with no clean Pallas equivalent; omitted.
    return entity_dists, preds_split, fusion_so, None


# ----------------------------------------------------------------------------
if __name__ == "__main__":
    # small config consistent with the module (lane-dense mlp_dim = 128)
    in_channels = 256       # pooling_dim / roi feature dim
    mlp_dim = 128           # MLP_HEAD_DIM
    embed_dim = 128         # EMBED_DIM
    num_obj_classes = 16
    num_objs = [6, 5]       # two images

    key = jax.random.PRNGKey(0)
    k_par, k_roi, k_lab, k_p0, k_p1 = jax.random.split(key, 5)

    params = make_params(k_par, in_channels, embed_dim, mlp_dim, num_obj_classes)

    n_total_obj = sum(num_objs)
    roi_features = jax.random.normal(k_roi, (n_total_obj, in_channels), jnp.float32)
    obj_labels = jax.random.randint(k_lab, (n_total_obj,), 1, num_obj_classes)

    # relation pair indices per image (local indices into that image's objects)
    rel_pair_idxs = [
        jax.random.randint(k_p0, (8, 2), 0, num_objs[0]),
        jax.random.randint(k_p1, (6, 2), 0, num_objs[1]),
    ]

    entity_dists, entity_preds, fusion_so, _ = penet_context_forward(
        params, roi_features, obj_labels, rel_pair_idxs,
        num_objs, num_obj_classes, mlp_dim)

    jax.block_until_ready(fusion_so)
    jax.block_until_ready(entity_dists)

    assert entity_dists.shape == (n_total_obj, num_obj_classes)
    assert fusion_so.shape == (sum(r.shape[0] for r in rel_pair_idxs), mlp_dim)
    assert bool(jnp.all(jnp.isfinite(fusion_so)))

    print("KERNEL_OK")
</pallas_src>

<mosaic_0001>
module attributes {stable_mosaic.version = 11 : i64} {
  func.func @_entity_kernel(%arg0: i32, %arg1: memref<128x256xbf16, #tpu.memory_space<vmem>>, %arg2: memref<128x128xbf16, #tpu.memory_space<vmem>>, %arg3: memref<256x256xbf16, #tpu.memory_space<vmem>>, %arg4: memref<1x256xf32, #tpu.memory_space<vmem>>, %arg5: memref<128x64xbf16, #tpu.memory_space<vmem>>, %arg6: memref<1x64xf32, #tpu.memory_space<vmem>>, %arg7: memref<64x128xbf16, #tpu.memory_space<vmem>>, %arg8: memref<1x128xf32, #tpu.memory_space<vmem>>, %arg9: memref<128x64xbf16, #tpu.memory_space<vmem>>, %arg10: memref<1x64xf32, #tpu.memory_space<vmem>>, %arg11: memref<64x128xbf16, #tpu.memory_space<vmem>>, %arg12: memref<1x128xf32, #tpu.memory_space<vmem>>, %arg13: memref<128x256xbf16, #tpu.memory_space<vmem>>, %arg14: memref<1x256xf32, #tpu.memory_space<vmem>>, %arg15: memref<256x128xbf16, #tpu.memory_space<vmem>>, %arg16: memref<1x128xf32, #tpu.memory_space<vmem>>, %arg17: memref<256x128xbf16, #tpu.memory_space<vmem>>, %arg18: memref<1x128xf32, #tpu.memory_space<vmem>>, %arg19: memref<256x128xbf16, #tpu.memory_space<vmem>>, %arg20: memref<1x128xf32, #tpu.memory_space<vmem>>, %arg21: memref<128x128xbf16, #tpu.memory_space<vmem>>, %arg22: memref<1x128xf32, #tpu.memory_space<vmem>>, %arg23: memref<128x128xbf16, #tpu.memory_space<vmem>>, %arg24: memref<1x128xf32, #tpu.memory_space<vmem>>, %arg25: memref<1x128xf32, #tpu.memory_space<vmem>>, %arg26: memref<1x128xf32, #tpu.memory_space<vmem>>, %arg27: memref<1x128xf32, #tpu.memory_space<vmem>>, %arg28: memref<1x128xf32, #tpu.memory_space<vmem>>, %arg29: memref<128x128xf32, #tpu.memory_space<vmem>>, %arg30: memref<128x128xf32, #tpu.memory_space<vmem>>) attributes {dimension_semantics = [#tpu.dimension_semantics<parallel>], iteration_bounds = array<i64: 1>, scalar_prefetch = 0 : i64, scratch_operands = 0 : i64, tpu.core_type = #tpu.core_type<tc>, window_params = [{transform_indices = @transform_0, window_bounds = array<i64: 128, 256>}, {transform_indices = @transform_1, window_bounds = array<i64: 128, 128>}, {pipeline_mode = #tpu.pipeline_mode<synchronous>, transform_indices = @transform_2, window_bounds = array<i64: 256, 256>}, {pipeline_mode = #tpu.pipeline_mode<synchronous>, transform_indices = @transform_3, window_bounds = array<i64: 1, 256>}, {pipeline_mode = #tpu.pipeline_mode<synchronous>, transform_indices = @transform_4, window_bounds = array<i64: 128, 64>}, {pipeline_mode = #tpu.pipeline_mode<synchronous>, transform_indices = @transform_5, window_bounds = array<i64: 1, 64>}, {pipeline_mode = #tpu.pipeline_mode<synchronous>, transform_indices = @transform_6, window_bounds = array<i64: 64, 128>}, {pipeline_mode = #tpu.pipeline_mode<synchronous>, transform_indices = @transform_7, window_bounds = array<i64: 1, 128>}, {pipeline_mode = #tpu.pipeline_mode<synchronous>, transform_indices = @transform_8, window_bounds = array<i64: 128, 64>}, {pipeline_mode = #tpu.pipeline_mode<synchronous>, transform_indices = @transform_9, window_bounds = array<i64: 1, 64>}, {pipeline_mode = #tpu.pipeline_mode<synchronous>, transform_indices = @transform_10, window_bounds = array<i64: 64, 128>}, {pipeline_mode = #tpu.pipeline_mode<synchronous>, transform_indices = @transform_11, window_bounds = array<i64: 1, 128>}, {pipeline_mode = #tpu.pipeline_mode<synchronous>, transform_indices = @transform_12, window_bounds = array<i64: 128, 256>}, {pipeline_mode = #tpu.pipeline_mode<synchronous>, transform_indices = @transform_13, window_bounds = array<i64: 1, 256>}, {pipeline_mode = #tpu.pipeline_mode<synchronous>, transform_indices = @transform_14, window_bounds = array<i64: 256, 128>}, {pipeline_mode = #tpu.pipeline_mode<synchronous>, transform_indices = @transform_15, window_bounds = array<i64: 1, 128>}, {pipeline_mode = #tpu.pipeline_mode<synchronous>, transform_indices = @transform_16, window_bounds = array<i64: 256, 128>}, {pipeline_mode = #tpu.pipeline_mode<synchronous>, transform_indices = @transform_17, window_bounds = array<i64: 1, 128>}, {pipeline_mode = #tpu.pipeline_mode<synchronous>, transform_indices = @transform_18, window_bounds = array<i64: 256, 128>}, {pipeline_mode = #tpu.pipeline_mode<synchronous>, transform_indices = @transform_19, window_bounds = array<i64: 1, 128>}, {pipeline_mode = #tpu.pipeline_mode<synchronous>, transform_indices = @transform_20, window_bounds = array<i64: 128, 128>}, {pipeline_mode = #tpu.pipeline_mode<synchronous>, transform_indices = @transform_21, window_bounds = array<i64: 1, 128>}, {pipeline_mode = #tpu.pipeline_mode<synchronous>, transform_indices = @transform_22, window_bounds = array<i64: 128, 128>}, {pipeline_mode = #tpu.pipeline_mode<synchronous>, transform_indices = @transform_23, window_bounds = array<i64: 1, 128>}, {pipeline_mode = #tpu.pipeline_mode<synchronous>, transform_indices = @transform_24, window_bounds = array<i64: 1, 128>}, {pipeline_mode = #tpu.pipeline_mode<synchronous>, transform_indices = @transform_25, window_bounds = array<i64: 1, 128>}, {pipeline_mode = #tpu.pipeline_mode<synchronous>, transform_indices = @transform_26, window_bounds = array<i64: 1, 128>}, {pipeline_mode = #tpu.pipeline_mode<synchronous>, transform_indices = @transform_27, window_bounds = array<i64: 1, 128>}, {transform_indices = @transform_28, window_bounds = array<i64: 128, 128>}, {transform_indices = @transform_29, window_bounds = array<i64: 128, 128>}]} {
    %c0 = arith.constant 0 : index
    %c0_0 = arith.constant 0 : index
    %0 = vector.load %arg1[%c0, %c0_0] : memref<128x256xbf16, #tpu.memory_space<vmem>>, vector<128x256xbf16>
    %c0_1 = arith.constant 0 : index
    %c0_2 = arith.constant 0 : index
    %1 = vector.load %arg3[%c0_1, %c0_2] : memref<256x256xbf16, #tpu.memory_space<vmem>>, vector<256x256xbf16>
    %cst = arith.constant dense<0.000000e+00> : vector<128x256xf32>
    %2 = tpu.matmul %0, %1, %cst {dimension_numbers = #tpu.dot_dimension_numbers<[1], [0], [0], [1], [0, 0, 1, 1], [], []>} : vector<128x256xbf16>, vector<256x256xbf16>, vector<128x256xf32> -> vector<128x256xf32>
    %c0_3 = arith.constant 0 : index
    %c0_4 = arith.constant 0 : index
    %3 = vector.load %arg4[%c0_3, %c0_4] : memref<1x256xf32, #tpu.memory_space<vmem>>, vector<1x256xf32>
    %4 = vector.broadcast %3 : vector<1x256xf32> to vector<128x256xf32>
    %5 = arith.addf %2, %4 : vector<128x256xf32>
    %6 = vector.extract_strided_slice %5 {offsets = [0, 0], sizes = [128, 128], strides = [1, 1]} : vector<128x256xf32> to vector<128x128xf32>
    %7 = arith.truncf %6 : vector<128x128xf32> to vector<128x128xbf16>
    %8 = vector.extract_strided_slice %5 {offsets = [0, 128], sizes = [128, 128], strides = [1, 1]} : vector<128x256xf32> to vector<128x128xf32>
    %9 = arith.truncf %8 : vector<128x128xf32> to vector<128x128xbf16>
    %c0_5 = arith.constant 0 : index
    %c0_6 = arith.constant 0 : index
    %10 = vector.load %arg2[%c0_5, %c0_6] : memref<128x128xbf16, #tpu.memory_space<vmem>>, vector<128x128xbf16>
    %c0_7 = arith.constant 0 : index
    %c0_8 = arith.constant 0 : index
    %11 = vector.load %arg5[%c0_7, %c0_8] : memref<128x64xbf16, #tpu.memory_space<vmem>>, vector<128x64xbf16>
    %cst_9 = arith.constant dense<0.000000e+00> : vector<128x64xf32>
    %12 = tpu.matmul %10, %11, %cst_9 {dimension_numbers = #tpu.dot_dimension_numbers<[1], [0], [0], [1], [0, 0, 1, 1], [], []>} : vector<128x128xbf16>, vector<128x64xbf16>, vector<128x64xf32> -> vector<128x64xf32>
    %c0_10 = arith.constant 0 : index
    %c0_11 = arith.constant 0 : index
    %13 = vector.load %arg6[%c0_10, %c0_11] : memref<1x64xf32, #tpu.memory_space<vmem>>, vector<1x64xf32>
    %14 = vector.broadcast %13 : vector<1x64xf32> to vector<128x64xf32>
    %15 = arith.addf %12, %14 : vector<128x64xf32>
    %cst_12 = arith.constant 0.000000e+00 : f32
    %16 = vector.broadcast %cst_12 : f32 to vector<128x64xf32>
    %17 = arith.maximumf %15, %16 : vector<128x64xf32>
    %18 = arith.truncf %17 : vector<128x64xf32> to vector<128x64xbf16>
    %c0_13 = arith.constant 0 : index
    %c0_14 = arith.constant 0 : index
    %19 = vector.load %arg7[%c0_13, %c0_14] : memref<64x128xbf16, #tpu.memory_space<vmem>>, vector<64x128xbf16>
    %cst_15 = arith.constant dense<0.000000e+00> : vector<128x128xf32>
    %20 = tpu.matmul %18, %19, %cst_15 {dimension_numbers = #tpu.dot_dimension_numbers<[1], [0], [0], [1], [0, 0, 1, 1], [], []>} : vector<128x64xbf16>, vector<64x128xbf16>, vector<128x128xf32> -> vector<128x128xf32>
    %c0_16 = arith.constant 0 : index
    %c0_17 = arith.constant 0 : index
    %21 = vector.load %arg8[%c0_16, %c0_17] : memref<1x128xf32, #tpu.memory_space<vmem>>, vector<1x128xf32>
    %22 = vector.broadcast %21 : vector<1x128xf32> to vector<128x128xf32>
    %23 = arith.addf %20, %22 : vector<128x128xf32>
    %c0_18 = arith.constant 0 : index
    %c0_19 = arith.constant 0 : index
    %24 = vector.load %arg9[%c0_18, %c0_19] : memref<128x64xbf16, #tpu.memory_space<vmem>>, vector<128x64xbf16>
    %cst_20 = arith.constant dense<0.000000e+00> : vector<128x64xf32>
    %25 = tpu.matmul %10, %24, %cst_20 {dimension_numbers = #tpu.dot_dimension_numbers<[1], [0], [0], [1], [0, 0, 1, 1], [], []>} : vector<128x128xbf16>, vector<128x64xbf16>, vector<128x64xf32> -> vector<128x64xf32>
    %c0_21 = arith.constant 0 : index
    %c0_22 = arith.constant 0 : index
    %26 = vector.load %arg10[%c0_21, %c0_22] : memref<1x64xf32, #tpu.memory_space<vmem>>, vector<1x64xf32>
    %27 = vector.broadcast %26 : vector<1x64xf32> to vector<128x64xf32>
    %28 = arith.addf %25, %27 : vector<128x64xf32>
    %cst_23 = arith.constant 0.000000e+00 : f32
    %29 = vector.broadcast %cst_23 : f32 to vector<128x64xf32>
    %30 = arith.maximumf %28, %29 : vector<128x64xf32>
    %31 = arith.truncf %30 : vector<128x64xf32> to vector<128x64xbf16>
    %c0_24 = arith.constant 0 : index
    %c0_25 = arith.constant 0 : index
    %32 = vector.load %arg11[%c0_24, %c0_25] : memref<64x128xbf16, #tpu.memory_space<vmem>>, vector<64x128xbf16>
    %cst_26 = arith.constant dense<0.000000e+00> : vector<128x128xf32>
    %33 = tpu.matmul %31, %32, %cst_26 {dimension_numbers = #tpu.dot_dimension_numbers<[1], [0], [0], [1], [0, 0, 1, 1], [], []>} : vector<128x64xbf16>, vector<64x128xbf16>, vector<128x128xf32> -> vector<128x128xf32>
    %c0_27 = arith.constant 0 : index
    %c0_28 = arith.constant 0 : index
    %34 = vector.load %arg12[%c0_27, %c0_28] : memref<1x128xf32, #tpu.memory_space<vmem>>, vector<1x128xf32>
    %35 = vector.broadcast %34 : vector<1x128xf32> to vector<128x128xf32>
    %36 = arith.addf %33, %35 : vector<128x128xf32>
    %37 = tpu.concatenate %9, %7 in 0 : vector<128x128xbf16>, vector<128x128xbf16> -> vector<256x128xbf16>
    %c0_29 = arith.constant 0 : index
    %c0_30 = arith.constant 0 : index
    %38 = vector.load %arg13[%c0_29, %c0_30] : memref<128x256xbf16, #tpu.memory_space<vmem>>, vector<128x256xbf16>
    %cst_31 = arith.constant dense<0.000000e+00> : vector<256x256xf32>
    %39 = tpu.matmul %37, %38, %cst_31 {dimension_numbers = #tpu.dot_dimension_numbers<[1], [0], [0], [1], [0, 0, 1, 1], [], []>} : vector<256x128xbf16>, vector<128x256xbf16>, vector<256x256xf32> -> vector<256x256xf32>
    %c0_32 = arith.constant 0 : index
    %c0_33 = arith.constant 0 : index
    %40 = vector.load %arg14[%c0_32, %c0_33] : memref<1x256xf32, #tpu.memory_space<vmem>>, vector<1x256xf32>
    %41 = vector.broadcast %40 : vector<1x256xf32> to vector<256x256xf32>
    %42 = arith.addf %39, %41 : vector<256x256xf32>
    %cst_34 = arith.constant 0.000000e+00 : f32
    %43 = vector.broadcast %cst_34 : f32 to vector<256x256xf32>
    %44 = arith.maximumf %42, %43 : vector<256x256xf32>
    %45 = arith.truncf %44 : vector<256x256xf32> to vector<256x256xbf16>
    %c0_35 = arith.constant 0 : index
    %c0_36 = arith.constant 0 : index
    %46 = vector.load %arg15[%c0_35, %c0_36] : memref<256x128xbf16, #tpu.memory_space<vmem>>, vector<256x128xbf16>
    %cst_37 = arith.constant dense<0.000000e+00> : vector<256x128xf32>
    %47 = tpu.matmul %45, %46, %cst_37 {dimension_numbers = #tpu.dot_dimension_numbers<[1], [0], [0], [1], [0, 0, 1, 1], [], []>} : vector<256x256xbf16>, vector<256x128xbf16>, vector<256x128xf32> -> vector<256x128xf32>
    %c0_38 = arith.constant 0 : index
    %c0_39 = arith.constant 0 : index
    %48 = vector.load %arg16[%c0_38, %c0_39] : memref<1x128xf32, #tpu.memory_space<vmem>>, vector<1x128xf32>
    %49 = vector.broadcast %48 : vector<1x128xf32> to vector<256x128xf32>
    %50 = arith.addf %47, %49 : vector<256x128xf32>
    %51 = vector.extract_strided_slice %50 {offsets = [0, 0], sizes = [128, 128], strides = [1, 1]} : vector<256x128xf32> to vector<128x128xf32>
    %52 = vector.extract_strided_slice %50 {offsets = [128, 0], sizes = [128, 128], strides = [1, 1]} : vector<256x128xf32> to vector<128x128xf32>
    %53 = tpu.concatenate %23, %51 in 1 : vector<128x128xf32>, vector<128x128xf32> -> vector<128x256xf32>
    %54 = arith.truncf %53 : vector<128x256xf32> to vector<128x256xbf16>
    %c0_40 = arith.constant 0 : index
    %c0_41 = arith.constant 0 : index
    %55 = vector.load %arg17[%c0_40, %c0_41] : memref<256x128xbf16, #tpu.memory_space<vmem>>, vector<256x128xbf16>
    %cst_42 = arith.constant dense<0.000000e+00> : vector<128x128xf32>
    %56 = tpu.matmul %54, %55, %cst_42 {dimension_numbers = #tpu.dot_dimension_numbers<[1], [0], [0], [1], [0, 0, 1, 1], [], []>} : vector<128x256xbf16>, vector<256x128xbf16>, vector<128x128xf32> -> vector<128x128xf32>
    %c0_43 = arith.constant 0 : index
    %c0_44 = arith.constant 0 : index
    %57 = vector.load %arg18[%c0_43, %c0_44] : memref<1x128xf32, #tpu.memory_space<vmem>>, vector<1x128xf32>
    %58 = vector.broadcast %57 : vector<1x128xf32> to vector<128x128xf32>
    %59 = arith.addf %56, %58 : vector<128x128xf32>
    %60 = arith.negf %59 : vector<128x128xf32>
    %61 = math.exp %60 : vector<128x128xf32>
    %cst_45 = arith.constant 1.000000e+00 : f32
    %62 = vector.broadcast %cst_45 : f32 to vector<128x128xf32>
    %63 = arith.addf %62, %61 : vector<128x128xf32>
    %64 = arith.divf %62, %63 : vector<128x128xf32>
    %65 = tpu.concatenate %36, %52 in 1 : vector<128x128xf32>, vector<128x128xf32> -> vector<128x256xf32>
    %66 = arith.truncf %65 : vector<128x256xf32> to vector<128x256xbf16>
    %c0_46 = arith.constant 0 : index
    %c0_47 = arith.constant 0 : index
    %67 = vector.load %arg19[%c0_46, %c0_47] : memref<256x128xbf16, #tpu.memory_space<vmem>>, vector<256x128xbf16>
    %cst_48 = arith.constant dense<0.000000e+00> : vector<128x128xf32>
    %68 = tpu.matmul %66, %67, %cst_48 {dimension_numbers = #tpu.dot_dimension_numbers<[1], [0], [0], [1], [0, 0, 1, 1], [], []>} : vector<128x256xbf16>, vector<256x128xbf16>, vector<128x128xf32> -> vector<128x128xf32>
    %c0_49 = arith.constant 0 : index
    %c0_50 = arith.constant 0 : index
    %69 = vector.load %arg20[%c0_49, %c0_50] : memref<1x128xf32, #tpu.memory_space<vmem>>, vector<1x128xf32>
    %70 = vector.broadcast %69 : vector<1x128xf32> to vector<128x128xf32>
    %71 = arith.addf %68, %70 : vector<128x128xf32>
    %72 = arith.negf %71 : vector<128x128xf32>
    %73 = math.exp %72 : vector<128x128xf32>
    %cst_51 = arith.constant 1.000000e+00 : f32
    %74 = vector.broadcast %cst_51 : f32 to vector<128x128xf32>
    %75 = arith.addf %74, %73 : vector<128x128xf32>
    %76 = arith.divf %74, %75 : vector<128x128xf32>
    %77 = arith.mulf %51, %64 : vector<128x128xf32>
    %78 = arith.addf %23, %77 : vector<128x128xf32>
    %79 = arith.mulf %52, %76 : vector<128x128xf32>
    %80 = arith.addf %36, %79 : vector<128x128xf32>
    %81 = arith.truncf %78 : vector<128x128xf32> to vector<128x128xbf16>
    %c0_52 = arith.constant 0 : index
    %c0_53 = arith.constant 0 : index
    %82 = vector.load %arg21[%c0_52, %c0_53] : memref<128x128xbf16, #tpu.memory_space<vmem>>, vector<128x128xbf16>
    %cst_54 = arith.constant dense<0.000000e+00> : vector<128x128xf32>
    %83 = tpu.matmul %81, %82, %cst_54 {dimension_numbers = #tpu.dot_dimension_numbers<[1], [0], [0], [1], [0, 0, 1, 1], [], []>} : vector<128x128xbf16>, vector<128x128xbf16>, vector<128x128xf32> -> vector<128x128xf32>
    %c0_55 = arith.constant 0 : index
    %c0_56 = arith.constant 0 : index
    %84 = vector.load %arg22[%c0_55, %c0_56] : memref<1x128xf32, #tpu.memory_space<vmem>>, vector<1x128xf32>
    %85 = vector.broadcast %84 : vector<1x128xf32> to vector<128x128xf32>
    %86 = arith.addf %83, %85 : vector<128x128xf32>
    %cst_57 = arith.constant 0.000000e+00 : f32
    %87 = vector.broadcast %cst_57 : f32 to vector<128x128xf32>
    %88 = arith.maximumf %86, %87 : vector<128x128xf32>
    %89 = arith.addf %88, %78 : vector<128x128xf32>
    %c0_58 = arith.constant 0 : index
    %c0_59 = arith.constant 0 : index
    %90 = vector.load %arg25[%c0_58, %c0_59] : memref<1x128xf32, #tpu.memory_space<vmem>>, vector<1x128xf32>
    %c0_60 = arith.constant 0 : index
    %c0_61 = arith.constant 0 : index
    %91 = vector.load %arg26[%c0_60, %c0_61] : memref<1x128xf32, #tpu.memory_space<vmem>>, vector<1x128xf32>
    %cst_62 = arith.constant dense<0.000000e+00> : vector<128xf32>
    %92 = vector.multi_reduction <add>, %89, %cst_62 [1] : vector<128x128xf32> to vector<128xf32>
    %93 = vector.shape_cast %92 : vector<128xf32> to vector<128x1xf32>
    %cst_63 = arith.constant 1.280000e+02 : f32
    %94 = vector.broadcast %cst_63 : f32 to vector<128x1xf32>
    %95 = arith.divf %93, %94 : vector<128x1xf32>
    %96 = vector.broadcast %95 : vector<128x1xf32> to vector<128x128xf32>
    %97 = arith.subf %89, %96 : vector<128x128xf32>
    %98 = arith.mulf %97, %97 : vector<128x128xf32>
    %cst_64 = arith.constant dense<0.000000e+00> : vector<128xf32>
    %99 = vector.multi_reduction <add>, %98, %cst_64 [1] : vector<128x128xf32> to vector<128xf32>
    %100 = vector.shape_cast %99 : vector<128xf32> to vector<128x1xf32>
    %cst_65 = arith.constant 1.280000e+02 : f32
    %101 = vector.broadcast %cst_65 : f32 to vector<128x1xf32>
    %102 = arith.divf %100, %101 : vector<128x1xf32>
    %103 = vector.broadcast %95 : vector<128x1xf32> to vector<128x128xf32>
    %104 = arith.subf %89, %103 : vector<128x128xf32>
    %cst_66 = arith.constant 9.99999974E-6 : f32
    %105 = vector.broadcast %cst_66 : f32 to vector<128x1xf32>
    %106 = arith.addf %102, %105 : vector<128x1xf32>
    %107 = math.rsqrt %106 : vector<128x1xf32>
    %108 = vector.broadcast %107 : vector<128x1xf32> to vector<128x128xf32>
    %109 = arith.mulf %104, %108 : vector<128x128xf32>
    %110 = vector.broadcast %90 : vector<1x128xf32> to vector<128x128xf32>
    %111 = arith.mulf %109, %110 : vector<128x128xf32>
    %112 = vector.broadcast %91 : vector<1x128xf32> to vector<128x128xf32>
    %113 = arith.addf %111, %112 : vector<128x128xf32>
    %114 = arith.truncf %80 : vector<128x128xf32> to vector<128x128xbf16>
    %c0_67 = arith.constant 0 : index
    %c0_68 = arith.constant 0 : index
    %115 = vector.load %arg23[%c0_67, %c0_68] : memref<128x128xbf16, #tpu.memory_space<vmem>>, vector<128x128xbf16>
    %cst_69 = arith.constant dense<0.000000e+00> : vector<128x128xf32>
    %116 = tpu.matmul %114, %115, %cst_69 {dimension_numbers = #tpu.dot_dimension_numbers<[1], [0], [0], [1], [0, 0, 1, 1], [], []>} : vector<128x128xbf16>, vector<128x128xbf16>, vector<128x128xf32> -> vector<128x128xf32>
    %c0_70 = arith.constant 0 : index
    %c0_71 = arith.constant 0 : index
    %117 = vector.load %arg24[%c0_70, %c0_71] : memref<1x128xf32, #tpu.memory_space<vmem>>, vector<1x128xf32>
    %118 = vector.broadcast %117 : vector<1x128xf32> to vector<128x128xf32>
    %119 = arith.addf %116, %118 : vector<128x128xf32>
    %cst_72 = arith.constant 0.000000e+00 : f32
    %120 = vector.broadcast %cst_72 : f32 to vector<128x128xf32>
    %121 = arith.maximumf %119, %120 : vector<128x128xf32>
    %122 = arith.addf %121, %80 : vector<128x128xf32>
    %c0_73 = arith.constant 0 : index
    %c0_74 = arith.constant 0 : index
    %123 = vector.load %arg27[%c0_73, %c0_74] : memref<1x128xf32, #tpu.memory_space<vmem>>, vector<1x128xf32>
    %c0_75 = arith.constant 0 : index
    %c0_76 = arith.constant 0 : index
    %124 = vector.load %arg28[%c0_75, %c0_76] : memref<1x128xf32, #tpu.memory_space<vmem>>, vector<1x128xf32>
    %cst_77 = arith.constant dense<0.000000e+00> : vector<128xf32>
    %125 = vector.multi_reduction <add>, %122, %cst_77 [1] : vector<128x128xf32> to vector<128xf32>
    %126 = vector.shape_cast %125 : vector<128xf32> to vector<128x1xf32>
    %cst_78 = arith.constant 1.280000e+02 : f32
    %127 = vector.broadcast %cst_78 : f32 to vector<128x1xf32>
    %128 = arith.divf %126, %127 : vector<128x1xf32>
    %129 = vector.broadcast %128 : vector<128x1xf32> to vector<128x128xf32>
    %130 = arith.subf %122, %129 : vector<128x128xf32>
    %131 = arith.mulf %130, %130 : vector<128x128xf32>
    %cst_79 = arith.constant dense<0.000000e+00> : vector<128xf32>
    %132 = vector.multi_reduction <add>, %131, %cst_79 [1] : vector<128x128xf32> to vector<128xf32>
    %133 = vector.shape_cast %132 : vector<128xf32> to vector<128x1xf32>
    %cst_80 = arith.constant 1.280000e+02 : f32
    %134 = vector.broadcast %cst_80 : f32 to vector<128x1xf32>
    %135 = arith.divf %133, %134 : vector<128x1xf32>
    %136 = vector.broadcast %128 : vector<128x1xf32> to vector<128x128xf32>
    %137 = arith.subf %122, %136 : vector<128x128xf32>
    %cst_81 = arith.constant 9.99999974E-6 : f32
    %138 = vector.broadcast %cst_81 : f32 to vector<128x1xf32>
    %139 = arith.addf %135, %138 : vector<128x1xf32>
    %140 = math.rsqrt %139 : vector<128x1xf32>
    %141 = vector.broadcast %140 : vector<128x1xf32> to vector<128x128xf32>
    %142 = arith.mulf %137, %141 : vector<128x128xf32>
    %143 = vector.broadcast %123 : vector<1x128xf32> to vector<128x128xf32>
    %144 = arith.mulf %142, %143 : vector<128x128xf32>
    %145 = vector.broadcast %124 : vector<1x128xf32> to vector<128x128xf32>
    %146 = arith.addf %144, %145 : vector<128x128xf32>
    %c0_82 = arith.constant 0 : index
    %c0_83 = arith.constant 0 : index
    %147 = vector.load %arg29[%c0_82, %c0_83] : memref<128x128xf32, #tpu.memory_space<vmem>>, vector<128x128xf32>
    tpu.vector_store %arg29[%c0_82, %c0_83], %113 {strides = array<i32>} : memref<128x128xf32, #tpu.memory_space<vmem>>, vector<128x128xf32>,
    %c0_84 = arith.constant 0 : index
    %c0_85 = arith.constant 0 : index
    %148 = vector.load %arg30[%c0_84, %c0_85] : memref<128x128xf32, #tpu.memory_space<vmem>>, vector<128x128xf32>
    tpu.vector_store %arg30[%c0_84, %c0_85], %146 {strides = array<i32>} : memref<128x128xf32, #tpu.memory_space<vmem>>, vector<128x128xf32>,
    return
  }
  func.func @transform_0(%arg0: i32) -> (i32, i32) {
    %c0_i32 = arith.constant 0 : i32
    %c0_i32_0 = arith.constant 0 : i32
    return %arg0, %c0_i32 : i32, i32
  }
  func.func @transform_1(%arg0: i32) -> (i32, i32) {
    %c0_i32 = arith.constant 0 : i32
    %c0_i32_0 = arith.constant 0 : i32
    return %arg0, %c0_i32 : i32, i32
  }
  func.func @transform_2(%arg0: i32) -> (i32, i32) {
    %c0_i32 = arith.constant 0 : i32
    %c0_i32_0 = arith.constant 0 : i32
    %c0_i32_1 = arith.constant 0 : i32
    return %c0_i32, %c0_i32_0 : i32, i32
  }
  func.func @transform_3(%arg0: i32) -> (i32, i32) {
    %c0_i32 = arith.constant 0 : i32
    %c0_i32_0 = arith.constant 0 : i32
    %c0_i32_1 = arith.constant 0 : i32
    return %c0_i32, %c0_i32_0 : i32, i32
  }
  func.func @transform_4(%arg0: i32) -> (i32, i32) {
    %c0_i32 = arith.constant 0 : i32
    %c0_i32_0 = arith.constant 0 : i32
    %c0_i32_1 = arith.constant 0 : i32
    return %c0_i32, %c0_i32_0 : i32, i32
  }
  func.func @transform_5(%arg0: i32) -> (i32, i32) {
    %c0_i32 = arith.constant 0 : i32
    %c0_i32_0 = arith.constant 0 : i32
    %c0_i32_1 = arith.constant 0 : i32
    return %c0_i32, %c0_i32_0 : i32, i32
  }
  func.func @transform_6(%arg0: i32) -> (i32, i32) {
    %c0_i32 = arith.constant 0 : i32
    %c0_i32_0 = arith.constant 0 : i32
    %c0_i32_1 = arith.constant 0 : i32
    return %c0_i32, %c0_i32_0 : i32, i32
  }
  func.func @transform_7(%arg0: i32) -> (i32, i32) {
    %c0_i32 = arith.constant 0 : i32
    %c0_i32_0 = arith.constant 0 : i32
    %c0_i32_1 = arith.constant 0 : i32
    return %c0_i32, %c0_i32_0 : i32, i32
  }
  func.func @transform_8(%arg0: i32) -> (i32, i32) {
    %c0_i32 = arith.constant 0 : i32
    %c0_i32_0 = arith.constant 0 : i32
    %c0_i32_1 = arith.constant 0 : i32
    return %c0_i32, %c0_i32_0 : i32, i32
  }
  func.func @transform_9(%arg0: i32) -> (i32, i32) {
    %c0_i32 = arith.constant 0 : i32
    %c0_i32_0 = arith.constant 0 : i32
    %c0_i32_1 = arith.constant 0 : i32
    return %c0_i32, %c0_i32_0 : i32, i32
  }
  func.func @transform_10(%arg0: i32) -> (i32, i32) {
    %c0_i32 = arith.constant 0 : i32
    %c0_i32_0 = arith.constant 0 : i32
    %c0_i32_1 = arith.constant 0 : i32
    return %c0_i32, %c0_i32_0 : i32, i32
  }
  func.func @transform_11(%arg0: i32) -> (i32, i32) {
    %c0_i32 = arith.constant 0 : i32
    %c0_i32_0 = arith.constant 0 : i32
    %c0_i32_1 = arith.constant 0 : i32
    return %c0_i32, %c0_i32_0 : i32, i32
  }
  func.func @transform_12(%arg0: i32) -> (i32, i32) {
    %c0_i32 = arith.constant 0 : i32
    %c0_i32_0 = arith.constant 0 : i32
    %c0_i32_1 = arith.constant 0 : i32
    return %c0_i32, %c0_i32_0 : i32, i32
  }
  func.func @transform_13(%arg0: i32) -> (i32, i32) {
    %c0_i32 = arith.constant 0 : i32
    %c0_i32_0 = arith.constant 0 : i32
    %c0_i32_1 = arith.constant 0 : i32
    return %c0_i32, %c0_i32_0 : i32, i32
  }
  func.func @transform_14(%arg0: i32) -> (i32, i32) {
    %c0_i32 = arith.constant 0 : i32
    %c0_i32_0 = arith.constant 0 : i32
    %c0_i32_1 = arith.constant 0 : i32
    return %c0_i32, %c0_i32_0 : i32, i32
  }
  func.func @transform_15(%arg0: i32) -> (i32, i32) {
    %c0_i32 = arith.constant 0 : i32
    %c0_i32_0 = arith.constant 0 : i32
    %c0_i32_1 = arith.constant 0 : i32
    return %c0_i32, %c0_i32_0 : i32, i32
  }
  func.func @transform_16(%arg0: i32) -> (i32, i32) {
    %c0_i32 = arith.constant 0 : i32
    %c0_i32_0 = arith.constant 0 : i32
    %c0_i32_1 = arith.constant 0 : i32
    return %c0_i32, %c0_i32_0 : i32, i32
  }
  func.func @transform_17(%arg0: i32) -> (i32, i32) {
    %c0_i32 = arith.constant 0 : i32
    %c0_i32_0 = arith.constant 0 : i32
    %c0_i32_1 = arith.constant 0 : i32
    return %c0_i32, %c0_i32_0 : i32, i32
  }
  func.func @transform_18(%arg0: i32) -> (i32, i32) {
    %c0_i32 = arith.constant 0 : i32
    %c0_i32_0 = arith.constant 0 : i32
    %c0_i32_1 = arith.constant 0 : i32
    return %c0_i32, %c0_i32_0 : i32, i32
  }
  func.func @transform_19(%arg0: i32) -> (i32, i32) {
    %c0_i32 = arith.constant 0 : i32
    %c0_i32_0 = arith.constant 0 : i32
    %c0_i32_1 = arith.constant 0 : i32
    return %c0_i32, %c0_i32_0 : i32, i32
  }
  func.func @transform_20(%arg0: i32) -> (i32, i32) {
    %c0_i32 = arith.constant 0 : i32
    %c0_i32_0 = arith.constant 0 : i32
    %c0_i32_1 = arith.constant 0 : i32
    return %c0_i32, %c0_i32_0 : i32, i32
  }
  func.func @transform_21(%arg0: i32) -> (i32, i32) {
    %c0_i32 = arith.constant 0 : i32
    %c0_i32_0 = arith.constant 0 : i32
    %c0_i32_1 = arith.constant 0 : i32
    return %c0_i32, %c0_i32_0 : i32, i32
  }
  func.func @transform_22(%arg0: i32) -> (i32, i32) {
    %c0_i32 = arith.constant 0 : i32
    %c0_i32_0 = arith.constant 0 : i32
    %c0_i32_1 = arith.constant 0 : i32
    return %c0_i32, %c0_i32_0 : i32, i32
  }
  func.func @transform_23(%arg0: i32) -> (i32, i32) {
    %c0_i32 = arith.constant 0 : i32
    %c0_i32_0 = arith.constant 0 : i32
    %c0_i32_1 = arith.constant 0 : i32
    return %c0_i32, %c0_i32_0 : i32, i32
  }
  func.func @transform_24(%arg0: i32) -> (i32, i32) {
    %c0_i32 = arith.constant 0 : i32
    %c0_i32_0 = arith.constant 0 : i32
    %c0_i32_1 = arith.constant 0 : i32
    return %c0_i32, %c0_i32_0 : i32, i32
  }
  func.func @transform_25(%arg0: i32) -> (i32, i32) {
    %c0_i32 = arith.constant 0 : i32
    %c0_i32_0 = arith.constant 0 : i32
    %c0_i32_1 = arith.constant 0 : i32
    return %c0_i32, %c0_i32_0 : i32, i32
  }
  func.func @transform_26(%arg0: i32) -> (i32, i32) {
    %c0_i32 = arith.constant 0 : i32
    %c0_i32_0 = arith.constant 0 : i32
    %c0_i32_1 = arith.constant 0 : i32
    return %c0_i32, %c0_i32_0 : i32, i32
  }
  func.func @transform_27(%arg0: i32) -> (i32, i32) {
    %c0_i32 = arith.constant 0 : i32
    %c0_i32_0 = arith.constant 0 : i32
    %c0_i32_1 = arith.constant 0 : i32
    return %c0_i32, %c0_i32_0 : i32, i32
  }
  func.func @transform_28(%arg0: i32) -> (i32, i32) {
    %c0_i32 = arith.constant 0 : i32
    %c0_i32_0 = arith.constant 0 : i32
    return %arg0, %c0_i32 : i32, i32
  }
  func.func @transform_29(%arg0: i32) -> (i32, i32) {
    %c0_i32 = arith.constant 0 : i32
    %c0_i32_0 = arith.constant 0 : i32
    return %arg0, %c0_i32 : i32, i32
  }
}

</mosaic_0001>

<llo_original>
// kernel: tpu_custom_call.1
$region0: #{tpu_custom_call.1}
  #allocation0 [shape = 'u32[]', space=smem, size = 0x4, offset = 0x4, fixed_abs, tag = 'smem constant byte address 0x4 - core index']
  #allocation1 [shape = 'u32[144,128]{1,0:T(1,128)}', space=vmem, size = 0x12000, scoped, tag = 'internal scratch']
  %s0 = inlined_call_operand.smem [shape: u32[30], index: -1, kind: input, shape index: {}]
  %s1 = sld [smem:[%s0]]
  %s2 = scalar_lea.smem %s0, 1
  %s3 = sld [smem:[%s2]]
  %s4 = scalar_lea.smem %s0, 2
  %s5 = sld [smem:[%s4]]
  %s6 = scalar_lea.smem %s0, 3
  %s7 = sld [smem:[%s6]]
  %s8 = scalar_lea.smem %s0, 4
  %s9 = sld [smem:[%s8]]
  %s10 = scalar_lea.smem %s0, 5
  %s11 = sld [smem:[%s10]]
  %s12 = scalar_lea.smem %s0, 6
  %s13 = sld [smem:[%s12]]
  %s14 = scalar_lea.smem %s0, 7
  %s15 = sld [smem:[%s14]]
  %s16 = scalar_lea.smem %s0, 8
  %s17 = sld [smem:[%s16]]
  %s18 = scalar_lea.smem %s0, 9
  %s19 = sld [smem:[%s18]]
  %s20 = scalar_lea.smem %s0, 10
  %s21 = sld [smem:[%s20]]
  %s22 = scalar_lea.smem %s0, 11
  %s23 = sld [smem:[%s22]]
  %s24 = scalar_lea.smem %s0, 12
  %s25 = sld [smem:[%s24]]
  %s26 = scalar_lea.smem %s0, 13
  %s27 = sld [smem:[%s26]]
  %s28 = scalar_lea.smem %s0, 14
  %s29 = sld [smem:[%s28]]
  %s30 = scalar_lea.smem %s0, 15
  %s31 = sld [smem:[%s30]]
  %s32 = scalar_lea.smem %s0, 16
  %s33 = sld [smem:[%s32]]
  %s34 = scalar_lea.smem %s0, 17
  %s35 = sld [smem:[%s34]]
  %s36 = scalar_lea.smem %s0, 18
  %s37 = sld [smem:[%s36]]
  %s38 = scalar_lea.smem %s0, 19
  %s39 = sld [smem:[%s38]]
  %s40 = scalar_lea.smem %s0, 20
  %s41 = sld [smem:[%s40]]
  %s42 = scalar_lea.smem %s0, 21
  %s43 = sld [smem:[%s42]]
  %s44 = scalar_lea.smem %s0, 22
  %s45 = sld [smem:[%s44]]
  %s46 = scalar_lea.smem %s0, 23
  %s47 = sld [smem:[%s46]]
  %s48 = scalar_lea.smem %s0, 24
  %s49 = sld [smem:[%s48]]
  %s50 = scalar_lea.smem %s0, 25
  %s51 = sld [smem:[%s50]]
  %s52 = scalar_lea.smem %s0, 26
  %s53 = sld [smem:[%s52]]
  %s54 = scalar_lea.smem %s0, 27
  %s55 = sld [smem:[%s54]]
  %s56 = scalar_lea.smem %s0, 28
  %s57 = sld [smem:[%s56]]
  %s58 = scalar_lea.smem %s0, 29
  %s59 = sld [smem:[%s58]]
  %60 = xla_tuple %s57, %s59
  %s61 = sld [smem:[#allocation0]]
  $region198: #{tpu_custom_call.1} parent=0
    _
  %s63 = ssub.s32 1, %s61
  %s64 = scalar_select 0, %s63, %s61
  $region1: #{tpu_custom_call.1} parent=0
    #allocation2 [shape = 'u8[32768]{0}', space=vmem, size = 0x8000, scoped, tag = 'input window, operand 1, single buffered']
    #allocation3 [shape = 's32[1]{0}', space=sflag, size = 0x4, scoped, tag = 'scoped memory for tpu_custom_call.1']
    #allocation4 [shape = 's32[1]{0}', space=sflag, size = 0x4, scoped, tag = 'scoped memory for tpu_custom_call.1']
    #allocation5 [shape = 'u8[131072]{0}', space=vmem, size = 0x20000, scoped, tag = 'input window, operand 2, single buffered']
    #allocation6 [shape = 's32[1]{0}', space=sflag, size = 0x4, scoped, tag = 'scoped memory for tpu_custom_call.1']
    #allocation7 [shape = 'u8[1024]{0}', space=vmem, size = 0x400, scoped, tag = 'input window, operand 3, single buffered']
    #allocation8 [shape = 'u8[512]{0}', space=vmem, size = 0x400, scoped, tag = 'input window, operand 5, single buffered']
    #allocation9 [shape = 's32[1]{0}', space=sflag, size = 0x4, scoped, tag = 'scoped memory for tpu_custom_call.1']
    #allocation10 [shape = 'u8[16384]{0}', space=vmem, size = 0x4000, scoped, tag = 'input window, operand 6, single buffered']
    #allocation11 [shape = 'u8[512]{0}', space=vmem, size = 0x400, scoped, tag = 'input window, operand 7, single buffered']
    #allocation12 [shape = 's32[1]{0}', space=sflag, size = 0x4, scoped, tag = 'scoped memory for tpu_custom_call.1']
    #allocation13 [shape = 'u8[512]{0}', space=vmem, size = 0x400, scoped, tag = 'input window, operand 9, single buffered']
    #allocation14 [shape = 'u8[16384]{0}', space=vmem, size = 0x4000, scoped, tag = 'input window, operand 10, single buffered']
    #allocation15 [shape = 's32[1]{0}', space=sflag, size = 0x4, scoped, tag = 'scoped memory for tpu_custom_call.1']
    #allocation16 [shape = 'u8[512]{0}', space=vmem, size = 0x400, scoped, tag = 'input window, operand 11, single buffered']
    #allocation17 [shape = 'u8[65536]{0}', space=vmem, size = 0x10000, scoped, tag = 'input window, operand 12, single buffered']
    #allocation18 [shape = 's32[1]{0}', space=sflag, size = 0x4, scoped, tag = 'scoped memory for tpu_custom_call.1']
    #allocation19 [shape = 'u8[1024]{0}', space=vmem, size = 0x400, scoped, tag = 'input window, operand 13, single buffered']
    #allocation20 [shape = 'u8[65536]{0}', space=vmem, size = 0x10000, scoped, tag = 'input window, operand 14, single buffered']
    #allocation21 [shape = 's32[1]{0}', space=sflag, size = 0x4, scoped, tag = 'scoped memory for tpu_custom_call.1']
    #allocation22 [shape = 'u8[512]{0}', space=vmem, size = 0x400, scoped, tag = 'input window, operand 15, single buffered']
    #allocation23 [shape = 'u8[65536]{0}', space=vmem, size = 0x10000, scoped, tag = 'input window, operand 16, single buffered']
    #allocation24 [shape = 's32[1]{0}', space=sflag, size = 0x4, scoped, tag = 'scoped memory for tpu_custom_call.1']
    #allocation25 [shape = 'u8[512]{0}', space=vmem, size = 0x400, scoped, tag = 'input window, operand 17, single buffered']
    #allocation26 [shape = 'u8[32768]{0}', space=vmem, size = 0x8000, scoped, tag = 'input window, operand 20, single buffered']
    #allocation27 [shape = 's32[1]{0}', space=sflag, size = 0x4, scoped, tag = 'scoped memory for tpu_custom_call.1']
    #allocation28 [shape = 'u8[32768]{0}', space=vmem, size = 0x8000, scoped, tag = 'input window, operand 22, single buffered']
    #allocation29 [shape = 'u8[65536]{0}', space=vmem, size = 0x10000, scoped, tag = 'output window, operand 0, single buffered']
    #allocation30 [shape = 'u8[65536]{0}', space=vmem, size = 0x10000, scoped, tag = 'output window, operand 1, single buffered']
    #allocation31 [shape = 's32[1]{0}', space=sflag, size = 0x4, scoped, tag = 'scoped memory for tpu_custom_call.1']
    %65 = vsyncpa [#allocation3], 0
    %66 = vsyncpa [#allocation6], 0
    %67 = vsyncpa [#allocation9], 0
    %68 = vsyncpa [#allocation12], 0
    %69 = vsyncpa [#allocation15], 0
    %70 = vsyncpa [#allocation18], 0
    %71 = vsyncpa [#allocation21], 0
    %72 = vsyncpa [#allocation24], 0
    %73 = vsyncpa [#allocation27], 0
    %74 = vsyncpa [#allocation4], 0
    %75 = vsyncpa [#allocation31], 0
    // Predicated region
    $region2: #{tpu_custom_call.1} parent=1 // pred_check
      _
    $region3: #{tpu_custom_call.1} parent=1 // pred_check_branch
      %77 = sbr.rel (0) target = $region5
    $region4: #{tpu_custom_call.1} parent=1 // pred_region
      _
    $region5: #{tpu_custom_call.1} parent=1 // pred_fallthru
      _
    // Predicated region
    $region6: #{tpu_custom_call.1} parent=1 // pred_check
      _
    $region7: #{tpu_custom_call.1} parent=1 // pred_check_branch
      %79 = sbr.rel (0) target = $region9
    $region8: #{tpu_custom_call.1} parent=1 // pred_region
      %s81 = ssub.s32 1024, 1024
      %82 = vsyncadd [#allocation3], %s81
      %s83 = sshll.u32 [#allocation2], 4
      %s84 = int_to_ptr.vmem [resolvable:$true] %s83
      %89 = dma.hbm_to_vmem [thread:$0]  %s3, 1024, %s84, [#allocation3], 64, 64, 4
    $region9: #{tpu_custom_call.1} parent=1 // pred_fallthru
      _
    // Predicated region
    $region10: #{tpu_custom_call.1} parent=1 // pred_check
      _
    $region11: #{tpu_custom_call.1} parent=1 // pred_check_branch
      %91 = sbr.rel (0) target = $region13
    $region12: #{tpu_custom_call.1} parent=1 // pred_region
      %s93 = ssub.s32 4096, 4096
      %94 = vsyncadd [#allocation6], %s93
      %s95 = sshll.u32 [#allocation5], 4
      %s96 = int_to_ptr.vmem [resolvable:$true] %s95
      %101 = dma.hbm_to_vmem [thread:$0]  %s5, 4096, %s96, [#allocation6], 128, 128, 8
    $region13: #{tpu_custom_call.1} parent=1 // pred_fallthru
      _
    // Predicated region
    $region14: #{tpu_custom_call.1} parent=1 // pred_check
      _
    $region15: #{tpu_custom_call.1} parent=1 // pred_check_branch
      %103 = sbr.rel (0) target = $region17
    $region16: #{tpu_custom_call.1} parent=1 // pred_region
      %s105 = ssub.s32 32, 32
      %106 = vsyncadd [#allocation6], %s105
      %s108 = sshll.u32 [#allocation7], 4
      %s109 = int_to_ptr.vmem [resolvable:$true] %s108
      %111 = dma.hbm_to_vmem [thread:$0]  %s7, 32, %s109, [#allocation6]
    $region17: #{tpu_custom_call.1} parent=1 // pred_fallthru
      _
    // Predicated region
    $region18: #{tpu_custom_call.1} parent=1 // pred_check
      _
    $region19: #{tpu_custom_call.1} parent=1 // pred_check_branch
      %113 = sbr.rel (0) target = $region21
    $region20: #{tpu_custom_call.1} parent=1 // pred_region
      _
    $region21: #{tpu_custom_call.1} parent=1 // pred_fallthru
      _
    // Predicated region
    $region22: #{tpu_custom_call.1} parent=1 // pred_check
      _
    $region23: #{tpu_custom_call.1} parent=1 // pred_check_branch
      %115 = sbr.rel (0) target = $region25
    $region24: #{tpu_custom_call.1} parent=1 // pred_region
      %s117 = ssub.s32 16, 16
      %118 = vsyncadd [#allocation9], %s117
      %s120 = sshll.u32 [#allocation8], 4
      %s121 = int_to_ptr.vmem [resolvable:$true] %s120
      %123 = dma.hbm_to_vmem [thread:$0]  %s11, 16, %s121, [#allocation9]
    $region25: #{tpu_custom_call.1} parent=1 // pred_fallthru
      _
    // Predicated region
    $region26: #{tpu_custom_call.1} parent=1 // pred_check
      _
    $region27: #{tpu_custom_call.1} parent=1 // pred_check_branch
      %125 = sbr.rel (0) target = $region29
    $region28: #{tpu_custom_call.1} parent=1 // pred_region
      %s127 = ssub.s32 512, 512
      %128 = vsyncadd [#allocation9], %s127
      %s129 = sshll.u32 [#allocation10], 4
      %s130 = int_to_ptr.vmem [resolvable:$true] %s129
      %135 = dma.hbm_to_vmem [thread:$0]  %s13, 512, %s130, [#allocation9], 64, 64, 4
    $region29: #{tpu_custom_call.1} parent=1 // pred_fallthru
      _
    // Predicated region
    $region30: #{tpu_custom_call.1} parent=1 // pred_check
      _
    $region31: #{tpu_custom_call.1} parent=1 // pred_check_branch
      %137 = sbr.rel (0) target = $region33
    $region32: #{tpu_custom_call.1} parent=1 // pred_region
      %s139 = ssub.s32 16, 16
      %140 = vsyncadd [#allocation12], %s139
      %s142 = sshll.u32 [#allocation11], 4
      %s143 = int_to_ptr.vmem [resolvable:$true] %s142
      %145 = dma.hbm_to_vmem [thread:$0]  %s15, 16, %s143, [#allocation12]
    $region33: #{tpu_custom_call.1} parent=1 // pred_fallthru
      _
    // Predicated region
    $region34: #{tpu_custom_call.1} parent=1 // pred_check
      _
    $region35: #{tpu_custom_call.1} parent=1 // pred_check_branch
      %147 = sbr.rel (0) target = $region37
    $region36: #{tpu_custom_call.1} parent=1 // pred_region
      _
    $region37: #{tpu_custom_call.1} parent=1 // pred_fallthru
      _
    // Predicated region
    $region38: #{tpu_custom_call.1} parent=1 // pred_check
      _
    $region39: #{tpu_custom_call.1} parent=1 // pred_check_branch
      %149 = sbr.rel (0) target = $region41
    $region40: #{tpu_custom_call.1} parent=1 // pred_region
      %s151 = ssub.s32 16, 16
      %152 = vsyncadd [#allocation12], %s151
      %s154 = sshll.u32 [#allocation13], 4
      %s155 = int_to_ptr.vmem [resolvable:$true] %s154
      %157 = dma.hbm_to_vmem [thread:$0]  %s19, 16, %s155, [#allocation12]
    $region41: #{tpu_custom_call.1} parent=1 // pred_fallthru
      _
    // Predicated region
    $region42: #{tpu_custom_call.1} parent=1 // pred_check
      _
    $region43: #{tpu_custom_call.1} parent=1 // pred_check_branch
      %159 = sbr.rel (0) target = $region45
    $region44: #{tpu_custom_call.1} parent=1 // pred_region
      %s161 = ssub.s32 512, 512
      %162 = vsyncadd [#allocation15], %s161
      %s163 = sshll.u32 [#allocation14], 4
      %s164 = int_to_ptr.vmem [resolvable:$true] %s163
      %169 = dma.hbm_to_vmem [thread:$0]  %s21, 512, %s164, [#allocation15], 64, 64, 4
    $region45: #{tpu_custom_call.1} parent=1 // pred_fallthru
      _
    // Predicated region
    $region46: #{tpu_custom_call.1} parent=1 // pred_check
      _
    $region47: #{tpu_custom_call.1} parent=1 // pred_check_branch
      %171 = sbr.rel (0) target = $region49
    $region48: #{tpu_custom_call.1} parent=1 // pred_region
      %s173 = ssub.s32 16, 16
      %174 = vsyncadd [#allocation15], %s173
      %s176 = sshll.u32 [#allocation16], 4
      %s177 = int_to_ptr.vmem [resolvable:$true] %s176
      %179 = dma.hbm_to_vmem [thread:$0]  %s23, 16, %s177, [#allocation15]
    $region49: #{tpu_custom_call.1} parent=1 // pred_fallthru
      _
    // Predicated region
    $region50: #{tpu_custom_call.1} parent=1 // pred_check
      _
    $region51: #{tpu_custom_call.1} parent=1 // pred_check_branch
      %181 = sbr.rel (0) target = $region53
    $region52: #{tpu_custom_call.1} parent=1 // pred_region
      %s183 = ssub.s32 2048, 2048
      %184 = vsyncadd [#allocation18], %s183
      %s185 = sshll.u32 [#allocation17], 4
      %s186 = int_to_ptr.vmem [resolvable:$true] %s185
      %191 = dma.hbm_to_vmem [thread:$0]  %s25, 2048, %s186, [#allocation18], 128, 128, 8
    $region53: #{tpu_custom_call.1} parent=1 // pred_fallthru
      _
    // Predicated region
    $region54: #{tpu_custom_call.1} parent=1 // pred_check
      _
    $region55: #{tpu_custom_call.1} parent=1 // pred_check_branch
      %193 = sbr.rel (0) target = $region57
    $region56: #{tpu_custom_call.1} parent=1 // pred_region
      %s195 = ssub.s32 32, 32
      %196 = vsyncadd [#allocation18], %s195
      %s198 = sshll.u32 [#allocation19], 4
      %s199 = int_to_ptr.vmem [resolvable:$true] %s198
      %201 = dma.hbm_to_vmem [thread:$0]  %s27, 32, %s199, [#allocation18]
    $region57: #{tpu_custom_call.1} parent=1 // pred_fallthru
      _
    // Predicated region
    $region58: #{tpu_custom_call.1} parent=1 // pred_check
      _
    $region59: #{tpu_custom_call.1} parent=1 // pred_check_branch
      %203 = sbr.rel (0) target = $region61
    $region60: #{tpu_custom_call.1} parent=1 // pred_region
      %s205 = ssub.s32 2048, 2048
      %206 = vsyncadd [#allocation21], %s205
      %s207 = sshll.u32 [#allocation20], 4
      %s208 = int_to_ptr.vmem [resolvable:$true] %s207
      %213 = dma.hbm_to_vmem [thread:$0]  %s29, 2048, %s208, [#allocation21], 64, 64, 4
    $region61: #{tpu_custom_call.1} parent=1 // pred_fallthru
      _
    // Predicated region
    $region62: #{tpu_custom_call.1} parent=1 // pred_check
      _
    $region63: #{tpu_custom_call.1} parent=1 // pred_check_branch
      %215 = sbr.rel (0) target = $region65
    $region64: #{tpu_custom_call.1} parent=1 // pred_region
      %s217 = ssub.s32 16, 16
      %218 = vsyncadd [#allocation21], %s217
      %s220 = sshll.u32 [#allocation22], 4
      %s221 = int_to_ptr.vmem [resolvable:$true] %s220
      %223 = dma.hbm_to_vmem [thread:$0]  %s31, 16, %s221, [#allocation21]
    $region65: #{tpu_custom_call.1} parent=1 // pred_fallthru
      _
    // Predicated region
    $region66: #{tpu_custom_call.1} parent=1 // pred_check
      _
    $region67: #{tpu_custom_call.1} parent=1 // pred_check_branch
      %225 = sbr.rel (0) target = $region69
    $region68: #{tpu_custom_call.1} parent=1 // pred_region
      %s227 = ssub.s32 2048, 2048
      %228 = vsyncadd [#allocation24], %s227
      %s229 = sshll.u32 [#allocation23], 4
      %s230 = int_to_ptr.vmem [resolvable:$true] %s229
      %235 = dma.hbm_to_vmem [thread:$0]  %s33, 2048, %s230, [#allocation24], 64, 64, 4
    $region69: #{tpu_custom_call.1} parent=1 // pred_fallthru
      _
    // Predicated region
    $region70: #{tpu_custom_call.1} parent=1 // pred_check
      _
    $region71: #{tpu_custom_call.1} parent=1 // pred_check_branch
      %237 = sbr.rel (0) target = $region73
    $region72: #{tpu_custom_call.1} parent=1 // pred_region
      %s239 = ssub.s32 16, 16
      %240 = vsyncadd [#allocation24], %s239
      %s242 = sshll.u32 [#allocation25], 4
      %s243 = int_to_ptr.vmem [resolvable:$true] %s242
      %245 = dma.hbm_to_vmem [thread:$0]  %s35, 16, %s243, [#allocation24]
    $region73: #{tpu_custom_call.1} parent=1 // pred_fallthru
      _
    // Predicated region
    $region74: #{tpu_custom_call.1} parent=1 // pred_check
      _
    $region75: #{tpu_custom_call.1} parent=1 // pred_check_branch
      %247 = sbr.rel (0) target = $region77
    $region76: #{tpu_custom_call.1} parent=1 // pred_region
      _
    $region77: #{tpu_custom_call.1} parent=1 // pred_fallthru
      _
    // Predicated region
    $region78: #{tpu_custom_call.1} parent=1 // pred_check
      _
    $region79: #{tpu_custom_call.1} parent=1 // pred_check_branch
      %249 = sbr.rel (0) target = $region81
    $region80: #{tpu_custom_call.1} parent=1 // pred_region
      _
    $region81: #{tpu_custom_call.1} parent=1 // pred_fallthru
      _
    // Predicated region
    $region82: #{tpu_custom_call.1} parent=1 // pred_check
      _
    $region83: #{tpu_custom_call.1} parent=1 // pred_check_branch
      %251 = sbr.rel (0) target = $region85
    $region84: #{tpu_custom_call.1} parent=1 // pred_region
      %s253 = ssub.s32 1024, 1024
      %254 = vsyncadd [#allocation27], %s253
      %s255 = sshll.u32 [#allocation26], 4
      %s256 = int_to_ptr.vmem [resolvable:$true] %s255
      %261 = dma.hbm_to_vmem [thread:$0]  %s41, 1024, %s256, [#allocation27], 64, 64, 4
    $region85: #{tpu_custom_call.1} parent=1 // pred_fallthru
      _
    // Predicated region
    $region86: #{tpu_custom_call.1} parent=1 // pred_check
      _
    $region87: #{tpu_custom_call.1} parent=1 // pred_check_branch
      %263 = sbr.rel (0) target = $region89
    $region88: #{tpu_custom_call.1} parent=1 // pred_region
      _
    $region89: #{tpu_custom_call.1} parent=1 // pred_fallthru
      _
    // Predicated region
    $region90: #{tpu_custom_call.1} parent=1 // pred_check
      _
    $region91: #{tpu_custom_call.1} parent=1 // pred_check_branch
      %265 = sbr.rel (0) target = $region93
    $region92: #{tpu_custom_call.1} parent=1 // pred_region
      %s267 = ssub.s32 1024, 1024
      %268 = vsyncadd [#allocation27], %s267
      %s269 = sshll.u32 [#allocation28], 4
      %s270 = int_to_ptr.vmem [resolvable:$true] %s269
      %275 = dma.hbm_to_vmem [thread:$0]  %s45, 1024, %s270, [#allocation27], 64, 64, 4
    $region93: #{tpu_custom_call.1} parent=1 // pred_fallthru
      _
    // Predicated region
    $region94: #{tpu_custom_call.1} parent=1 // pred_check
      _
    $region95: #{tpu_custom_call.1} parent=1 // pred_check_branch
      %277 = sbr.rel (0) target = $region97
    $region96: #{tpu_custom_call.1} parent=1 // pred_region
      _
    $region97: #{tpu_custom_call.1} parent=1 // pred_fallthru
      _
    // Predicated region
    $region98: #{tpu_custom_call.1} parent=1 // pred_check
      _
    $region99: #{tpu_custom_call.1} parent=1 // pred_check_branch
      %279 = sbr.rel (0) target = $region101
    $region100: #{tpu_custom_call.1} parent=1 // pred_region
      _
    $region101: #{tpu_custom_call.1} parent=1 // pred_fallthru
      _
    // Predicated region
    $region102: #{tpu_custom_call.1} parent=1 // pred_check
      _
    $region103: #{tpu_custom_call.1} parent=1 // pred_check_branch
      %281 = sbr.rel (0) target = $region105
    $region104: #{tpu_custom_call.1} parent=1 // pred_region
      _
    $region105: #{tpu_custom_call.1} parent=1 // pred_fallthru
      _
    // Predicated region
    $region106: #{tpu_custom_call.1} parent=1 // pred_check
      _
    $region107: #{tpu_custom_call.1} parent=1 // pred_check_branch
      %283 = sbr.rel (0) target = $region109
    $region108: #{tpu_custom_call.1} parent=1 // pred_region
      _
    $region109: #{tpu_custom_call.1} parent=1 // pred_fallthru
      _
    // Predicated region
    $region110: #{tpu_custom_call.1} parent=1 // pred_check
      _
    $region111: #{tpu_custom_call.1} parent=1 // pred_check_branch
      %285 = sbr.rel (0) target = $region113
    $region112: #{tpu_custom_call.1} parent=1 // pred_region
      _
    $region113: #{tpu_custom_call.1} parent=1 // pred_fallthru
      _
    // Predicated region
    $region114: #{tpu_custom_call.1} parent=1 // pred_check
      _
    $region115: #{tpu_custom_call.1} parent=1 // pred_check_branch
      %287 = sbr.rel (0) target = $region117
    $region116: #{tpu_custom_call.1} parent=1 // pred_region
      %288 = dma.done [#allocation3], 1024
    $region117: #{tpu_custom_call.1} parent=1 // pred_fallthru
      _
    // Predicated region
    $region118: #{tpu_custom_call.1} parent=1 // pred_check
      _
    $region119: #{tpu_custom_call.1} parent=1 // pred_check_branch
      %290 = sbr.rel (0) target = $region121
    $region120: #{tpu_custom_call.1} parent=1 // pred_region
      %291 = dma.done [#allocation6], 4096
    $region121: #{tpu_custom_call.1} parent=1 // pred_fallthru
      _
    // Predicated region
    $region122: #{tpu_custom_call.1} parent=1 // pred_check
      _
    $region123: #{tpu_custom_call.1} parent=1 // pred_check_branch
      %293 = sbr.rel (0) target = $region125
    $region124: #{tpu_custom_call.1} parent=1 // pred_region
      %294 = dma.done [#allocation6], 32
    $region125: #{tpu_custom_call.1} parent=1 // pred_fallthru
      _
    // Predicated region
    $region126: #{tpu_custom_call.1} parent=1 // pred_check
      _
    $region127: #{tpu_custom_call.1} parent=1 // pred_check_branch
      %296 = sbr.rel (0) target = $region129
    $region128: #{tpu_custom_call.1} parent=1 // pred_region
      %297 = dma.done [#allocation9], 16
    $region129: #{tpu_custom_call.1} parent=1 // pred_fallthru
      _
    // Predicated region
    $region130: #{tpu_custom_call.1} parent=1 // pred_check
      _
    $region131: #{tpu_custom_call.1} parent=1 // pred_check_branch
      %299 = sbr.rel (0) target = $region133
    $region132: #{tpu_custom_call.1} parent=1 // pred_region
      %300 = dma.done [#allocation9], 512
    $region133: #{tpu_custom_call.1} parent=1 // pred_fallthru
      _
    // Predicated region
    $region134: #{tpu_custom_call.1} parent=1 // pred_check
      _
    $region135: #{tpu_custom_call.1} parent=1 // pred_check_branch
      %302 = sbr.rel (0) target = $region137
    $region136: #{tpu_custom_call.1} parent=1 // pred_region
      %303 = dma.done [#allocation12], 16
    $region137: #{tpu_custom_call.1} parent=1 // pred_fallthru
      _
    // Predicated region
    $region138: #{tpu_custom_call.1} parent=1 // pred_check
      _
    $region139: #{tpu_custom_call.1} parent=1 // pred_check_branch
      %305 = sbr.rel (0) target = $region141
    $region140: #{tpu_custom_call.1} parent=1 // pred_region
      %306 = dma.done [#allocation12], 16
    $region141: #{tpu_custom_call.1} parent=1 // pred_fallthru
      _
    // Predicated region
    $region142: #{tpu_custom_call.1} parent=1 // pred_check
      _
    $region143: #{tpu_custom_call.1} parent=1 // pred_check_branch
      %308 = sbr.rel (0) target = $region145
    $region144: #{tpu_custom_call.1} parent=1 // pred_region
      %309 = dma.done [#allocation15], 512
    $region145: #{tpu_custom_call.1} parent=1 // pred_fallthru
      _
    // Predicated region
    $region146: #{tpu_custom_call.1} parent=1 // pred_check
      _
    $region147: #{tpu_custom_call.1} parent=1 // pred_check_branch
      %311 = sbr.rel (0) target = $region149
    $region148: #{tpu_custom_call.1} parent=1 // pred_region
      %312 = dma.done [#allocation15], 16
    $region149: #{tpu_custom_call.1} parent=1 // pred_fallthru
      _
    // Predicated region
    $region150: #{tpu_custom_call.1} parent=1 // pred_check
      _
    $region151: #{tpu_custom_call.1} parent=1 // pred_check_branch
      %314 = sbr.rel (0) target = $region153
    $region152: #{tpu_custom_call.1} parent=1 // pred_region
      %315 = dma.done [#allocation18], 2048
    $region153: #{tpu_custom_call.1} parent=1 // pred_fallthru
      _
    // Predicated region
    $region154: #{tpu_custom_call.1} parent=1 // pred_check
      _
    $region155: #{tpu_custom_call.1} parent=1 // pred_check_branch
      %317 = sbr.rel (0) target = $region157
    $region156: #{tpu_custom_call.1} parent=1 // pred_region
      %318 = dma.done [#allocation18], 32
    $region157: #{tpu_custom_call.1} parent=1 // pred_fallthru
      _
    // Predicated region
    $region158: #{tpu_custom_call.1} parent=1 // pred_check
      _
    $region159: #{tpu_custom_call.1} parent=1 // pred_check_branch
      %320 = sbr.rel (0) target = $region161
    $region160: #{tpu_custom_call.1} parent=1 // pred_region
      %321 = dma.done [#allocation21], 2048
    $region161: #{tpu_custom_call.1} parent=1 // pred_fallthru
      _
    // Predicated region
    $region162: #{tpu_custom_call.1} parent=1 // pred_check
      _
    $region163: #{tpu_custom_call.1} parent=1 // pred_check_branch
      %323 = sbr.rel (0) target = $region165
    $region164: #{tpu_custom_call.1} parent=1 // pred_region
      %324 = dma.done [#allocation21], 16
    $region165: #{tpu_custom_call.1} parent=1 // pred_fallthru
      _
    // Predicated region
    $region166: #{tpu_custom_call.1} parent=1 // pred_check
      _
    $region167: #{tpu_custom_call.1} parent=1 // pred_check_branch
      %326 = sbr.rel (0) target = $region169
    $region168: #{tpu_custom_call.1} parent=1 // pred_region
      %327 = dma.done [#allocation24], 2048
    $region169: #{tpu_custom_call.1} parent=1 // pred_fallthru
      _
    // Predicated region
    $region170: #{tpu_custom_call.1} parent=1 // pred_check
      _
    $region171: #{tpu_custom_call.1} parent=1 // pred_check_branch
      %329 = sbr.rel (0) target = $region173
    $region172: #{tpu_custom_call.1} parent=1 // pred_region
      %330 = dma.done [#allocation24], 16
    $region173: #{tpu_custom_call.1} parent=1 // pred_fallthru
      _
    // Predicated region
    $region174: #{tpu_custom_call.1} parent=1 // pred_check
      _
    $region175: #{tpu_custom_call.1} parent=1 // pred_check_branch
      %332 = sbr.rel (0) target = $region177
    $region176: #{tpu_custom_call.1} parent=1 // pred_region
      %333 = dma.done [#allocation27], 1024
    $region177: #{tpu_custom_call.1} parent=1 // pred_fallthru
      _
    // Predicated region
    $region178: #{tpu_custom_call.1} parent=1 // pred_check
      _
    $region179: #{tpu_custom_call.1} parent=1 // pred_check_branch
      %335 = sbr.rel (0) target = $region181
    $region180: #{tpu_custom_call.1} parent=1 // pred_region
      %336 = dma.done [#allocation27], 1024
    $region181: #{tpu_custom_call.1} parent=1 // pred_fallthru
      _
    %v338 = vld [vmem:[%s1] sm:$0xff]
    %v339 = vld [vmem:[%s1 + $0x8] sm:$0xff]
    %v340 = vld [vmem:[%s1 + $0x10] sm:$0xff]
    %v341 = vld [vmem:[%s1 + $0x18] sm:$0xff]
    %v342 = vld [vmem:[%s1 + $0x20] sm:$0xff]
    %v343 = vld [vmem:[%s1 + $0x28] sm:$0xff]
    %v344 = vld [vmem:[%s1 + $0x30] sm:$0xff]
    %v345 = vld [vmem:[%s1 + $0x38] sm:$0xff]
    %v346 = vld [vmem:[%s1 + $0x40] sm:$0xff]
    %v347 = vld [vmem:[%s1 + $0x48] sm:$0xff]
    %v348 = vld [vmem:[%s1 + $0x50] sm:$0xff]
    %v349 = vld [vmem:[%s1 + $0x58] sm:$0xff]
    %v350 = vld [vmem:[%s1 + $0x60] sm:$0xff]
    %v351 = vld [vmem:[%s1 + $0x68] sm:$0xff]
    %v352 = vld [vmem:[%s1 + $0x70] sm:$0xff]
    %v353 = vld [vmem:[%s1 + $0x78] sm:$0xff]
    %v354 = vld [vmem:[#allocation5] sm:$0xff]
    %v355 = vld [vmem:[#allocation5 + $0x8] sm:$0xff]
    %v356 = vld [vmem:[#allocation5 + $0x10] sm:$0xff]
    %v357 = vld [vmem:[#allocation5 + $0x18] sm:$0xff]
    %v358 = vld [vmem:[#allocation5 + $0x20] sm:$0xff]
    %v359 = vld [vmem:[#allocation5 + $0x28] sm:$0xff]
    %v360 = vld [vmem:[#allocation5 + $0x30] sm:$0xff]
    %v361 = vld [vmem:[#allocation5 + $0x38] sm:$0xff]
    %v362 = vld [vmem:[#allocation5 + $0x40] sm:$0xff]
    %v363 = vld [vmem:[#allocation5 + $0x48] sm:$0xff]
    %v364 = vld [vmem:[#allocation5 + $0x50] sm:$0xff]
    %v365 = vld [vmem:[#allocation5 + $0x58] sm:$0xff]
    %v366 = vld [vmem:[#allocation5 + $0x60] sm:$0xff]
    %v367 = vld [vmem:[#allocation5 + $0x68] sm:$0xff]
    %v368 = vld [vmem:[#allocation5 + $0x70] sm:$0xff]
    %v369 = vld [vmem:[#allocation5 + $0x78] sm:$0xff]
    %v370 = vld [vmem:[#allocation5 + $0x80] sm:$0xff]
    %v371 = vld [vmem:[#allocation5 + $0x88] sm:$0xff]
    %v372 = vld [vmem:[#allocation5 + $0x90] sm:$0xff]
    %v373 = vld [vmem:[#allocation5 + $0x98] sm:$0xff]
    %v374 = vld [vmem:[#allocation5 + $0xa0] sm:$0xff]
    %v375 = vld [vmem:[#allocation5 + $0xa8] sm:$0xff]
    %v376 = vld [vmem:[#allocation5 + $0xb0] sm:$0xff]
    %v377 = vld [vmem:[#allocation5 + $0xb8] sm:$0xff]
    %v378 = vld [vmem:[#allocation5 + $0xc0] sm:$0xff]
    %v379 = vld [vmem:[#allocation5 + $0xc8] sm:$0xff]
    %v380 = vld [vmem:[#allocation5 + $0xd0] sm:$0xff]
    %v381 = vld [vmem:[#allocation5 + $0xd8] sm:$0xff]
    %v382 = vld [vmem:[#allocation5 + $0xe0] sm:$0xff]
    %v383 = vld [vmem:[#allocation5 + $0xe8] sm:$0xff]
    %v384 = vld [vmem:[#allocation5 + $0xf0] sm:$0xff]
    %v385 = vld [vmem:[#allocation5 + $0xf8] sm:$0xff]
    %v386 = vld [vmem:[#allocation7] sm:$0x3]
    %v388 = vlaneseq
    %v389 = vshrl.u32 %v388, 7
    %v390 = vsub.s32 0, %v389
    %v391 = vrot.slane %v386, %v390
    %v392 = vlaneseq
    %v393 = vshrl.u32 %v392, 7
    %v394 = vsub.s32 1, %v393
    %v395 = vrot.slane %v386, %v394
    %v414 = vunpack.c.l.b16 %v338
    %v415 = vunpack.c.h.b16 %v338
    %v416 = vunpack.c.l.b16 %v339
    %v417 = vunpack.c.h.b16 %v339
    %v418 = vunpack.c.l.b16 %v340
    %v419 = vunpack.c.h.b16 %v340
    %v420 = vunpack.c.l.b16 %v341
    %v421 = vunpack.c.h.b16 %v341
    %v422 = vunpack.c.l.b16 %v342
    %v423 = vunpack.c.h.b16 %v342
    %v424 = vunpack.c.l.b16 %v343
    %v425 = vunpack.c.h.b16 %v343
    %v426 = vunpack.c.l.b16 %v344
    %v427 = vunpack.c.h.b16 %v344
    %v428 = vunpack.c.l.b16 %v345
    %v429 = vunpack.c.h.b16 %v345
    %v430 = vunpack.c.l.b16 %v346
    %v431 = vunpack.c.h.b16 %v346
    %v432 = vunpack.c.l.b16 %v347
    %v433 = vunpack.c.h.b16 %v347
    %v434 = vunpack.c.l.b16 %v348
    %v435 = vunpack.c.h.b16 %v348
    %v436 = vunpack.c.l.b16 %v349
    %v437 = vunpack.c.h.b16 %v349
    %v438 = vunpack.c.l.b16 %v350
    %v439 = vunpack.c.h.b16 %v350
    %v440 = vunpack.c.l.b16 %v351
    %v441 = vunpack.c.h.b16 %v351
    %v442 = vunpack.c.l.b16 %v352
    %v443 = vunpack.c.h.b16 %v352
    %v444 = vunpack.c.l.b16 %v353
    %v445 = vunpack.c.h.b16 %v353
    %v446 = vpack.c.b16 %v416, %v414
    %v447 = vpack.c.b16 %v417, %v415
    %v448 = vpack.c.b16 %v420, %v418
    %v449 = vpack.c.b16 %v421, %v419
    %v450 = vpack.c.b16 %v424, %v422
    %v451 = vpack.c.b16 %v425, %v423
    %v452 = vpack.c.b16 %v428, %v426
    %v453 = vpack.c.b16 %v429, %v427
    %v454 = vpack.c.b16 %v432, %v430
    %v455 = vpack.c.b16 %v433, %v431
    %v456 = vpack.c.b16 %v436, %v434
    %v457 = vpack.c.b16 %v437, %v435
    %v458 = vpack.c.b16 %v440, %v438
    %v459 = vpack.c.b16 %v441, %v439
    %v460 = vpack.c.b16 %v444, %v442
    %v461 = vpack.c.b16 %v445, %v443
    %v510 = vunpack.c.l.b16 %v354
    %v511 = vunpack.c.h.b16 %v354
    %v512 = vunpack.c.l.b16 %v355
    %v513 = vunpack.c.h.b16 %v355
    %v514 = vunpack.c.l.b16 %v356
    %v515 = vunpack.c.h.b16 %v356
    %v516 = vunpack.c.l.b16 %v357
    %v517 = vunpack.c.h.b16 %v357
    %v518 = vunpack.c.l.b16 %v358
    %v519 = vunpack.c.h.b16 %v358
    %v520 = vunpack.c.l.b16 %v359
    %v521 = vunpack.c.h.b16 %v359
    %v522 = vunpack.c.l.b16 %v360
    %v523 = vunpack.c.h.b16 %v360
    %v524 = vunpack.c.l.b16 %v361
    %v525 = vunpack.c.h.b16 %v361
    %v526 = vunpack.c.l.b16 %v362
    %v527 = vunpack.c.h.b16 %v362
    %v528 = vunpack.c.l.b16 %v363
    %v529 = vunpack.c.h.b16 %v363
    %v530 = vunpack.c.l.b16 %v364
    %v531 = vunpack.c.h.b16 %v364
    %v532 = vunpack.c.l.b16 %v365
    %v533 = vunpack.c.h.b16 %v365
    %v534 = vunpack.c.l.b16 %v366
    %v535 = vunpack.c.h.b16 %v366
    %v536 = vunpack.c.l.b16 %v367
    %v537 = vunpack.c.h.b16 %v367
    %v538 = vunpack.c.l.b16 %v368
    %v539 = vunpack.c.h.b16 %v368
    %v540 = vunpack.c.l.b16 %v369
    %v541 = vunpack.c.h.b16 %v369
    %v542 = vunpack.c.l.b16 %v370
    %v543 = vunpack.c.h.b16 %v370
    %v544 = vunpack.c.l.b16 %v371
    %v545 = vunpack.c.h.b16 %v371
    %v546 = vunpack.c.l.b16 %v372
    %v547 = vunpack.c.h.b16 %v372
    %v548 = vunpack.c.l.b16 %v373
    %v549 = vunpack.c.h.b16 %v373
    %v550 = vunpack.c.l.b16 %v374
    %v551 = vunpack.c.h.b16 %v374
    %v552 = vunpack.c.l.b16 %v375
    %v553 = vunpack.c.h.b16 %v375
    %v554 = vunpack.c.l.b16 %v376
    %v555 = vunpack.c.h.b16 %v376
    %v556 = vunpack.c.l.b16 %v377
    %v557 = vunpack.c.h.b16 %v377
    %v558 = vunpack.c.l.b16 %v378
    %v559 = vunpack.c.h.b16 %v378
    %v560 = vunpack.c.l.b16 %v379
    %v561 = vunpack.c.h.b16 %v379
    %v562 = vunpack.c.l.b16 %v380
    %v563 = vunpack.c.h.b16 %v380
    %v564 = vunpack.c.l.b16 %v381
    %v565 = vunpack.c.h.b16 %v381
    %v566 = vunpack.c.l.b16 %v382
    %v567 = vunpack.c.h.b16 %v382
    %v568 = vunpack.c.l.b16 %v383
    %v569 = vunpack.c.h.b16 %v383
    %v570 = vunpack.c.l.b16 %v384
    %v571 = vunpack.c.h.b16 %v384
    %v572 = vunpack.c.l.b16 %v385
    %v573 = vunpack.c.h.b16 %v385
    %v574 = vpack.c.b16 %v512, %v510
    %v575 = vpack.c.b16 %v513, %v511
    %v576 = vpack.c.b16 %v516, %v514
    %v577 = vpack.c.b16 %v517, %v515
    %v578 = vpack.c.b16 %v520, %v518
    %v579 = vpack.c.b16 %v521, %v519
    %v580 = vpack.c.b16 %v524, %v522
    %v581 = vpack.c.b16 %v525, %v523
    %v582 = vpack.c.b16 %v528, %v526
    %v583 = vpack.c.b16 %v529, %v527
    %v584 = vpack.c.b16 %v532, %v530
    %v585 = vpack.c.b16 %v533, %v531
    %v586 = vpack.c.b16 %v536, %v534
    %v587 = vpack.c.b16 %v537, %v535
    %v588 = vpack.c.b16 %v540, %v538
    %v589 = vpack.c.b16 %v541, %v539
    %v590 = vpack.c.b16 %v544, %v542
    %v591 = vpack.c.b16 %v545, %v543
    %v592 = vpack.c.b16 %v548, %v546
    %v593 = vpack.c.b16 %v549, %v547
    %v594 = vpack.c.b16 %v552, %v550
    %v595 = vpack.c.b16 %v553, %v551
    %v596 = vpack.c.b16 %v556, %v554
    %v597 = vpack.c.b16 %v557, %v555
    %v598 = vpack.c.b16 %v560, %v558
    %v599 = vpack.c.b16 %v561, %v559
    %v600 = vpack.c.b16 %v564, %v562
    %v601 = vpack.c.b16 %v565, %v563
    %v602 = vpack.c.b16 %v568, %v566
    %v603 = vpack.c.b16 %v569, %v567
    %v604 = vpack.c.b16 %v572, %v570
    %v605 = vpack.c.b16 %v573, %v571
    %638 = vmatprep.subr.bf16.mxu0 %v575
    %639 = vmatpush1.bf16.msra.mxu0 %v574
    %640 = vmatprep.subr.bf16.mxu0 %v577
    %641 = vmatpush1.bf16.msra.mxu0 %v576
    %642 = vmatprep.subr.bf16.mxu0 %v579
    %643 = vmatpush1.bf16.msra.mxu0 %v578
    %644 = vmatprep.subr.bf16.mxu0 %v581
    %645 = vmatpush1.bf16.msra.mxu0 %v580
    %646 = vmatprep.subr.bf16.mxu0 %v583
    %647 = vmatpush1.bf16.msra.mxu0 %v582
    %648 = vmatprep.subr.bf16.mxu0 %v585
    %649 = vmatpush1.bf16.msra.mxu0 %v584
    %650 = vmatprep.subr.bf16.mxu0 %v587
    %651 = vmatpush1.bf16.msra.mxu0 %v586
    %652 = vmatprep.subr.bf16.mxu0 %v589
    %653 = vmatpush1.bf16.msra.mxu0 %v588
    %654 = vmatprep.subr.bf16.mxu0 %v591
    %655 = vmatpush1.bf16.msra.mxu0 %v590
    %656 = vmatprep.subr.bf16.mxu0 %v593
    %657 = vmatpush1.bf16.msra.mxu0 %v592
    %658 = vmatprep.subr.bf16.mxu0 %v595
    %659 = vmatpush1.bf16.msra.mxu0 %v594
    %660 = vmatprep.subr.bf16.mxu0 %v597
    %661 = vmatpush1.bf16.msra.mxu0 %v596
    %662 = vmatprep.subr.bf16.mxu0 %v599
    %663 = vmatpush1.bf16.msra.mxu0 %v598
    %664 = vmatprep.subr.bf16.mxu0 %v601
    %665 = vmatpush1.bf16.msra.mxu0 %v600
    %666 = vmatprep.subr.bf16.mxu0 %v603
    %667 = vmatpush1.bf16.msra.mxu0 %v602
    %668 = vmatprep.subr.bf16.mxu0 %v605
    %669 = vmatpush1.bf16.msra.mxu0 %v604
    %670 = vmatprep.mubr.bf16.mxu0 %v447
    %671 = vmatmul.mubr.bf16.gmra.mrb[0].mxu0 %v446
    %v672 = vpop.f32.mrb[0].mxu0
    %v673 = vadd.f32 %v391, %v672
    %v674 = vpop.f32.mrb[0].mxu0
    %v675 = vadd.f32 %v395, %v674
    %v676 = vpop.f32.mrb[0].mxu0
    %v677 = vadd.f32 %v391, %v676
    %v678 = vpop.f32.mrb[0].mxu0
    %v679 = vadd.f32 %v395, %v678
    %680 = vmatprep.mubr.bf16.mxu0 %v449
    %681 = vmatmul.mubr.bf16.gmra.mrb[0].mxu0 %v448
    %v682 = vpop.f32.mrb[0].mxu0
    %v683 = vadd.f32 %v391, %v682
    %v684 = vpop.f32.mrb[0].mxu0
    %v685 = vadd.f32 %v395, %v684
    %v686 = vpop.f32.mrb[0].mxu0
    %v687 = vadd.f32 %v391, %v686
    %v688 = vpop.f32.mrb[0].mxu0
    %v689 = vadd.f32 %v395, %v688
    %690 = vmatprep.mubr.bf16.mxu0 %v451
    %691 = vmatmul.mubr.bf16.gmra.mrb[0].mxu0 %v450
    %v692 = vpop.f32.mrb[0].mxu0
    %v693 = vadd.f32 %v391, %v692
    %v694 = vpop.f32.mrb[0].mxu0
    %v695 = vadd.f32 %v395, %v694
    %v696 = vpop.f32.mrb[0].mxu0
    %v697 = vadd.f32 %v391, %v696
    %v698 = vpop.f32.mrb[0].mxu0
    %v699 = vadd.f32 %v395, %v698
    %700 = vmatprep.mubr.bf16.mxu0 %v453
    %701 = vmatmul.mubr.bf16.gmra.mrb[0].mxu0 %v452
    %v702 = vpop.f32.mrb[0].mxu0
    %v703 = vadd.f32 %v391, %v702
    %v704 = vpop.f32.mrb[0].mxu0
    %v705 = vadd.f32 %v395, %v704
    %v706 = vpop.f32.mrb[0].mxu0
    %v707 = vadd.f32 %v391, %v706
    %v708 = vpop.f32.mrb[0].mxu0
    %v709 = vadd.f32 %v395, %v708
    %710 = vmatprep.mubr.bf16.mxu0 %v455
    %711 = vmatmul.mubr.bf16.gmra.mrb[0].mxu0 %v454
    %v712 = vpop.f32.mrb[0].mxu0
    %v713 = vadd.f32 %v391, %v712
    %v714 = vpop.f32.mrb[0].mxu0
    %v715 = vadd.f32 %v395, %v714
    %v716 = vpop.f32.mrb[0].mxu0
    %v717 = vadd.f32 %v391, %v716
    %v718 = vpop.f32.mrb[0].mxu0
    %v719 = vadd.f32 %v395, %v718
    %720 = vmatprep.mubr.bf16.mxu0 %v457
    %721 = vmatmul.mubr.bf16.gmra.mrb[0].mxu0 %v456
    %v722 = vpop.f32.mrb[0].mxu0
    %v723 = vadd.f32 %v391, %v722
    %v724 = vpop.f32.mrb[0].mxu0
    %v725 = vadd.f32 %v395, %v724
    %v726 = vpop.f32.mrb[0].mxu0
    %v727 = vadd.f32 %v391, %v726
    %v728 = vpop.f32.mrb[0].mxu0
    %v729 = vadd.f32 %v395, %v728
    %730 = vmatprep.mubr.bf16.mxu0 %v459
    %731 = vmatmul.mubr.bf16.gmra.mrb[0].mxu0 %v458
    %v732 = vpop.f32.mrb[0].mxu0
    %v733 = vadd.f32 %v391, %v732
    %v734 = vpop.f32.mrb[0].mxu0
    %v735 = vadd.f32 %v395, %v734
    %v736 = vpop.f32.mrb[0].mxu0
    %v737 = vadd.f32 %v391, %v736
    %v738 = vpop.f32.mrb[0].mxu0
    %v739 = vadd.f32 %v395, %v738
    %740 = vmatprep.mubr.bf16.mxu0 %v461
    %741 = vmatmul.mubr.bf16.gmra.mrb[0].mxu0 %v460
    %v742 = vpop.f32.mrb[0].mxu0
    %v743 = vadd.f32 %v391, %v742
    %v744 = vpop.f32.mrb[0].mxu0
    %v745 = vadd.f32 %v395, %v744
    %v746 = vpop.f32.mrb[0].mxu0
    %v747 = vadd.f32 %v391, %v746
    %v748 = vpop.f32.mrb[0].mxu0
    %v749 = vadd.f32 %v395, %v748
    %750 = vdwg.mxu0
    %v751 = vpack.c.bf16 %v677, %v673
    %v752 = vpack.c.bf16 %v687, %v683
    %v753 = vpack.c.bf16 %v697, %v693
    %v754 = vpack.c.bf16 %v707, %v703
    %v755 = vpack.c.bf16 %v717, %v713
    %v756 = vpack.c.bf16 %v727, %v723
    %v757 = vpack.c.bf16 %v737, %v733
    %v758 = vpack.c.bf16 %v747, %v743
    %v759 = vpack.c.bf16 %v679, %v675
    %v760 = vpack.c.bf16 %v689, %v685
    %v761 = vpack.c.bf16 %v699, %v695
    %v762 = vpack.c.bf16 %v709, %v705
    %v763 = vpack.c.bf16 %v719, %v715
    %v764 = vpack.c.bf16 %v729, %v725
    %v765 = vpack.c.bf16 %v739, %v735
    %v766 = vpack.c.bf16 %v749, %v745
    %v767 = vld [vmem:[#allocation2] sm:$0xf]
    %v768 = vld [vmem:[#allocation2 + $0x4] sm:$0xf]
    %v769 = vld [vmem:[#allocation2 + $0x8] sm:$0xf]
    %v770 = vld [vmem:[#allocation2 + $0xc] sm:$0xf]
    %v771 = vld [vmem:[#allocation2 + $0x10] sm:$0xf]
    %v772 = vld [vmem:[#allocation2 + $0x14] sm:$0xf]
    %v773 = vld [vmem:[#allocation2 + $0x18] sm:$0xf]
    %v774 = vld [vmem:[#allocation2 + $0x1c] sm:$0xf]
    %v775 = vld [vmem:[#allocation2 + $0x20] sm:$0xf]
    %v776 = vld [vmem:[#allocation2 + $0x24] sm:$0xf]
    %v777 = vld [vmem:[#allocation2 + $0x28] sm:$0xf]
    %v778 = vld [vmem:[#allocation2 + $0x2c] sm:$0xf]
    %v779 = vld [vmem:[#allocation2 + $0x30] sm:$0xf]
    %v780 = vld [vmem:[#allocation2 + $0x34] sm:$0xf]
    %v781 = vld [vmem:[#allocation2 + $0x38] sm:$0xf]
    %v782 = vld [vmem:[#allocation2 + $0x3c] sm:$0xf]
    %v783 = vld [vmem:[%s9] sm:$0xf]
    %v784 = vld [vmem:[%s9 + $0x4] sm:$0xf]
    %v785 = vld [vmem:[%s9 + $0x8] sm:$0xf]
    %v786 = vld [vmem:[%s9 + $0xc] sm:$0xf]
    %v787 = vld [vmem:[%s9 + $0x10] sm:$0xf]
    %v788 = vld [vmem:[%s9 + $0x14] sm:$0xf]
    %v789 = vld [vmem:[%s9 + $0x18] sm:$0xf]
    %v790 = vld [vmem:[%s9 + $0x1c] sm:$0xf]
    %v791 = vld [vmem:[%s9 + $0x20] sm:$0xf]
    %v792 = vld [vmem:[%s9 + $0x24] sm:$0xf]
    %v793 = vld [vmem:[%s9 + $0x28] sm:$0xf]
    %v794 = vld [vmem:[%s9 + $0x2c] sm:$0xf]
    %v795 = vld [vmem:[%s9 + $0x30] sm:$0xf]
    %v796 = vld [vmem:[%s9 + $0x34] sm:$0xf]
    %v797 = vld [vmem:[%s9 + $0x38] sm:$0xf]
    %v798 = vld [vmem:[%s9 + $0x3c] sm:$0xf]
    %v799 = vld [vmem:[#allocation8] sm:$0x1]
    %v801 = vlaneseq
    %v802 = vshrl.u32 %v801, 7
    %v803 = vsub.s32 0, %v802
    %v804 = vrot.slane %v799, %v803
    %v822 = vunpack.c.l.b16 %v767
    %v823 = vunpack.c.l.b16 %v768
    %v824 = vunpack.c.l.b16 %v769
    %v825 = vunpack.c.l.b16 %v770
    %v826 = vunpack.c.l.b16 %v771
    %v827 = vunpack.c.l.b16 %v772
    %v828 = vunpack.c.l.b16 %v773
    %v829 = vunpack.c.l.b16 %v774
    %v830 = vunpack.c.l.b16 %v775
    %v831 = vunpack.c.l.b16 %v776
    %v832 = vunpack.c.l.b16 %v777
    %v833 = vunpack.c.l.b16 %v778
    %v834 = vunpack.c.l.b16 %v779
    %v835 = vunpack.c.l.b16 %v780
    %v836 = vunpack.c.l.b16 %v781
    %v837 = vunpack.c.l.b16 %v782
    %v838 = vpack.c.b16 %v823, %v822
    %v839 = vpack.c.b16 %v825, %v824
    %v840 = vpack.c.b16 %v827, %v826
    %v841 = vpack.c.b16 %v829, %v828
    %v842 = vpack.c.b16 %v831, %v830
    %v843 = vpack.c.b16 %v833, %v832
    %v844 = vpack.c.b16 %v835, %v834
    %v845 = vpack.c.b16 %v837, %v836
    %v870 = vunpack.c.l.b16 %v783
    %v871 = vunpack.c.l.b16 %v784
    %v872 = vunpack.c.l.b16 %v785
    %v873 = vunpack.c.l.b16 %v786
    %v874 = vunpack.c.l.b16 %v787
    %v875 = vunpack.c.l.b16 %v788
    %v876 = vunpack.c.l.b16 %v789
    %v877 = vunpack.c.l.b16 %v790
    %v878 = vunpack.c.l.b16 %v791
    %v879 = vunpack.c.l.b16 %v792
    %v880 = vunpack.c.l.b16 %v793
    %v881 = vunpack.c.l.b16 %v794
    %v882 = vunpack.c.l.b16 %v795
    %v883 = vunpack.c.l.b16 %v796
    %v884 = vunpack.c.l.b16 %v797
    %v885 = vunpack.c.l.b16 %v798
    %v886 = vpack.c.b16 %v871, %v870
    %v887 = vpack.c.b16 %v873, %v872
    %v888 = vpack.c.b16 %v875, %v874
    %v889 = vpack.c.b16 %v877, %v876
    %v890 = vpack.c.b16 %v879, %v878
    %v891 = vpack.c.b16 %v881, %v880
    %v892 = vpack.c.b16 %v883, %v882
    %v893 = vpack.c.b16 %v885, %v884
    %902 = vmatprep.subr.bf16.mxu0 0
    %903 = vmatpush1.bf16.msra.mxu0 %v886
    %904 = vmatprep.subr.bf16.mxu0 0
    %905 = vmatpush1.bf16.msra.mxu0 %v887
    %906 = vmatprep.subr.bf16.mxu0 0
    %907 = vmatpush1.bf16.msra.mxu0 %v888
    %908 = vmatprep.subr.bf16.mxu0 0
    %909 = vmatpush1.bf16.msra.mxu0 %v889
    %910 = vmatprep.subr.bf16.mxu0 0
    %911 = vmatpush1.bf16.msra.mxu0 %v890
    %912 = vmatprep.subr.bf16.mxu0 0
    %913 = vmatpush1.bf16.msra.mxu0 %v891
    %914 = vmatprep.subr.bf16.mxu0 0
    %915 = vmatpush1.bf16.msra.mxu0 %v892
    %916 = vmatprep.subr.bf16.mxu0 0
    %917 = vmatpush1.bf16.msra.mxu0 %v893
    %918 = vmatprep.subr.bf16.mxu0 0
    %919 = vmatpush1.bf16.msra.mxu0 0
    %920 = vmatprep.subr.bf16.mxu0 0
    %921 = vmatpush1.bf16.msra.mxu0 0
    %922 = vmatprep.subr.bf16.mxu0 0
    %923 = vmatpush1.bf16.msra.mxu0 0
    %924 = vmatprep.subr.bf16.mxu0 0
    %925 = vmatpush1.bf16.msra.mxu0 0
    %926 = vmatprep.subr.bf16.mxu0 0
    %927 = vmatpush1.bf16.msra.mxu0 0
    %928 = vmatprep.subr.bf16.mxu0 0
    %929 = vmatpush1.bf16.msra.mxu0 0
    %930 = vmatprep.subr.bf16.mxu0 0
    %931 = vmatpush1.bf16.msra.mxu0 0
    %932 = vmatprep.subr.bf16.mxu0 0
    %933 = vmatpush1.bf16.msra.mxu0 0
    %934 = vmatprep.mubr.bf16.mxu0 0
    %935 = vmatmul.mubr.bf16.gmra.mrb[0].mxu0 %v838
    %v936 = vpop.f32.mrb[0].mxu0
    %v937 = vadd.f32 %v804, %v936
    %v938 = vpop.f32.mrb[0].mxu0
    %v939 = vpop.f32.mrb[0].mxu0
    %v940 = vadd.f32 %v804, %v939
    %v941 = vpop.f32.mrb[0].mxu0
    %942 = vmatprep.mubr.bf16.mxu0 0
    %943 = vmatmul.mubr.bf16.gmra.mrb[0].mxu0 %v839
    %v944 = vpop.f32.mrb[0].mxu0
    %v945 = vadd.f32 %v804, %v944
    %v946 = vpop.f32.mrb[0].mxu0
    %v947 = vpop.f32.mrb[0].mxu0
    %v948 = vadd.f32 %v804, %v947
    %v949 = vpop.f32.mrb[0].mxu0
    %950 = vmatprep.mubr.bf16.mxu0 0
    %951 = vmatmul.mubr.bf16.gmra.mrb[0].mxu0 %v840
    %v952 = vpop.f32.mrb[0].mxu0
    %v953 = vadd.f32 %v804, %v952
    %v954 = vpop.f32.mrb[0].mxu0
    %v955 = vpop.f32.mrb[0].mxu0
    %v956 = vadd.f32 %v804, %v955
    %v957 = vpop.f32.mrb[0].mxu0
    %958 = vmatprep.mubr.bf16.mxu0 0
    %959 = vmatmul.mubr.bf16.gmra.mrb[0].mxu0 %v841
    %v960 = vpop.f32.mrb[0].mxu0
    %v961 = vadd.f32 %v804, %v960
    %v962 = vpop.f32.mrb[0].mxu0
    %v963 = vpop.f32.mrb[0].mxu0
    %v964 = vadd.f32 %v804, %v963
    %v965 = vpop.f32.mrb[0].mxu0
    %966 = vmatprep.mubr.bf16.mxu0 0
    %967 = vmatmul.mubr.bf16.gmra.mrb[0].mxu0 %v842
    %v968 = vpop.f32.mrb[0].mxu0
    %v969 = vadd.f32 %v804, %v968
    %v970 = vpop.f32.mrb[0].mxu0
    %v971 = vpop.f32.mrb[0].mxu0
    %v972 = vadd.f32 %v804, %v971
    %v973 = vpop.f32.mrb[0].mxu0
    %974 = vmatprep.mubr.bf16.mxu0 0
    %975 = vmatmul.mubr.bf16.gmra.mrb[0].mxu0 %v843
    %v976 = vpop.f32.mrb[0].mxu0
    %v977 = vadd.f32 %v804, %v976
    %v978 = vpop.f32.mrb[0].mxu0
    %v979 = vpop.f32.mrb[0].mxu0
    %v980 = vadd.f32 %v804, %v979
    %v981 = vpop.f32.mrb[0].mxu0
    %982 = vmatprep.mubr.bf16.mxu0 0
    %983 = vmatmul.mubr.bf16.gmra.mrb[0].mxu0 %v844
    %v984 = vpop.f32.mrb[0].mxu0
    %v985 = vadd.f32 %v804, %v984
    %v986 = vpop.f32.mrb[0].mxu0
    %v987 = vpop.f32.mrb[0].mxu0
    %v988 = vadd.f32 %v804, %v987
    %v989 = vpop.f32.mrb[0].mxu0
    %990 = vmatprep.mubr.bf16.mxu0 0
    %991 = vmatmul.mubr.bf16.gmra.mrb[0].mxu0 %v845
    %v992 = vpop.f32.mrb[0].mxu0
    %v993 = vadd.f32 %v804, %v992
    %v994 = vpop.f32.mrb[0].mxu0
    %v995 = vpop.f32.mrb[0].mxu0
    %v996 = vadd.f32 %v804, %v995
    %v997 = vpop.f32.mrb[0].mxu0
    %998 = vdwg.mxu0
    %v999 = vmax.f32 %v937, 0.0
    %v1000 = vmax.f32 %v940, 0.0
    %v1001 = vmax.f32 %v945, 0.0
    %v1002 = vmax.f32 %v948, 0.0
    %v1003 = vmax.f32 %v953, 0.0
    %v1004 = vmax.f32 %v956, 0.0
    %v1005 = vmax.f32 %v961, 0.0
    %v1006 = vmax.f32 %v964, 0.0
    %v1007 = vmax.f32 %v969, 0.0
    %v1008 = vmax.f32 %v972, 0.0
    %v1009 = vmax.f32 %v977, 0.0
    %v1010 = vmax.f32 %v980, 0.0
    %v1011 = vmax.f32 %v985, 0.0
    %v1012 = vmax.f32 %v988, 0.0
    %v1013 = vmax.f32 %v993, 0.0
    %v1014 = vmax.f32 %v996, 0.0
    %v1015 = vpack.c.bf16 %v1000, %v999
    %v1016 = vpack.c.bf16 %v1002, %v1001
    %v1017 = vpack.c.bf16 %v1004, %v1003
    %v1018 = vpack.c.bf16 %v1006, %v1005
    %v1019 = vpack.c.bf16 %v1008, %v1007
    %v1020 = vpack.c.bf16 %v1010, %v1009
    %v1021 = vpack.c.bf16 %v1012, %v1011
    %v1022 = vpack.c.bf16 %v1014, %v1013
    %v1023 = vld [vmem:[#allocation10] sm:$0xf]
    %v1024 = vld [vmem:[#allocation10 + $0x4] sm:$0xf]
    %v1025 = vld [vmem:[#allocation10 + $0x8] sm:$0xf]
    %v1026 = vld [vmem:[#allocation10 + $0xc] sm:$0xf]
    %v1027 = vld [vmem:[#allocation10 + $0x10] sm:$0xf]
    %v1028 = vld [vmem:[#allocation10 + $0x14] sm:$0xf]
    %v1029 = vld [vmem:[#allocation10 + $0x18] sm:$0xf]
    %v1030 = vld [vmem:[#allocation10 + $0x1c] sm:$0xf]
    %v1031 = vld [vmem:[#allocation11] sm:$0x1]
    %v1033 = vlaneseq
    %v1034 = vshrl.u32 %v1033, 7
    %v1035 = vsub.s32 0, %v1034
    %v1036 = vrot.slane %v1031, %v1035
    %v1046 = vunpack.c.l.b16 %v1023
    %v1047 = vunpack.c.l.b16 %v1024
    %v1048 = vunpack.c.l.b16 %v1025
    %v1049 = vunpack.c.l.b16 %v1026
    %v1050 = vunpack.c.l.b16 %v1027
    %v1051 = vunpack.c.l.b16 %v1028
    %v1052 = vunpack.c.l.b16 %v1029
    %v1053 = vunpack.c.l.b16 %v1030
    %v1054 = vpack.c.b16 %v1047, %v1046
    %v1055 = vpack.c.b16 %v1049, %v1048
    %v1056 = vpack.c.b16 %v1051, %v1050
    %v1057 = vpack.c.b16 %v1053, %v1052
    %vm1062 = vcmask 523264
    %v1064 = vsel %vm1062, %v1015, 0
    %v1067 = vsel %vm1062, %v1016, 0
    %v1070 = vsel %vm1062, %v1017, 0
    %v1073 = vsel %vm1062, %v1018, 0
    %v1076 = vsel %vm1062, %v1019, 0
    %v1079 = vsel %vm1062, %v1020, 0
    %v1082 = vsel %vm1062, %v1021, 0
    %v1085 = vsel %vm1062, %v1022, 0
    %1087 = vmatprep.subr.bf16.mxu0 0
    %1088 = vmatpush1.bf16.msra.mxu0 %v1054
    %1089 = vmatprep.subr.bf16.mxu0 0
    %1090 = vmatpush1.bf16.msra.mxu0 %v1055
    %1091 = vmatprep.subr.bf16.mxu0 0
    %1092 = vmatpush1.bf16.msra.mxu0 %v1056
    %1093 = vmatprep.subr.bf16.mxu0 0
    %1094 = vmatpush1.bf16.msra.mxu0 %v1057
    %1095 = vmatprep.subr.bf16.mxu0 0
    %1096 = vmatpush1.bf16.msra.mxu0 0
    %1097 = vmatprep.subr.bf16.mxu0 0
    %1098 = vmatpush1.bf16.msra.mxu0 0
    %1099 = vmatprep.subr.bf16.mxu0 0
    %1100 = vmatpush1.bf16.msra.mxu0 0
    %1101 = vmatprep.subr.bf16.mxu0 0
    %1102 = vmatpush1.bf16.msra.mxu0 0
    %1103 = vmatprep.subr.bf16.mxu0 0
    %1104 = vmatpush1.bf16.msra.mxu0 0
    %1105 = vmatprep.subr.bf16.mxu0 0
    %1106 = vmatpush1.bf16.msra.mxu0 0
    %1107 = vmatprep.subr.bf16.mxu0 0
    %1108 = vmatpush1.bf16.msra.mxu0 0
    %1109 = vmatprep.subr.bf16.mxu0 0
    %1110 = vmatpush1.bf16.msra.mxu0 0
    %1111 = vmatprep.subr.bf16.mxu0 0
    %1112 = vmatpush1.bf16.msra.mxu0 0
    %1113 = vmatprep.subr.bf16.mxu0 0
    %1114 = vmatpush1.bf16.msra.mxu0 0
    %1115 = vmatprep.subr.bf16.mxu0 0
    %1116 = vmatpush1.bf16.msra.mxu0 0
    %1117 = vmatprep.subr.bf16.mxu0 0
    %1118 = vmatpush1.bf16.msra.mxu0 0
    %1119 = vmatprep.mubr.bf16.mxu0 0
    %1120 = vmatmul.mubr.bf16.gmra.mrb[0].mxu0 %v1064
    %v1121 = vpop.f32.mrb[0].mxu0
    %v1122 = vadd.f32 %v1036, %v1121
    %v1123 = vpop.f32.mrb[0].mxu0
    %v1124 = vpop.f32.mrb[0].mxu0
    %v1125 = vadd.f32 %v1036, %v1124
    %v1126 = vpop.f32.mrb[0].mxu0
    %1127 = vmatprep.mubr.bf16.mxu0 0
    %1128 = vmatmul.mubr.bf16.gmra.mrb[0].mxu0 %v1067
    %v1129 = vpop.f32.mrb[0].mxu0
    %v1130 = vadd.f32 %v1036, %v1129
    %v1131 = vpop.f32.mrb[0].mxu0
    %v1132 = vpop.f32.mrb[0].mxu0
    %v1133 = vadd.f32 %v1036, %v1132
    %v1134 = vpop.f32.mrb[0].mxu0
    %1135 = vmatprep.mubr.bf16.mxu0 0
    %1136 = vmatmul.mubr.bf16.gmra.mrb[0].mxu0 %v1070
    %v1137 = vpop.f32.mrb[0].mxu0
    %v1138 = vadd.f32 %v1036, %v1137
    %v1139 = vpop.f32.mrb[0].mxu0
    %v1140 = vpop.f32.mrb[0].mxu0
    %v1141 = vadd.f32 %v1036, %v1140
    %v1142 = vpop.f32.mrb[0].mxu0
    %1143 = vmatprep.mubr.bf16.mxu0 0
    %1144 = vmatmul.mubr.bf16.gmra.mrb[0].mxu0 %v1073
    %v1145 = vpop.f32.mrb[0].mxu0
    %v1146 = vadd.f32 %v1036, %v1145
    %v1147 = vpop.f32.mrb[0].mxu0
    %v1148 = vpop.f32.mrb[0].mxu0
    %v1149 = vadd.f32 %v1036, %v1148
    %v1150 = vpop.f32.mrb[0].mxu0
    %1151 = vmatprep.mubr.bf16.mxu0 0
    %1152 = vmatmul.mubr.bf16.gmra.mrb[0].mxu0 %v1076
    %v1153 = vpop.f32.mrb[0].mxu0
    %v1154 = vadd.f32 %v1036, %v1153
    %v1155 = vpop.f32.mrb[0].mxu0
    %v1156 = vpop.f32.mrb[0].mxu0
    %v1157 = vadd.f32 %v1036, %v1156
    %v1158 = vpop.f32.mrb[0].mxu0
    %1159 = vmatprep.mubr.bf16.mxu0 0
    %1160 = vmatmul.mubr.bf16.gmra.mrb[0].mxu0 %v1079
    %v1161 = vpop.f32.mrb[0].mxu0
    %v1162 = vadd.f32 %v1036, %v1161
    %v1163 = vpop.f32.mrb[0].mxu0
    %v1164 = vpop.f32.mrb[0].mxu0
    %v1165 = vadd.f32 %v1036, %v1164
    %v1166 = vpop.f32.mrb[0].mxu0
    %1167 = vmatprep.mubr.bf16.mxu0 0
    %1168 = vmatmul.mubr.bf16.gmra.mrb[0].mxu0 %v1082
    %v1169 = vpop.f32.mrb[0].mxu0
    %v1170 = vadd.f32 %v1036, %v1169
    %v1171 = vpop.f32.mrb[0].mxu0
    %v1172 = vpop.f32.mrb[0].mxu0
    %v1173 = vadd.f32 %v1036, %v1172
    %v1174 = vpop.f32.mrb[0].mxu0
    %1175 = vmatprep.mubr.bf16.mxu0 0
    %1176 = vmatmul.mubr.bf16.gmra.mrb[0].mxu0 %v1085
    %v1177 = vpop.f32.mrb[0].mxu0
    %v1178 = vadd.f32 %v1036, %v1177
    %v1179 = vpop.f32.mrb[0].mxu0
    %v1180 = vpop.f32.mrb[0].mxu0
    %v1181 = vadd.f32 %v1036, %v1180
    %v1182 = vpop.f32.mrb[0].mxu0
    %1183 = vdwg.mxu0
    %v1184 = vld [vmem:[%s17] sm:$0xf]
    %v1185 = vld [vmem:[%s17 + $0x4] sm:$0xf]
    %v1186 = vld [vmem:[%s17 + $0x8] sm:$0xf]
    %v1187 = vld [vmem:[%s17 + $0xc] sm:$0xf]
    %v1188 = vld [vmem:[%s17 + $0x10] sm:$0xf]
    %v1189 = vld [vmem:[%s17 + $0x14] sm:$0xf]
    %v1190 = vld [vmem:[%s17 + $0x18] sm:$0xf]
    %v1191 = vld [vmem:[%s17 + $0x1c] sm:$0xf]
    %v1192 = vld [vmem:[%s17 + $0x20] sm:$0xf]
    %v1193 = vld [vmem:[%s17 + $0x24] sm:$0xf]
    %v1194 = vld [vmem:[%s17 + $0x28] sm:$0xf]
    %v1195 = vld [vmem:[%s17 + $0x2c] sm:$0xf]
    %v1196 = vld [vmem:[%s17 + $0x30] sm:$0xf]
    %v1197 = vld [vmem:[%s17 + $0x34] sm:$0xf]
    %v1198 = vld [vmem:[%s17 + $0x38] sm:$0xf]
    %v1199 = vld [vmem:[%s17 + $0x3c] sm:$0xf]
    %v1200 = vld [vmem:[#allocation13] sm:$0x1]
    %v1202 = vlaneseq
    %v1203 = vshrl.u32 %v1202, 7
    %v1204 = vsub.s32 0, %v1203
    %v1205 = vrot.slane %v1200, %v1204
    %v1223 = vunpack.c.l.b16 %v1184
    %v1224 = vunpack.c.l.b16 %v1185
    %v1225 = vunpack.c.l.b16 %v1186
    %v1226 = vunpack.c.l.b16 %v1187
    %v1227 = vunpack.c.l.b16 %v1188
    %v1228 = vunpack.c.l.b16 %v1189
    %v1229 = vunpack.c.l.b16 %v1190
    %v1230 = vunpack.c.l.b16 %v1191
    %v1231 = vunpack.c.l.b16 %v1192
    %v1232 = vunpack.c.l.b16 %v1193
    %v1233 = vunpack.c.l.b16 %v1194
    %v1234 = vunpack.c.l.b16 %v1195
    %v1235 = vunpack.c.l.b16 %v1196
    %v1236 = vunpack.c.l.b16 %v1197
    %v1237 = vunpack.c.l.b16 %v1198
    %v1238 = vunpack.c.l.b16 %v1199
    %v1239 = vpack.c.b16 %v1224, %v1223
    %v1240 = vpack.c.b16 %v1226, %v1225
    %v1241 = vpack.c.b16 %v1228, %v1227
    %v1242 = vpack.c.b16 %v1230, %v1229
    %v1243 = vpack.c.b16 %v1232, %v1231
    %v1244 = vpack.c.b16 %v1234, %v1233
    %v1245 = vpack.c.b16 %v1236, %v1235
    %v1246 = vpack.c.b16 %v1238, %v1237
    %1255 = vmatprep.subr.bf16.mxu0 0
    %1256 = vmatpush1.bf16.msra.mxu0 %v1239
    %1257 = vmatprep.subr.bf16.mxu0 0
    %1258 = vmatpush1.bf16.msra.mxu0 %v1240
    %1259 = vmatprep.subr.bf16.mxu0 0
    %1260 = vmatpush1.bf16.msra.mxu0 %v1241
    %1261 = vmatprep.subr.bf16.mxu0 0
    %1262 = vmatpush1.bf16.msra.mxu0 %v1242
    %1263 = vmatprep.subr.bf16.mxu0 0
    %1264 = vmatpush1.bf16.msra.mxu0 %v1243
    %1265 = vmatprep.subr.bf16.mxu0 0
    %1266 = vmatpush1.bf16.msra.mxu0 %v1244
    %1267 = vmatprep.subr.bf16.mxu0 0
    %1268 = vmatpush1.bf16.msra.mxu0 %v1245
    %1269 = vmatprep.subr.bf16.mxu0 0
    %1270 = vmatpush1.bf16.msra.mxu0 %v1246
    %1271 = vmatprep.subr.bf16.mxu0 0
    %1272 = vmatpush1.bf16.msra.mxu0 0
    %1273 = vmatprep.subr.bf16.mxu0 0
    %1274 = vmatpush1.bf16.msra.mxu0 0
    %1275 = vmatprep.subr.bf16.mxu0 0
    %1276 = vmatpush1.bf16.msra.mxu0 0
    %1277 = vmatprep.subr.bf16.mxu0 0
    %1278 = vmatpush1.bf16.msra.mxu0 0
    %1279 = vmatprep.subr.bf16.mxu0 0
    %1280 = vmatpush1.bf16.msra.mxu0 0
    %1281 = vmatprep.subr.bf16.mxu0 0
    %1282 = vmatpush1.bf16.msra.mxu0 0
    %1283 = vmatprep.subr.bf16.mxu0 0
    %1284 = vmatpush1.bf16.msra.mxu0 0
    %1285 = vmatprep.subr.bf16.mxu0 0
    %1286 = vmatpush1.bf16.msra.mxu0 0
    %1287 = vmatprep.mubr.bf16.mxu0 0
    %1288 = vmatmul.mubr.bf16.gmra.mrb[0].mxu0 %v838
    %v1289 = vpop.f32.mrb[0].mxu0
    %v1290 = vadd.f32 %v1205, %v1289
    %v1291 = vpop.f32.mrb[0].mxu0
    %v1292 = vpop.f32.mrb[0].mxu0
    %v1293 = vadd.f32 %v1205, %v1292
    %v1294 = vpop.f32.mrb[0].mxu0
    %1295 = vmatprep.mubr.bf16.mxu0 0
    %1296 = vmatmul.mubr.bf16.gmra.mrb[0].mxu0 %v839
    %v1297 = vpop.f32.mrb[0].mxu0
    %v1298 = vadd.f32 %v1205, %v1297
    %v1299 = vpop.f32.mrb[0].mxu0
    %v1300 = vpop.f32.mrb[0].mxu0
    %v1301 = vadd.f32 %v1205, %v1300
    %v1302 = vpop.f32.mrb[0].mxu0
    %1303 = vmatprep.mubr.bf16.mxu0 0
    %1304 = vmatmul.mubr.bf16.gmra.mrb[0].mxu0 %v840
    %v1305 = vpop.f32.mrb[0].mxu0
    %v1306 = vadd.f32 %v1205, %v1305
    %v1307 = vpop.f32.mrb[0].mxu0
    %v1308 = vpop.f32.mrb[0].mxu0
    %v1309 = vadd.f32 %v1205, %v1308
    %v1310 = vpop.f32.mrb[0].mxu0
    %1311 = vmatprep.mubr.bf16.mxu0 0
    %1312 = vmatmul.mubr.bf16.gmra.mrb[0].mxu0 %v841
    %v1313 = vpop.f32.mrb[0].mxu0
    %v1314 = vadd.f32 %v1205, %v1313
    %v1315 = vpop.f32.mrb[0].mxu0
    %v1316 = vpop.f32.mrb[0].mxu0
    %v1317 = vadd.f32 %v1205, %v1316
    %v1318 = vpop.f32.mrb[0].mxu0
    %1319 = vmatprep.mubr.bf16.mxu0 0
    %1320 = vmatmul.mubr.bf16.gmra.mrb[0].mxu0 %v842
    %v1321 = vpop.f32.mrb[0].mxu0
    %v1322 = vadd.f32 %v1205, %v1321
    %v1323 = vpop.f32.mrb[0].mxu0
    %v1324 = vpop.f32.mrb[0].mxu0
    %v1325 = vadd.f32 %v1205, %v1324
    %v1326 = vpop.f32.mrb[0].mxu0
    %1327 = vmatprep.mubr.bf16.mxu0 0
    %1328 = vmatmul.mubr.bf16.gmra.mrb[0].mxu0 %v843
    %v1329 = vpop.f32.mrb[0].mxu0
    %v1330 = vadd.f32 %v1205, %v1329
    %v1331 = vpop.f32.mrb[0].mxu0
    %v1332 = vpop.f32.mrb[0].mxu0
    %v1333 = vadd.f32 %v1205, %v1332
    %v1334 = vpop.f32.mrb[0].mxu0
    %1335 = vmatprep.mubr.bf16.mxu0 0
    %1336 = vmatmul.mubr.bf16.gmra.mrb[0].mxu0 %v844
    %v1337 = vpop.f32.mrb[0].mxu0
    %v1338 = vadd.f32 %v1205, %v1337
    %v1339 = vpop.f32.mrb[0].mxu0
    %v1340 = vpop.f32.mrb[0].mxu0
    %v1341 = vadd.f32 %v1205, %v1340
    %v1342 = vpop.f32.mrb[0].mxu0
    %1343 = vmatprep.mubr.bf16.mxu0 0
    %1344 = vmatmul.mubr.bf16.gmra.mrb[0].mxu0 %v845
    %v1345 = vpop.f32.mrb[0].mxu0
    %v1346 = vadd.f32 %v1205, %v1345
    %v1347 = vpop.f32.mrb[0].mxu0
    %v1348 = vpop.f32.mrb[0].mxu0
    %v1349 = vadd.f32 %v1205, %v1348
    %v1350 = vpop.f32.mrb[0].mxu0
    %1351 = vdwg.mxu0
    %v1352 = vmax.f32 %v1290, 0.0
    %v1353 = vmax.f32 %v1293, 0.0
    %v1354 = vmax.f32 %v1298, 0.0
    %v1355 = vmax.f32 %v1301, 0.0
    %v1356 = vmax.f32 %v1306, 0.0
    %v1357 = vmax.f32 %v1309, 0.0
    %v1358 = vmax.f32 %v1314, 0.0
    %v1359 = vmax.f32 %v1317, 0.0
    %v1360 = vmax.f32 %v1322, 0.0
    %v1361 = vmax.f32 %v1325, 0.0
    %v1362 = vmax.f32 %v1330, 0.0
    %v1363 = vmax.f32 %v1333, 0.0
    %v1364 = vmax.f32 %v1338, 0.0
    %v1365 = vmax.f32 %v1341, 0.0
    %v1366 = vmax.f32 %v1346, 0.0
    %v1367 = vmax.f32 %v1349, 0.0
    %v1368 = vpack.c.bf16 %v1353, %v1352
    %v1369 = vpack.c.bf16 %v1355, %v1354
    %v1370 = vpack.c.bf16 %v1357, %v1356
    %v1371 = vpack.c.bf16 %v1359, %v1358
    %v1372 = vpack.c.bf16 %v1361, %v1360
    %v1373 = vpack.c.bf16 %v1363, %v1362
    %v1374 = vpack.c.bf16 %v1365, %v1364
    %v1375 = vpack.c.bf16 %v1367, %v1366
    %v1376 = vld [vmem:[#allocation14] sm:$0xf]
    %v1377 = vld [vmem:[#allocation14 + $0x4] sm:$0xf]
    %v1378 = vld [vmem:[#allocation14 + $0x8] sm:$0xf]
    %v1379 = vld [vmem:[#allocation14 + $0xc] sm:$0xf]
    %v1380 = vld [vmem:[#allocation14 + $0x10] sm:$0xf]
    %v1381 = vld [vmem:[#allocation14 + $0x14] sm:$0xf]
    %v1382 = vld [vmem:[#allocation14 + $0x18] sm:$0xf]
    %v1383 = vld [vmem:[#allocation14 + $0x1c] sm:$0xf]
    %v1384 = vld [vmem:[#allocation16] sm:$0x1]
    %v1386 = vlaneseq
    %v1387 = vshrl.u32 %v1386, 7
    %v1388 = vsub.s32 0, %v1387
    %v1389 = vrot.slane %v1384, %v1388
    %v1399 = vunpack.c.l.b16 %v1376
    %v1400 = vunpack.c.l.b16 %v1377
    %v1401 = vunpack.c.l.b16 %v1378
    %v1402 = vunpack.c.l.b16 %v1379
    %v1403 = vunpack.c.l.b16 %v1380
    %v1404 = vunpack.c.l.b16 %v1381
    %v1405 = vunpack.c.l.b16 %v1382
    %v1406 = vunpack.c.l.b16 %v1383
    %v1407 = vpack.c.b16 %v1400, %v1399
    %v1408 = vpack.c.b16 %v1402, %v1401
    %v1409 = vpack.c.b16 %v1404, %v1403
    %v1410 = vpack.c.b16 %v1406, %v1405
    %v1416 = vsel %vm1062, %v1368, 0
    %v1419 = vsel %vm1062, %v1369, 0
    %v1422 = vsel %vm1062, %v1370, 0
    %v1425 = vsel %vm1062, %v1371, 0
    %v1428 = vsel %vm1062, %v1372, 0
    %v1431 = vsel %vm1062, %v1373, 0
    %v1434 = vsel %vm1062, %v1374, 0
    %v1437 = vsel %vm1062, %v1375, 0
    %1439 = vmatprep.subr.bf16.mxu0 0
    %1440 = vmatpush1.bf16.msra.mxu0 %v1407
    %1441 = vmatprep.subr.bf16.mxu0 0
    %1442 = vmatpush1.bf16.msra.mxu0 %v1408
    %1443 = vmatprep.subr.bf16.mxu0 0
    %1444 = vmatpush1.bf16.msra.mxu0 %v1409
    %1445 = vmatprep.subr.bf16.mxu0 0
    %1446 = vmatpush1.bf16.msra.mxu0 %v1410
    %1447 = vmatprep.subr.bf16.mxu0 0
    %1448 = vmatpush1.bf16.msra.mxu0 0
    %1449 = vmatprep.subr.bf16.mxu0 0
    %1450 = vmatpush1.bf16.msra.mxu0 0
    %1451 = vmatprep.subr.bf16.mxu0 0
    %1452 = vmatpush1.bf16.msra.mxu0 0
    %1453 = vmatprep.subr.bf16.mxu0 0
    %1454 = vmatpush1.bf16.msra.mxu0 0
    %1455 = vmatprep.subr.bf16.mxu0 0
    %1456 = vmatpush1.bf16.msra.mxu0 0
    %1457 = vmatprep.subr.bf16.mxu0 0
    %1458 = vmatpush1.bf16.msra.mxu0 0
    %1459 = vmatprep.subr.bf16.mxu0 0
    %1460 = vmatpush1.bf16.msra.mxu0 0
    %1461 = vmatprep.subr.bf16.mxu0 0
    %1462 = vmatpush1.bf16.msra.mxu0 0
    %1463 = vmatprep.subr.bf16.mxu0 0
    %1464 = vmatpush1.bf16.msra.mxu0 0
    %1465 = vmatprep.subr.bf16.mxu0 0
    %1466 = vmatpush1.bf16.msra.mxu0 0
    %1467 = vmatprep.subr.bf16.mxu0 0
    %1468 = vmatpush1.bf16.msra.mxu0 0
    %1469 = vmatprep.subr.bf16.mxu0 0
    %1470 = vmatpush1.bf16.msra.mxu0 0
    %1471 = vmatprep.mubr.bf16.mxu0 0
    %1472 = vmatmul.mubr.bf16.gmra.mrb[0].mxu0 %v1416
    %v1473 = vpop.f32.mrb[0].mxu0
    %v1474 = vadd.f32 %v1389, %v1473
    %v1475 = vpop.f32.mrb[0].mxu0
    %v1476 = vpop.f32.mrb[0].mxu0
    %v1477 = vadd.f32 %v1389, %v1476
    %v1478 = vpop.f32.mrb[0].mxu0
    %1479 = vmatprep.mubr.bf16.mxu0 0
    %1480 = vmatmul.mubr.bf16.gmra.mrb[0].mxu0 %v1419
    %v1481 = vpop.f32.mrb[0].mxu0
    %v1482 = vadd.f32 %v1389, %v1481
    %v1483 = vpop.f32.mrb[0].mxu0
    %v1484 = vpop.f32.mrb[0].mxu0
    %v1485 = vadd.f32 %v1389, %v1484
    %v1486 = vpop.f32.mrb[0].mxu0
    %1487 = vmatprep.mubr.bf16.mxu0 0
    %1488 = vmatmul.mubr.bf16.gmra.mrb[0].mxu0 %v1422
    %v1489 = vpop.f32.mrb[0].mxu0
    %v1490 = vadd.f32 %v1389, %v1489
    %v1491 = vpop.f32.mrb[0].mxu0
    %v1492 = vpop.f32.mrb[0].mxu0
    %v1493 = vadd.f32 %v1389, %v1492
    %v1494 = vpop.f32.mrb[0].mxu0
    %1495 = vmatprep.mubr.bf16.mxu0 0
    %1496 = vmatmul.mubr.bf16.gmra.mrb[0].mxu0 %v1425
    %v1497 = vpop.f32.mrb[0].mxu0
    %v1498 = vadd.f32 %v1389, %v1497
    %v1499 = vpop.f32.mrb[0].mxu0
    %v1500 = vpop.f32.mrb[0].mxu0
    %v1501 = vadd.f32 %v1389, %v1500
    %v1502 = vpop.f32.mrb[0].mxu0
    %1503 = vmatprep.mubr.bf16.mxu0 0
    %1504 = vmatmul.mubr.bf16.gmra.mrb[0].mxu0 %v1428
    %v1505 = vpop.f32.mrb[0].mxu0
    %v1506 = vadd.f32 %v1389, %v1505
    %v1507 = vpop.f32.mrb[0].mxu0
    %v1508 = vpop.f32.mrb[0].mxu0
    %v1509 = vadd.f32 %v1389, %v1508
    %v1510 = vpop.f32.mrb[0].mxu0
    %1511 = vmatprep.mubr.bf16.mxu0 0
    %1512 = vmatmul.mubr.bf16.gmra.mrb[0].mxu0 %v1431
    %v1513 = vpop.f32.mrb[0].mxu0
    %v1514 = vadd.f32 %v1389, %v1513
    %v1515 = vpop.f32.mrb[0].mxu0
    %v1516 = vpop.f32.mrb[0].mxu0
    %v1517 = vadd.f32 %v1389, %v1516
    %v1518 = vpop.f32.mrb[0].mxu0
    %1519 = vmatprep.mubr.bf16.mxu0 0
    %1520 = vmatmul.mubr.bf16.gmra.mrb[0].mxu0 %v1434
    %v1521 = vpop.f32.mrb[0].mxu0
    %v1522 = vadd.f32 %v1389, %v1521
    %v1523 = vpop.f32.mrb[0].mxu0
    %v1524 = vpop.f32.mrb[0].mxu0
    %v1525 = vadd.f32 %v1389, %v1524
    %v1526 = vpop.f32.mrb[0].mxu0
    %1527 = vmatprep.mubr.bf16.mxu0 0
    %1528 = vmatmul.mubr.bf16.gmra.mrb[0].mxu0 %v1437
    %v1529 = vpop.f32.mrb[0].mxu0
    %v1530 = vadd.f32 %v1389, %v1529
    %v1531 = vpop.f32.mrb[0].mxu0
    %v1532 = vpop.f32.mrb[0].mxu0
    %v1533 = vadd.f32 %v1389, %v1532
    %v1534 = vpop.f32.mrb[0].mxu0
    %1535 = vdwg.mxu0
    %v1536 = vld [vmem:[#allocation17] sm:$0xff]
    %v1537 = vld [vmem:[#allocation17 + $0x8] sm:$0xff]
    %v1538 = vld [vmem:[#allocation17 + $0x10] sm:$0xff]
    %v1539 = vld [vmem:[#allocation17 + $0x18] sm:$0xff]
    %v1540 = vld [vmem:[#allocation17 + $0x20] sm:$0xff]
    %v1541 = vld [vmem:[#allocation17 + $0x28] sm:$0xff]
    %v1542 = vld [vmem:[#allocation17 + $0x30] sm:$0xff]
    %v1543 = vld [vmem:[#allocation17 + $0x38] sm:$0xff]
    %v1544 = vld [vmem:[#allocation17 + $0x40] sm:$0xff]
    %v1545 = vld [vmem:[#allocation17 + $0x48] sm:$0xff]
    %v1546 = vld [vmem:[#allocation17 + $0x50] sm:$0xff]
    %v1547 = vld [vmem:[#allocation17 + $0x58] sm:$0xff]
    %v1548 = vld [vmem:[#allocation17 + $0x60] sm:$0xff]
    %v1549 = vld [vmem:[#allocation17 + $0x68] sm:$0xff]
    %v1550 = vld [vmem:[#allocation17 + $0x70] sm:$0xff]
    %v1551 = vld [vmem:[#allocation17 + $0x78] sm:$0xff]
    %v1552 = vld [vmem:[#allocation19] sm:$0x3]
    %v1554 = vlaneseq
    %v1555 = vshrl.u32 %v1554, 7
    %v1556 = vsub.s32 0, %v1555
    %v1557 = vrot.slane %v1552, %v1556
    %v1558 = vlaneseq
    %v1559 = vshrl.u32 %v1558, 7
    %v1560 = vsub.s32 1, %v1559
    %v1561 = vrot.slane %v1552, %v1560
    %v1580 = vunpack.c.l.b16 %v1536
    %v1581 = vunpack.c.h.b16 %v1536
    %v1582 = vunpack.c.l.b16 %v1537
    %v1583 = vunpack.c.h.b16 %v1537
    %v1584 = vunpack.c.l.b16 %v1538
    %v1585 = vunpack.c.h.b16 %v1538
    %v1586 = vunpack.c.l.b16 %v1539
    %v1587 = vunpack.c.h.b16 %v1539
    %v1588 = vunpack.c.l.b16 %v1540
    %v1589 = vunpack.c.h.b16 %v1540
    %v1590 = vunpack.c.l.b16 %v1541
    %v1591 = vunpack.c.h.b16 %v1541
    %v1592 = vunpack.c.l.b16 %v1542
    %v1593 = vunpack.c.h.b16 %v1542
    %v1594 = vunpack.c.l.b16 %v1543
    %v1595 = vunpack.c.h.b16 %v1543
    %v1596 = vunpack.c.l.b16 %v1544
    %v1597 = vunpack.c.h.b16 %v1544
    %v1598 = vunpack.c.l.b16 %v1545
    %v1599 = vunpack.c.h.b16 %v1545
    %v1600 = vunpack.c.l.b16 %v1546
    %v1601 = vunpack.c.h.b16 %v1546
    %v1602 = vunpack.c.l.b16 %v1547
    %v1603 = vunpack.c.h.b16 %v1547
    %v1604 = vunpack.c.l.b16 %v1548
    %v1605 = vunpack.c.h.b16 %v1548
    %v1606 = vunpack.c.l.b16 %v1549
    %v1607 = vunpack.c.h.b16 %v1549
    %v1608 = vunpack.c.l.b16 %v1550
    %v1609 = vunpack.c.h.b16 %v1550
    %v1610 = vunpack.c.l.b16 %v1551
    %v1611 = vunpack.c.h.b16 %v1551
    %v1612 = vpack.c.b16 %v1582, %v1580
    %v1613 = vpack.c.b16 %v1583, %v1581
    %v1614 = vpack.c.b16 %v1586, %v1584
    %v1615 = vpack.c.b16 %v1587, %v1585
    %v1616 = vpack.c.b16 %v1590, %v1588
    %v1617 = vpack.c.b16 %v1591, %v1589
    %v1618 = vpack.c.b16 %v1594, %v1592
    %v1619 = vpack.c.b16 %v1595, %v1593
    %v1620 = vpack.c.b16 %v1598, %v1596
    %v1621 = vpack.c.b16 %v1599, %v1597
    %v1622 = vpack.c.b16 %v1602, %v1600
    %v1623 = vpack.c.b16 %v1603, %v1601
    %v1624 = vpack.c.b16 %v1606, %v1604
    %v1625 = vpack.c.b16 %v1607, %v1605
    %v1626 = vpack.c.b16 %v1610, %v1608
    %v1627 = vpack.c.b16 %v1611, %v1609
    %1644 = vmatprep.subr.bf16.mxu0 %v1613
    %1645 = vmatpush1.bf16.msra.mxu0 %v1612
    %1646 = vmatprep.subr.bf16.mxu0 %v1615
    %1647 = vmatpush1.bf16.msra.mxu0 %v1614
    %1648 = vmatprep.subr.bf16.mxu0 %v1617
    %1649 = vmatpush1.bf16.msra.mxu0 %v1616
    %1650 = vmatprep.subr.bf16.mxu0 %v1619
    %1651 = vmatpush1.bf16.msra.mxu0 %v1618
    %1652 = vmatprep.subr.bf16.mxu0 %v1621
    %1653 = vmatpush1.bf16.msra.mxu0 %v1620
    %1654 = vmatprep.subr.bf16.mxu0 %v1623
    %1655 = vmatpush1.bf16.msra.mxu0 %v1622
    %1656 = vmatprep.subr.bf16.mxu0 %v1625
    %1657 = vmatpush1.bf16.msra.mxu0 %v1624
    %1658 = vmatprep.subr.bf16.mxu0 %v1627
    %1659 = vmatpush1.bf16.msra.mxu0 %v1626
    %1660 = vmatprep.subr.bf16.mxu0 0
    %1661 = vmatpush1.bf16.msra.mxu0 0
    %1662 = vmatprep.subr.bf16.mxu0 0
    %1663 = vmatpush1.bf16.msra.mxu0 0
    %1664 = vmatprep.subr.bf16.mxu0 0
    %1665 = vmatpush1.bf16.msra.mxu0 0
    %1666 = vmatprep.subr.bf16.mxu0 0
    %1667 = vmatpush1.bf16.msra.mxu0 0
    %1668 = vmatprep.subr.bf16.mxu0 0
    %1669 = vmatpush1.bf16.msra.mxu0 0
    %1670 = vmatprep.subr.bf16.mxu0 0
    %1671 = vmatpush1.bf16.msra.mxu0 0
    %1672 = vmatprep.subr.bf16.mxu0 0
    %1673 = vmatpush1.bf16.msra.mxu0 0
    %1674 = vmatprep.subr.bf16.mxu0 0
    %1675 = vmatpush1.bf16.msra.mxu0 0
    %1676 = vmatprep.mubr.bf16.mxu0 0
    %1677 = vmatmul.mubr.bf16.gmra.mrb[0].mxu0 %v759
    %v1678 = vpop.f32.mrb[0].mxu0
    %v1679 = vadd.f32 %v1557, %v1678
    %v1680 = vpop.f32.mrb[0].mxu0
    %v1681 = vadd.f32 %v1561, %v1680
    %v1682 = vpop.f32.mrb[0].mxu0
    %v1683 = vadd.f32 %v1557, %v1682
    %v1684 = vpop.f32.mrb[0].mxu0
    %v1685 = vadd.f32 %v1561, %v1684
    %1686 = vmatprep.mubr.bf16.mxu0 0
    %1687 = vmatmul.mubr.bf16.gmra.mrb[0].mxu0 %v760
    %v1688 = vpop.f32.mrb[0].mxu0
    %v1689 = vadd.f32 %v1557, %v1688
    %v1690 = vpop.f32.mrb[0].mxu0
    %v1691 = vadd.f32 %v1561, %v1690
    %v1692 = vpop.f32.mrb[0].mxu0
    %v1693 = vadd.f32 %v1557, %v1692
    %v1694 = vpop.f32.mrb[0].mxu0
    %v1695 = vadd.f32 %v1561, %v1694
    %1696 = vmatprep.mubr.bf16.mxu0 0
    %1697 = vmatmul.mubr.bf16.gmra.mrb[0].mxu0 %v761
    %v1698 = vpop.f32.mrb[0].mxu0
    %v1699 = vadd.f32 %v1557, %v1698
    %v1700 = vpop.f32.mrb[0].mxu0
    %v1701 = vadd.f32 %v1561, %v1700
    %v1702 = vpop.f32.mrb[0].mxu0
    %v1703 = vadd.f32 %v1557, %v1702
    %v1704 = vpop.f32.mrb[0].mxu0
    %v1705 = vadd.f32 %v1561, %v1704
    %1706 = vmatprep.mubr.bf16.mxu0 0
    %1707 = vmatmul.mubr.bf16.gmra.mrb[0].mxu0 %v762
    %v1708 = vpop.f32.mrb[0].mxu0
    %v1709 = vadd.f32 %v1557, %v1708
    %v1710 = vpop.f32.mrb[0].mxu0
    %v1711 = vadd.f32 %v1561, %v1710
    %v1712 = vpop.f32.mrb[0].mxu0
    %v1713 = vadd.f32 %v1557, %v1712
    %v1714 = vpop.f32.mrb[0].mxu0
    %v1715 = vadd.f32 %v1561, %v1714
    %1716 = vmatprep.mubr.bf16.mxu0 0
    %1717 = vmatmul.mubr.bf16.gmra.mrb[0].mxu0 %v763
    %v1718 = vpop.f32.mrb[0].mxu0
    %v1719 = vadd.f32 %v1557, %v1718
    %v1720 = vpop.f32.mrb[0].mxu0
    %v1721 = vadd.f32 %v1561, %v1720
    %v1722 = vpop.f32.mrb[0].mxu0
    %v1723 = vadd.f32 %v1557, %v1722
    %v1724 = vpop.f32.mrb[0].mxu0
    %v1725 = vadd.f32 %v1561, %v1724
    %1726 = vmatprep.mubr.bf16.mxu0 0
    %1727 = vmatmul.mubr.bf16.gmra.mrb[0].mxu0 %v764
    %v1728 = vpop.f32.mrb[0].mxu0
    %v1729 = vadd.f32 %v1557, %v1728
    %v1730 = vpop.f32.mrb[0].mxu0
    %v1731 = vadd.f32 %v1561, %v1730
    %v1732 = vpop.f32.mrb[0].mxu0
    %v1733 = vadd.f32 %v1557, %v1732
    %v1734 = vpop.f32.mrb[0].mxu0
    %v1735 = vadd.f32 %v1561, %v1734
    %1736 = vmatprep.mubr.bf16.mxu0 0
    %1737 = vmatmul.mubr.bf16.gmra.mrb[0].mxu0 %v765
    %v1738 = vpop.f32.mrb[0].mxu0
    %v1739 = vadd.f32 %v1557, %v1738
    %v1740 = vpop.f32.mrb[0].mxu0
    %v1741 = vadd.f32 %v1561, %v1740
    %v1742 = vpop.f32.mrb[0].mxu0
    %v1743 = vadd.f32 %v1557, %v1742
    %v1744 = vpop.f32.mrb[0].mxu0
    %v1745 = vadd.f32 %v1561, %v1744
    %1746 = vmatprep.mubr.bf16.mxu0 0
    %1747 = vmatmul.mubr.bf16.gmra.mrb[0].mxu0 %v766
    %v1748 = vpop.f32.mrb[0].mxu0
    %v1749 = vadd.f32 %v1557, %v1748
    %v1750 = vpop.f32.mrb[0].mxu0
    %v1751 = vadd.f32 %v1561, %v1750
    %v1752 = vpop.f32.mrb[0].mxu0
    %v1753 = vadd.f32 %v1557, %v1752
    %v1754 = vpop.f32.mrb[0].mxu0
    %v1755 = vadd.f32 %v1561, %v1754
    %1756 = vmatprep.mubr.bf16.mxu0 0
    %1757 = vmatmul.mubr.bf16.gmra.mrb[0].mxu0 %v751
    %v1758 = vpop.f32.mrb[0].mxu0
    %v1759 = vadd.f32 %v1557, %v1758
    %v1760 = vpop.f32.mrb[0].mxu0
    %v1761 = vadd.f32 %v1561, %v1760
    %v1762 = vpop.f32.mrb[0].mxu0
    %v1763 = vadd.f32 %v1557, %v1762
    %v1764 = vpop.f32.mrb[0].mxu0
    %v1765 = vadd.f32 %v1561, %v1764
    %1766 = vmatprep.mubr.bf16.mxu0 0
    %1767 = vmatmul.mubr.bf16.gmra.mrb[0].mxu0 %v752
    %v1768 = vpop.f32.mrb[0].mxu0
    %v1769 = vadd.f32 %v1557, %v1768
    %v1770 = vpop.f32.mrb[0].mxu0
    %v1771 = vadd.f32 %v1561, %v1770
    %v1772 = vpop.f32.mrb[0].mxu0
    %v1773 = vadd.f32 %v1557, %v1772
    %v1774 = vpop.f32.mrb[0].mxu0
    %v1775 = vadd.f32 %v1561, %v1774
    %1776 = vmatprep.mubr.bf16.mxu0 0
    %1777 = vmatmul.mubr.bf16.gmra.mrb[0].mxu0 %v753
    %v1778 = vpop.f32.mrb[0].mxu0
    %v1779 = vadd.f32 %v1557, %v1778
    %v1780 = vpop.f32.mrb[0].mxu0
    %v1781 = vadd.f32 %v1561, %v1780
    %v1782 = vpop.f32.mrb[0].mxu0
    %v1783 = vadd.f32 %v1557, %v1782
    %v1784 = vpop.f32.mrb[0].mxu0
    %v1785 = vadd.f32 %v1561, %v1784
    %1786 = vmatprep.mubr.bf16.mxu0 0
    %1787 = vmatmul.mubr.bf16.gmra.mrb[0].mxu0 %v754
    %v1788 = vpop.f32.mrb[0].mxu0
    %v1789 = vadd.f32 %v1557, %v1788
    %v1790 = vpop.f32.mrb[0].mxu0
    %v1791 = vadd.f32 %v1561, %v1790
    %v1792 = vpop.f32.mrb[0].mxu0
    %v1793 = vadd.f32 %v1557, %v1792
    %v1794 = vpop.f32.mrb[0].mxu0
    %v1795 = vadd.f32 %v1561, %v1794
    %1796 = vmatprep.mubr.bf16.mxu0 0
    %1797 = vmatmul.mubr.bf16.gmra.mrb[0].mxu0 %v755
    %v1798 = vpop.f32.mrb[0].mxu0
    %v1799 = vadd.f32 %v1557, %v1798
    %v1800 = vpop.f32.mrb[0].mxu0
    %v1801 = vadd.f32 %v1561, %v1800
    %v1802 = vpop.f32.mrb[0].mxu0
    %v1803 = vadd.f32 %v1557, %v1802
    %v1804 = vpop.f32.mrb[0].mxu0
    %v1805 = vadd.f32 %v1561, %v1804
    %1806 = vmatprep.mubr.bf16.mxu0 0
    %1807 = vmatmul.mubr.bf16.gmra.mrb[0].mxu0 %v756
    %v1808 = vpop.f32.mrb[0].mxu0
    %v1809 = vadd.f32 %v1557, %v1808
    %v1810 = vpop.f32.mrb[0].mxu0
    %v1811 = vadd.f32 %v1561, %v1810
    %v1812 = vpop.f32.mrb[0].mxu0
    %v1813 = vadd.f32 %v1557, %v1812
    %v1814 = vpop.f32.mrb[0].mxu0
    %v1815 = vadd.f32 %v1561, %v1814
    %1816 = vmatprep.mubr.bf16.mxu0 0
    %1817 = vmatmul.mubr.bf16.gmra.mrb[0].mxu0 %v757
    %v1818 = vpop.f32.mrb[0].mxu0
    %v1819 = vadd.f32 %v1557, %v1818
    %v1820 = vpop.f32.mrb[0].mxu0
    %v1821 = vadd.f32 %v1561, %v1820
    %v1822 = vpop.f32.mrb[0].mxu0
    %v1823 = vadd.f32 %v1557, %v1822
    %v1824 = vpop.f32.mrb[0].mxu0
    %v1825 = vadd.f32 %v1561, %v1824
    %1826 = vmatprep.mubr.bf16.mxu0 0
    %1827 = vmatmul.mubr.bf16.gmra.mrb[0].mxu0 %v758
    %v1828 = vpop.f32.mrb[0].mxu0
    %v1829 = vadd.f32 %v1557, %v1828
    %v1830 = vpop.f32.mrb[0].mxu0
    %v1831 = vadd.f32 %v1561, %v1830
    %v1832 = vpop.f32.mrb[0].mxu0
    %v1833 = vadd.f32 %v1557, %v1832
    %v1834 = vpop.f32.mrb[0].mxu0
    %v1835 = vadd.f32 %v1561, %v1834
    %1836 = vdwg.mxu0
    %v1837 = vmax.f32 %v1679, 0.0
    %v1838 = vmax.f32 %v1681, 0.0
    %v1839 = vmax.f32 %v1683, 0.0
    %v1840 = vmax.f32 %v1685, 0.0
    %v1841 = vmax.f32 %v1689, 0.0
    %v1842 = vmax.f32 %v1691, 0.0
    %v1843 = vmax.f32 %v1693, 0.0
    %v1844 = vmax.f32 %v1695, 0.0
    %v1845 = vmax.f32 %v1699, 0.0
    %v1846 = vmax.f32 %v1701, 0.0
    %v1847 = vmax.f32 %v1703, 0.0
    %v1848 = vmax.f32 %v1705, 0.0
    %v1849 = vmax.f32 %v1709, 0.0
    %v1850 = vmax.f32 %v1711, 0.0
    %v1851 = vmax.f32 %v1713, 0.0
    %v1852 = vmax.f32 %v1715, 0.0
    %v1853 = vmax.f32 %v1719, 0.0
    %v1854 = vmax.f32 %v1721, 0.0
    %v1855 = vmax.f32 %v1723, 0.0
    %v1856 = vmax.f32 %v1725, 0.0
    %v1857 = vmax.f32 %v1729, 0.0
    %v1858 = vmax.f32 %v1731, 0.0
    %v1859 = vmax.f32 %v1733, 0.0
    %v1860 = vmax.f32 %v1735, 0.0
    %v1861 = vmax.f32 %v1739, 0.0
    %v1862 = vmax.f32 %v1741, 0.0
    %v1863 = vmax.f32 %v1743, 0.0
    %v1864 = vmax.f32 %v1745, 0.0
    %v1865 = vmax.f32 %v1749, 0.0
    %v1866 = vmax.f32 %v1751, 0.0
    %v1867 = vmax.f32 %v1753, 0.0
    %v1868 = vmax.f32 %v1755, 0.0
    %v1869 = vmax.f32 %v1759, 0.0
    %v1870 = vmax.f32 %v1761, 0.0
    %v1871 = vmax.f32 %v1763, 0.0
    %v1872 = vmax.f32 %v1765, 0.0
    %v1873 = vmax.f32 %v1769, 0.0
    %v1874 = vmax.f32 %v1771, 0.0
    %v1875 = vmax.f32 %v1773, 0.0
    %v1876 = vmax.f32 %v1775, 0.0
    %v1877 = vmax.f32 %v1779, 0.0
    %v1878 = vmax.f32 %v1781, 0.0
    %v1879 = vmax.f32 %v1783, 0.0
    %v1880 = vmax.f32 %v1785, 0.0
    %v1881 = vmax.f32 %v1789, 0.0
    %v1882 = vmax.f32 %v1791, 0.0
    %v1883 = vmax.f32 %v1793, 0.0
    %v1884 = vmax.f32 %v1795, 0.0
    %v1885 = vmax.f32 %v1799, 0.0
    %v1886 = vmax.f32 %v1801, 0.0
    %v1887 = vmax.f32 %v1803, 0.0
    %v1888 = vmax.f32 %v1805, 0.0
    %v1889 = vmax.f32 %v1809, 0.0
    %v1890 = vmax.f32 %v1811, 0.0
    %v1891 = vmax.f32 %v1813, 0.0
    %v1892 = vmax.f32 %v1815, 0.0
    %v1893 = vmax.f32 %v1819, 0.0
    %v1894 = vmax.f32 %v1821, 0.0
    %v1895 = vmax.f32 %v1823, 0.0
    %v1896 = vmax.f32 %v1825, 0.0
    %v1897 = vmax.f32 %v1829, 0.0
    %v1898 = vmax.f32 %v1831, 0.0
    %v1899 = vmax.f32 %v1833, 0.0
    %v1900 = vmax.f32 %v1835, 0.0
    %v1901 = vpack.c.bf16 %v1839, %v1837
    %v1902 = vpack.c.bf16 %v1840, %v1838
    %v1903 = vpack.c.bf16 %v1843, %v1841
    %v1904 = vpack.c.bf16 %v1844, %v1842
    %v1905 = vpack.c.bf16 %v1847, %v1845
    %v1906 = vpack.c.bf16 %v1848, %v1846
    %v1907 = vpack.c.bf16 %v1851, %v1849
    %v1908 = vpack.c.bf16 %v1852, %v1850
    %v1909 = vpack.c.bf16 %v1855, %v1853
    %v1910 = vpack.c.bf16 %v1856, %v1854
    %v1911 = vpack.c.bf16 %v1859, %v1857
    %v1912 = vpack.c.bf16 %v1860, %v1858
    %v1913 = vpack.c.bf16 %v1863, %v1861
    %v1914 = vpack.c.bf16 %v1864, %v1862
    %v1915 = vpack.c.bf16 %v1867, %v1865
    %v1916 = vpack.c.bf16 %v1868, %v1866
    %v1917 = vpack.c.bf16 %v1871, %v1869
    %v1918 = vpack.c.bf16 %v1872, %v1870
    %v1919 = vpack.c.bf16 %v1875, %v1873
    %v1920 = vpack.c.bf16 %v1876, %v1874
    %v1921 = vpack.c.bf16 %v1879, %v1877
    %v1922 = vpack.c.bf16 %v1880, %v1878
    %v1923 = vpack.c.bf16 %v1883, %v1881
    %v1924 = vpack.c.bf16 %v1884, %v1882
    %v1925 = vpack.c.bf16 %v1887, %v1885
    %v1926 = vpack.c.bf16 %v1888, %v1886
    %v1927 = vpack.c.bf16 %v1891, %v1889
    %v1928 = vpack.c.bf16 %v1892, %v1890
    %v1929 = vpack.c.bf16 %v1895, %v1893
    %v1930 = vpack.c.bf16 %v1896, %v1894
    %v1931 = vpack.c.bf16 %v1899, %v1897
    %v1932 = vpack.c.bf16 %v1900, %v1898
    %v1933 = vld [vmem:[#allocation20] sm:$0xf]
    %v1934 = vld [vmem:[#allocation20 + $0x4] sm:$0xf]
    %v1935 = vld [vmem:[#allocation20 + $0x8] sm:$0xf]
    %v1936 = vld [vmem:[#allocation20 + $0xc] sm:$0xf]
    %v1937 = vld [vmem:[#allocation20 + $0x10] sm:$0xf]
    %v1938 = vld [vmem:[#allocation20 + $0x14] sm:$0xf]
    %v1939 = vld [vmem:[#allocation20 + $0x18] sm:$0xf]
    %v1940 = vld [vmem:[#allocation20 + $0x1c] sm:$0xf]
    %v1941 = vld [vmem:[#allocation20 + $0x20] sm:$0xf]
    %v1942 = vld [vmem:[#allocation20 + $0x24] sm:$0xf]
    %v1943 = vld [vmem:[#allocation20 + $0x28] sm:$0xf]
    %v1944 = vld [vmem:[#allocation20 + $0x2c] sm:$0xf]
    %v1945 = vld [vmem:[#allocation20 + $0x30] sm:$0xf]
    %v1946 = vld [vmem:[#allocation20 + $0x34] sm:$0xf]
    %v1947 = vld [vmem:[#allocation20 + $0x38] sm:$0xf]
    %v1948 = vld [vmem:[#allocation20 + $0x3c] sm:$0xf]
    %v1949 = vld [vmem:[#allocation20 + $0x40] sm:$0xf]
    %v1950 = vld [vmem:[#allocation20 + $0x44] sm:$0xf]
    %v1951 = vld [vmem:[#allocation20 + $0x48] sm:$0xf]
    %v1952 = vld [vmem:[#allocation20 + $0x4c] sm:$0xf]
    %v1953 = vld [vmem:[#allocation20 + $0x50] sm:$0xf]
    %v1954 = vld [vmem:[#allocation20 + $0x54] sm:$0xf]
    %v1955 = vld [vmem:[#allocation20 + $0x58] sm:$0xf]
    %v1956 = vld [vmem:[#allocation20 + $0x5c] sm:$0xf]
    %v1957 = vld [vmem:[#allocation20 + $0x60] sm:$0xf]
    %v1958 = vld [vmem:[#allocation20 + $0x64] sm:$0xf]
    %v1959 = vld [vmem:[#allocation20 + $0x68] sm:$0xf]
    %v1960 = vld [vmem:[#allocation20 + $0x6c] sm:$0xf]
    %v1961 = vld [vmem:[#allocation20 + $0x70] sm:$0xf]
    %v1962 = vld [vmem:[#allocation20 + $0x74] sm:$0xf]
    %v1963 = vld [vmem:[#allocation20 + $0x78] sm:$0xf]
    %v1964 = vld [vmem:[#allocation20 + $0x7c] sm:$0xf]
    %v1965 = vld [vmem:[#allocation22] sm:$0x1]
    %v1967 = vlaneseq
    %v1968 = vshrl.u32 %v1967, 7
    %v1969 = vsub.s32 0, %v1968
    %v1970 = vrot.slane %v1965, %v1969
    %v2004 = vunpack.c.l.b16 %v1933
    %v2005 = vunpack.c.l.b16 %v1934
    %v2006 = vunpack.c.l.b16 %v1935
    %v2007 = vunpack.c.l.b16 %v1936
    %v2008 = vunpack.c.l.b16 %v1937
    %v2009 = vunpack.c.l.b16 %v1938
    %v2010 = vunpack.c.l.b16 %v1939
    %v2011 = vunpack.c.l.b16 %v1940
    %v2012 = vunpack.c.l.b16 %v1941
    %v2013 = vunpack.c.l.b16 %v1942
    %v2014 = vunpack.c.l.b16 %v1943
    %v2015 = vunpack.c.l.b16 %v1944
    %v2016 = vunpack.c.l.b16 %v1945
    %v2017 = vunpack.c.l.b16 %v1946
    %v2018 = vunpack.c.l.b16 %v1947
    %v2019 = vunpack.c.l.b16 %v1948
    %v2020 = vunpack.c.l.b16 %v1949
    %v2021 = vunpack.c.l.b16 %v1950
    %v2022 = vunpack.c.l.b16 %v1951
    %v2023 = vunpack.c.l.b16 %v1952
    %v2024 = vunpack.c.l.b16 %v1953
    %v2025 = vunpack.c.l.b16 %v1954
    %v2026 = vunpack.c.l.b16 %v1955
    %v2027 = vunpack.c.l.b16 %v1956
    %v2028 = vunpack.c.l.b16 %v1957
    %v2029 = vunpack.c.l.b16 %v1958
    %v2030 = vunpack.c.l.b16 %v1959
    %v2031 = vunpack.c.l.b16 %v1960
    %v2032 = vunpack.c.l.b16 %v1961
    %v2033 = vunpack.c.l.b16 %v1962
    %v2034 = vunpack.c.l.b16 %v1963
    %v2035 = vunpack.c.l.b16 %v1964
    %v2036 = vpack.c.b16 %v2005, %v2004
    %v2037 = vpack.c.b16 %v2007, %v2006
    %v2038 = vpack.c.b16 %v2009, %v2008
    %v2039 = vpack.c.b16 %v2011, %v2010
    %v2040 = vpack.c.b16 %v2013, %v2012
    %v2041 = vpack.c.b16 %v2015, %v2014
    %v2042 = vpack.c.b16 %v2017, %v2016
    %v2043 = vpack.c.b16 %v2019, %v2018
    %v2044 = vpack.c.b16 %v2021, %v2020
    %v2045 = vpack.c.b16 %v2023, %v2022
    %v2046 = vpack.c.b16 %v2025, %v2024
    %v2047 = vpack.c.b16 %v2027, %v2026
    %v2048 = vpack.c.b16 %v2029, %v2028
    %v2049 = vpack.c.b16 %v2031, %v2030
    %v2050 = vpack.c.b16 %v2033, %v2032
    %v2051 = vpack.c.b16 %v2035, %v2034
    %2068 = vmatprep.subr.bf16.mxu0 0
    %2069 = vmatpush1.bf16.msra.mxu0 %v2036
    %2070 = vmatprep.subr.bf16.mxu0 0
    %2071 = vmatpush1.bf16.msra.mxu0 %v2037
    %2072 = vmatprep.subr.bf16.mxu0 0
    %2073 = vmatpush1.bf16.msra.mxu0 %v2038
    %2074 = vmatprep.subr.bf16.mxu0 0
    %2075 = vmatpush1.bf16.msra.mxu0 %v2039
    %2076 = vmatprep.subr.bf16.mxu0 0
    %2077 = vmatpush1.bf16.msra.mxu0 %v2040
    %2078 = vmatprep.subr.bf16.mxu0 0
    %2079 = vmatpush1.bf16.msra.mxu0 %v2041
    %2080 = vmatprep.subr.bf16.mxu0 0
    %2081 = vmatpush1.bf16.msra.mxu0 %v2042
    %2082 = vmatprep.subr.bf16.mxu0 0
    %2083 = vmatpush1.bf16.msra.mxu0 %v2043
    %2084 = vmatprep.subr.bf16.mxu0 0
    %2085 = vmatpush1.bf16.msra.mxu0 %v2044
    %2086 = vmatprep.subr.bf16.mxu0 0
    %2087 = vmatpush1.bf16.msra.mxu0 %v2045
    %2088 = vmatprep.subr.bf16.mxu0 0
    %2089 = vmatpush1.bf16.msra.mxu0 %v2046
    %2090 = vmatprep.subr.bf16.mxu0 0
    %2091 = vmatpush1.bf16.msra.mxu0 %v2047
    %2092 = vmatprep.subr.bf16.mxu0 0
    %2093 = vmatpush1.bf16.msra.mxu0 %v2048
    %2094 = vmatprep.subr.bf16.mxu0 0
    %2095 = vmatpush1.bf16.msra.mxu0 %v2049
    %2096 = vmatprep.subr.bf16.mxu0 0
    %2097 = vmatpush1.bf16.msra.mxu0 %v2050
    %2098 = vmatprep.subr.bf16.mxu0 0
    %2099 = vmatpush1.bf16.msra.mxu0 %v2051
    %2100 = vmatprep.mubr.bf16.mxu0 %v1902
    %2101 = vmatmul.mubr.bf16.gmra.mrb[0].mxu0 %v1901
    %v2102 = vpop.f32.mrb[0].mxu0
    %v2103 = vadd.f32 %v1970, %v2102
    %v2104 = vpop.f32.mrb[0].mxu0
    %v2105 = vpop.f32.mrb[0].mxu0
    %v2106 = vadd.f32 %v1970, %v2105
    %v2107 = vpop.f32.mrb[0].mxu0
    %2108 = vmatprep.mubr.bf16.mxu0 %v1904
    %2109 = vmatmul.mubr.bf16.gmra.mrb[0].mxu0 %v1903
    %v2110 = vpop.f32.mrb[0].mxu0
    %v2111 = vadd.f32 %v1970, %v2110
    %v2112 = vpop.f32.mrb[0].mxu0
    %v2113 = vpop.f32.mrb[0].mxu0
    %v2114 = vadd.f32 %v1970, %v2113
    %v2115 = vpop.f32.mrb[0].mxu0
    %2116 = vmatprep.mubr.bf16.mxu0 %v1906
    %2117 = vmatmul.mubr.bf16.gmra.mrb[0].mxu0 %v1905
    %v2118 = vpop.f32.mrb[0].mxu0
    %v2119 = vadd.f32 %v1970, %v2118
    %v2120 = vpop.f32.mrb[0].mxu0
    %v2121 = vpop.f32.mrb[0].mxu0
    %v2122 = vadd.f32 %v1970, %v2121
    %v2123 = vpop.f32.mrb[0].mxu0
    %2124 = vmatprep.mubr.bf16.mxu0 %v1908
    %2125 = vmatmul.mubr.bf16.gmra.mrb[0].mxu0 %v1907
    %v2126 = vpop.f32.mrb[0].mxu0
    %v2127 = vadd.f32 %v1970, %v2126
    %v2128 = vpop.f32.mrb[0].mxu0
    %v2129 = vpop.f32.mrb[0].mxu0
    %v2130 = vadd.f32 %v1970, %v2129
    %v2131 = vpop.f32.mrb[0].mxu0
    %2132 = vmatprep.mubr.bf16.mxu0 %v1910
    %2133 = vmatmul.mubr.bf16.gmra.mrb[0].mxu0 %v1909
    %v2134 = vpop.f32.mrb[0].mxu0
    %v2135 = vadd.f32 %v1970, %v2134
    %v2136 = vpop.f32.mrb[0].mxu0
    %v2137 = vpop.f32.mrb[0].mxu0
    %v2138 = vadd.f32 %v1970, %v2137
    %v2139 = vpop.f32.mrb[0].mxu0
    %2140 = vmatprep.mubr.bf16.mxu0 %v1912
    %2141 = vmatmul.mubr.bf16.gmra.mrb[0].mxu0 %v1911
    %v2142 = vpop.f32.mrb[0].mxu0
    %v2143 = vadd.f32 %v1970, %v2142
    %v2144 = vpop.f32.mrb[0].mxu0
    %v2145 = vpop.f32.mrb[0].mxu0
    %v2146 = vadd.f32 %v1970, %v2145
    %v2147 = vpop.f32.mrb[0].mxu0
    %2148 = vmatprep.mubr.bf16.mxu0 %v1914
    %2149 = vmatmul.mubr.bf16.gmra.mrb[0].mxu0 %v1913
    %v2150 = vpop.f32.mrb[0].mxu0
    %v2151 = vadd.f32 %v1970, %v2150
    %v2152 = vpop.f32.mrb[0].mxu0
    %v2153 = vpop.f32.mrb[0].mxu0
    %v2154 = vadd.f32 %v1970, %v2153
    %v2155 = vpop.f32.mrb[0].mxu0
    %2156 = vmatprep.mubr.bf16.mxu0 %v1916
    %2157 = vmatmul.mubr.bf16.gmra.mrb[0].mxu0 %v1915
    %v2158 = vpop.f32.mrb[0].mxu0
    %v2159 = vadd.f32 %v1970, %v2158
    %v2160 = vpop.f32.mrb[0].mxu0
    %v2161 = vpop.f32.mrb[0].mxu0
    %v2162 = vadd.f32 %v1970, %v2161
    %v2163 = vpop.f32.mrb[0].mxu0
    %2164 = vmatprep.mubr.bf16.mxu0 %v1918
    %2165 = vmatmul.mubr.bf16.gmra.mrb[0].mxu0 %v1917
    %v2166 = vpop.f32.mrb[0].mxu0
    %v2167 = vadd.f32 %v1970, %v2166
    %v2168 = vpop.f32.mrb[0].mxu0
    %v2169 = vpop.f32.mrb[0].mxu0
    %v2170 = vadd.f32 %v1970, %v2169
    %v2171 = vpop.f32.mrb[0].mxu0
    %2172 = vmatprep.mubr.bf16.mxu0 %v1920
    %2173 = vmatmul.mubr.bf16.gmra.mrb[0].mxu0 %v1919
    %v2174 = vpop.f32.mrb[0].mxu0
    %v2175 = vadd.f32 %v1970, %v2174
    %v2176 = vpop.f32.mrb[0].mxu0
    %v2177 = vpop.f32.mrb[0].mxu0
    %v2178 = vadd.f32 %v1970, %v2177
    %v2179 = vpop.f32.mrb[0].mxu0
    %2180 = vmatprep.mubr.bf16.mxu0 %v1922
    %2181 = vmatmul.mubr.bf16.gmra.mrb[0].mxu0 %v1921
    %v2182 = vpop.f32.mrb[0].mxu0
    %v2183 = vadd.f32 %v1970, %v2182
    %v2184 = vpop.f32.mrb[0].mxu0
    %v2185 = vpop.f32.mrb[0].mxu0
    %v2186 = vadd.f32 %v1970, %v2185
    %v2187 = vpop.f32.mrb[0].mxu0
    %2188 = vmatprep.mubr.bf16.mxu0 %v1924
    %2189 = vmatmul.mubr.bf16.gmra.mrb[0].mxu0 %v1923
    %v2190 = vpop.f32.mrb[0].mxu0
    %v2191 = vadd.f32 %v1970, %v2190
    %v2192 = vpop.f32.mrb[0].mxu0
    %v2193 = vpop.f32.mrb[0].mxu0
    %v2194 = vadd.f32 %v1970, %v2193
    %v2195 = vpop.f32.mrb[0].mxu0
    %2196 = vmatprep.mubr.bf16.mxu0 %v1926
    %2197 = vmatmul.mubr.bf16.gmra.mrb[0].mxu0 %v1925
    %v2198 = vpop.f32.mrb[0].mxu0
    %v2199 = vadd.f32 %v1970, %v2198
    %v2200 = vpop.f32.mrb[0].mxu0
    %v2201 = vpop.f32.mrb[0].mxu0
    %v2202 = vadd.f32 %v1970, %v2201
    %v2203 = vpop.f32.mrb[0].mxu0
    %2204 = vmatprep.mubr.bf16.mxu0 %v1928
    %2205 = vmatmul.mubr.bf16.gmra.mrb[0].mxu0 %v1927
    %v2206 = vpop.f32.mrb[0].mxu0
    %v2207 = vadd.f32 %v1970, %v2206
    %v2208 = vpop.f32.mrb[0].mxu0
    %v2209 = vpop.f32.mrb[0].mxu0
    %v2210 = vadd.f32 %v1970, %v2209
    %v2211 = vpop.f32.mrb[0].mxu0
    %2212 = vmatprep.mubr.bf16.mxu0 %v1930
    %2213 = vmatmul.mubr.bf16.gmra.mrb[0].mxu0 %v1929
    %v2214 = vpop.f32.mrb[0].mxu0
    %v2215 = vadd.f32 %v1970, %v2214
    %v2216 = vpop.f32.mrb[0].mxu0
    %v2217 = vpop.f32.mrb[0].mxu0
    %v2218 = vadd.f32 %v1970, %v2217
    %v2219 = vpop.f32.mrb[0].mxu0
    %2220 = vmatprep.mubr.bf16.mxu0 %v1932
    %2221 = vmatmul.mubr.bf16.gmra.mrb[0].mxu0 %v1931
    %v2222 = vpop.f32.mrb[0].mxu0
    %v2223 = vadd.f32 %v1970, %v2222
    %v2224 = vpop.f32.mrb[0].mxu0
    %v2225 = vpop.f32.mrb[0].mxu0
    %v2226 = vadd.f32 %v1970, %v2225
    %v2227 = vpop.f32.mrb[0].mxu0
    %2228 = vdwg.mxu0
    %v2229 = vpack.c.bf16 %v1125, %v1122
    %v2230 = vpack.c.bf16 %v2106, %v2103
    %v2231 = vpack.c.bf16 %v1133, %v1130
    %v2232 = vpack.c.bf16 %v2114, %v2111
    %v2233 = vpack.c.bf16 %v1141, %v1138
    %v2234 = vpack.c.bf16 %v2122, %v2119
    %v2235 = vpack.c.bf16 %v1149, %v1146
    %v2236 = vpack.c.bf16 %v2130, %v2127
    %v2237 = vpack.c.bf16 %v1157, %v1154
    %v2238 = vpack.c.bf16 %v2138, %v2135
    %v2239 = vpack.c.bf16 %v1165, %v1162
    %v2240 = vpack.c.bf16 %v2146, %v2143
    %v2241 = vpack.c.bf16 %v1173, %v1170
    %v2242 = vpack.c.bf16 %v2154, %v2151
    %v2243 = vpack.c.bf16 %v1181, %v1178
    %v2244 = vpack.c.bf16 %v2162, %v2159
    %v2245 = vld [vmem:[#allocation23] sm:$0xf]
    %v2246 = vld [vmem:[#allocation23 + $0x4] sm:$0xf]
    %v2247 = vld [vmem:[#allocation23 + $0x8] sm:$0xf]
    %v2248 = vld [vmem:[#allocation23 + $0xc] sm:$0xf]
    %v2249 = vld [vmem:[#allocation23 + $0x10] sm:$0xf]
    %v2250 = vld [vmem:[#allocation23 + $0x14] sm:$0xf]
    %v2251 = vld [vmem:[#allocation23 + $0x18] sm:$0xf]
    %v2252 = vld [vmem:[#allocation23 + $0x1c] sm:$0xf]
    %v2253 = vld [vmem:[#allocation23 + $0x20] sm:$0xf]
    %v2254 = vld [vmem:[#allocation23 + $0x24] sm:$0xf]
    %v2255 = vld [vmem:[#allocation23 + $0x28] sm:$0xf]
    %v2256 = vld [vmem:[#allocation23 + $0x2c] sm:$0xf]
    %v2257 = vld [vmem:[#allocation23 + $0x30] sm:$0xf]
    %v2258 = vld [vmem:[#allocation23 + $0x34] sm:$0xf]
    %v2259 = vld [vmem:[#allocation23 + $0x38] sm:$0xf]
    %v2260 = vld [vmem:[#allocation23 + $0x3c] sm:$0xf]
    %v2261 = vld [vmem:[#allocation23 + $0x40] sm:$0xf]
    %v2262 = vld [vmem:[#allocation23 + $0x44] sm:$0xf]
    %v2263 = vld [vmem:[#allocation23 + $0x48] sm:$0xf]
    %v2264 = vld [vmem:[#allocation23 + $0x4c] sm:$0xf]
    %v2265 = vld [vmem:[#allocation23 + $0x50] sm:$0xf]
    %v2266 = vld [vmem:[#allocation23 + $0x54] sm:$0xf]
    %v2267 = vld [vmem:[#allocation23 + $0x58] sm:$0xf]
    %v2268 = vld [vmem:[#allocation23 + $0x5c] sm:$0xf]
    %v2269 = vld [vmem:[#allocation23 + $0x60] sm:$0xf]
    %v2270 = vld [vmem:[#allocation23 + $0x64] sm:$0xf]
    %v2271 = vld [vmem:[#allocation23 + $0x68] sm:$0xf]
    %v2272 = vld [vmem:[#allocation23 + $0x6c] sm:$0xf]
    %v2273 = vld [vmem:[#allocation23 + $0x70] sm:$0xf]
    %v2274 = vld [vmem:[#allocation23 + $0x74] sm:$0xf]
    %v2275 = vld [vmem:[#allocation23 + $0x78] sm:$0xf]
    %v2276 = vld [vmem:[#allocation23 + $0x7c] sm:$0xf]
    %v2277 = vld [vmem:[#allocation25] sm:$0x1]
    %v2279 = vlaneseq
    %v2280 = vshrl.u32 %v2279, 7
    %v2281 = vsub.s32 0, %v2280
    %v2282 = vrot.slane %v2277, %v2281
    %v2316 = vunpack.c.l.b16 %v2245
    %v2317 = vunpack.c.l.b16 %v2246
    %v2318 = vunpack.c.l.b16 %v2247
    %v2319 = vunpack.c.l.b16 %v2248
    %v2320 = vunpack.c.l.b16 %v2249
    %v2321 = vunpack.c.l.b16 %v2250
    %v2322 = vunpack.c.l.b16 %v2251
    %v2323 = vunpack.c.l.b16 %v2252
    %v2324 = vunpack.c.l.b16 %v2253
    %v2325 = vunpack.c.l.b16 %v2254
    %v2326 = vunpack.c.l.b16 %v2255
    %v2327 = vunpack.c.l.b16 %v2256
    %v2328 = vunpack.c.l.b16 %v2257
    %v2329 = vunpack.c.l.b16 %v2258
    %v2330 = vunpack.c.l.b16 %v2259
    %v2331 = vunpack.c.l.b16 %v2260
    %v2332 = vunpack.c.l.b16 %v2261
    %v2333 = vunpack.c.l.b16 %v2262
    %v2334 = vunpack.c.l.b16 %v2263
    %v2335 = vunpack.c.l.b16 %v2264
    %v2336 = vunpack.c.l.b16 %v2265
    %v2337 = vunpack.c.l.b16 %v2266
    %v2338 = vunpack.c.l.b16 %v2267
    %v2339 = vunpack.c.l.b16 %v2268
    %v2340 = vunpack.c.l.b16 %v2269
    %v2341 = vunpack.c.l.b16 %v2270
    %v2342 = vunpack.c.l.b16 %v2271
    %v2343 = vunpack.c.l.b16 %v2272
    %v2344 = vunpack.c.l.b16 %v2273
    %v2345 = vunpack.c.l.b16 %v2274
    %v2346 = vunpack.c.l.b16 %v2275
    %v2347 = vunpack.c.l.b16 %v2276
    %v2348 = vpack.c.b16 %v2317, %v2316
    %v2349 = vpack.c.b16 %v2319, %v2318
    %v2350 = vpack.c.b16 %v2321, %v2320
    %v2351 = vpack.c.b16 %v2323, %v2322
    %v2352 = vpack.c.b16 %v2325, %v2324
    %v2353 = vpack.c.b16 %v2327, %v2326
    %v2354 = vpack.c.b16 %v2329, %v2328
    %v2355 = vpack.c.b16 %v2331, %v2330
    %v2356 = vpack.c.b16 %v2333, %v2332
    %v2357 = vpack.c.b16 %v2335, %v2334
    %v2358 = vpack.c.b16 %v2337, %v2336
    %v2359 = vpack.c.b16 %v2339, %v2338
    %v2360 = vpack.c.b16 %v2341, %v2340
    %v2361 = vpack.c.b16 %v2343, %v2342
    %v2362 = vpack.c.b16 %v2345, %v2344
    %v2363 = vpack.c.b16 %v2347, %v2346
    %2380 = vmatprep.subr.bf16.mxu0 0
    %2381 = vmatpush1.bf16.msra.mxu0 %v2348
    %2382 = vmatprep.subr.bf16.mxu0 0
    %2383 = vmatpush1.bf16.msra.mxu0 %v2349
    %2384 = vmatprep.subr.bf16.mxu0 0
    %2385 = vmatpush1.bf16.msra.mxu0 %v2350
    %2386 = vmatprep.subr.bf16.mxu0 0
    %2387 = vmatpush1.bf16.msra.mxu0 %v2351
    %2388 = vmatprep.subr.bf16.mxu0 0
    %2389 = vmatpush1.bf16.msra.mxu0 %v2352
    %2390 = vmatprep.subr.bf16.mxu0 0
    %2391 = vmatpush1.bf16.msra.mxu0 %v2353
    %2392 = vmatprep.subr.bf16.mxu0 0
    %2393 = vmatpush1.bf16.msra.mxu0 %v2354
    %2394 = vmatprep.subr.bf16.mxu0 0
    %2395 = vmatpush1.bf16.msra.mxu0 %v2355
    %2396 = vmatprep.subr.bf16.mxu0 0
    %2397 = vmatpush1.bf16.msra.mxu0 %v2356
    %2398 = vmatprep.subr.bf16.mxu0 0
    %2399 = vmatpush1.bf16.msra.mxu0 %v2357
    %2400 = vmatprep.subr.bf16.mxu0 0
    %2401 = vmatpush1.bf16.msra.mxu0 %v2358
    %2402 = vmatprep.subr.bf16.mxu0 0
    %2403 = vmatpush1.bf16.msra.mxu0 %v2359
    %2404 = vmatprep.subr.bf16.mxu0 0
    %2405 = vmatpush1.bf16.msra.mxu0 %v2360
    %2406 = vmatprep.subr.bf16.mxu0 0
    %2407 = vmatpush1.bf16.msra.mxu0 %v2361
    %2408 = vmatprep.subr.bf16.mxu0 0
    %2409 = vmatpush1.bf16.msra.mxu0 %v2362
    %2410 = vmatprep.subr.bf16.mxu0 0
    %2411 = vmatpush1.bf16.msra.mxu0 %v2363
    %2412 = vmatprep.mubr.bf16.mxu0 %v2230
    %2413 = vmatmul.mubr.bf16.gmra.mrb[0].mxu0 %v2229
    %v2414 = vpop.f32.mrb[0].mxu0
    %v2415 = vadd.f32 %v2282, %v2414
    %v2416 = vpop.f32.mrb[0].mxu0
    %v2417 = vpop.f32.mrb[0].mxu0
    %v2418 = vadd.f32 %v2282, %v2417
    %v2419 = vpop.f32.mrb[0].mxu0
    %2420 = vmatprep.mubr.bf16.mxu0 %v2232
    %2421 = vmatmul.mubr.bf16.gmra.mrb[0].mxu0 %v2231
    %v2422 = vpop.f32.mrb[0].mxu0
    %v2423 = vadd.f32 %v2282, %v2422
    %v2424 = vpop.f32.mrb[0].mxu0
    %v2425 = vpop.f32.mrb[0].mxu0
    %v2426 = vadd.f32 %v2282, %v2425
    %v2427 = vpop.f32.mrb[0].mxu0
    %2428 = vmatprep.mubr.bf16.mxu0 %v2234
    %2429 = vmatmul.mubr.bf16.gmra.mrb[0].mxu0 %v2233
    %v2430 = vpop.f32.mrb[0].mxu0
    %v2431 = vadd.f32 %v2282, %v2430
    %v2432 = vpop.f32.mrb[0].mxu0
    %v2433 = vpop.f32.mrb[0].mxu0
    %v2434 = vadd.f32 %v2282, %v2433
    %v2435 = vpop.f32.mrb[0].mxu0
    %2436 = vmatprep.mubr.bf16.mxu0 %v2236
    %2437 = vmatmul.mubr.bf16.gmra.mrb[0].mxu0 %v2235
    %v2438 = vpop.f32.mrb[0].mxu0
    %v2439 = vadd.f32 %v2282, %v2438
    %v2440 = vpop.f32.mrb[0].mxu0
    %v2441 = vpop.f32.mrb[0].mxu0
    %v2442 = vadd.f32 %v2282, %v2441
    %v2443 = vpop.f32.mrb[0].mxu0
    %2444 = vmatprep.mubr.bf16.mxu0 %v2238
    %2445 = vmatmul.mubr.bf16.gmra.mrb[0].mxu0 %v2237
    %v2446 = vpop.f32.mrb[0].mxu0
    %v2447 = vadd.f32 %v2282, %v2446
    %v2448 = vpop.f32.mrb[0].mxu0
    %v2449 = vpop.f32.mrb[0].mxu0
    %v2450 = vadd.f32 %v2282, %v2449
    %v2451 = vpop.f32.mrb[0].mxu0
    %2452 = vmatprep.mubr.bf16.mxu0 %v2240
    %2453 = vmatmul.mubr.bf16.gmra.mrb[0].mxu0 %v2239
    %v2454 = vpop.f32.mrb[0].mxu0
    %v2455 = vadd.f32 %v2282, %v2454
    %v2456 = vpop.f32.mrb[0].mxu0
    %v2457 = vpop.f32.mrb[0].mxu0
    %v2458 = vadd.f32 %v2282, %v2457
    %v2459 = vpop.f32.mrb[0].mxu0
    %2460 = vmatprep.mubr.bf16.mxu0 %v2242
    %2461 = vmatmul.mubr.bf16.gmra.mrb[0].mxu0 %v2241
    %v2462 = vpop.f32.mrb[0].mxu0
    %v2463 = vadd.f32 %v2282, %v2462
    %v2464 = vpop.f32.mrb[0].mxu0
    %v2465 = vpop.f32.mrb[0].mxu0
    %v2466 = vadd.f32 %v2282, %v2465
    %v2467 = vpop.f32.mrb[0].mxu0
    %2468 = vmatprep.mubr.bf16.mxu0 %v2244
    %2469 = vmatmul.mubr.bf16.gmra.mrb[0].mxu0 %v2243
    %v2470 = vpop.f32.mrb[0].mxu0
    %v2471 = vadd.f32 %v2282, %v2470
    %v2472 = vpop.f32.mrb[0].mxu0
    %v2473 = vpop.f32.mrb[0].mxu0
    %v2474 = vadd.f32 %v2282, %v2473
    %v2475 = vpop.f32.mrb[0].mxu0
    %2476 = vdwg.mxu0
    %v2477 = vxor.u32 %v2415, 2147483648
    %v2478 = vxor.u32 %v2418, 2147483648
    %v2479 = vxor.u32 %v2423, 2147483648
    %v2480 = vxor.u32 %v2426, 2147483648
    %v2481 = vxor.u32 %v2431, 2147483648
    %v2482 = vxor.u32 %v2434, 2147483648
    %v2483 = vxor.u32 %v2439, 2147483648
    %v2484 = vxor.u32 %v2442, 2147483648
    %v2485 = vxor.u32 %v2447, 2147483648
    %v2486 = vxor.u32 %v2450, 2147483648
    %v2487 = vxor.u32 %v2455, 2147483648
    %v2488 = vxor.u32 %v2458, 2147483648
    %v2489 = vxor.u32 %v2463, 2147483648
    %v2490 = vxor.u32 %v2466, 2147483648
    %v2491 = vxor.u32 %v2471, 2147483648
    %v2492 = vxor.u32 %v2474, 2147483648
    %v2493 = vmul.f32 %v2477, 1.442695
    %v2494 = vpow.pop %v2493
    %v2495 = vmul.f32 %v2478, 1.442695
    %v2496 = vpow.pop %v2495
    %v2497 = vmul.f32 %v2479, 1.442695
    %v2498 = vpow.pop %v2497
    %v2499 = vmul.f32 %v2480, 1.442695
    %v2500 = vpow.pop %v2499
    %v2501 = vmul.f32 %v2481, 1.442695
    %v2502 = vpow.pop %v2501
    %v2503 = vmul.f32 %v2482, 1.442695
    %v2504 = vpow.pop %v2503
    %v2505 = vmul.f32 %v2483, 1.442695
    %v2506 = vpow.pop %v2505
    %v2507 = vmul.f32 %v2484, 1.442695
    %v2508 = vpow.pop %v2507
    %v2509 = vmul.f32 %v2485, 1.442695
    %v2510 = vpow.pop %v2509
    %v2511 = vmul.f32 %v2486, 1.442695
    %v2512 = vpow.pop %v2511
    %v2513 = vmul.f32 %v2487, 1.442695
    %v2514 = vpow.pop %v2513
    %v2515 = vmul.f32 %v2488, 1.442695
    %v2516 = vpow.pop %v2515
    %v2517 = vmul.f32 %v2489, 1.442695
    %v2518 = vpow.pop %v2517
    %v2519 = vmul.f32 %v2490, 1.442695
    %v2520 = vpow.pop %v2519
    %v2521 = vmul.f32 %v2491, 1.442695
    %v2522 = vpow.pop %v2521
    %v2523 = vmul.f32 %v2492, 1.442695
    %v2524 = vpow.pop %v2523
    %v2525 = vadd.f32 %v2494, 1.0
    %v2526 = vadd.f32 %v2496, 1.0
    %v2527 = vadd.f32 %v2498, 1.0
    %v2528 = vadd.f32 %v2500, 1.0
    %v2529 = vadd.f32 %v2502, 1.0
    %v2530 = vadd.f32 %v2504, 1.0
    %v2531 = vadd.f32 %v2506, 1.0
    %v2532 = vadd.f32 %v2508, 1.0
    %v2533 = vadd.f32 %v2510, 1.0
    %v2534 = vadd.f32 %v2512, 1.0
    %v2535 = vadd.f32 %v2514, 1.0
    %v2536 = vadd.f32 %v2516, 1.0
    %v2537 = vadd.f32 %v2518, 1.0
    %v2538 = vadd.f32 %v2520, 1.0
    %v2539 = vadd.f32 %v2522, 1.0
    %v2540 = vadd.f32 %v2524, 1.0
    %v2541 = vrcp.pop %v2525
    %v2542 = vmul.f32 1.0, %v2541
    %v2543 = vrcp.pop %v2526
    %v2544 = vmul.f32 1.0, %v2543
    %v2545 = vrcp.pop %v2527
    %v2546 = vmul.f32 1.0, %v2545
    %v2547 = vrcp.pop %v2528
    %v2548 = vmul.f32 1.0, %v2547
    %v2549 = vrcp.pop %v2529
    %v2550 = vmul.f32 1.0, %v2549
    %v2551 = vrcp.pop %v2530
    %v2552 = vmul.f32 1.0, %v2551
    %v2553 = vrcp.pop %v2531
    %v2554 = vmul.f32 1.0, %v2553
    %v2555 = vrcp.pop %v2532
    %v2556 = vmul.f32 1.0, %v2555
    %v2557 = vrcp.pop %v2533
    %v2558 = vmul.f32 1.0, %v2557
    %v2559 = vrcp.pop %v2534
    %v2560 = vmul.f32 1.0, %v2559
    %v2561 = vrcp.pop %v2535
    %v2562 = vmul.f32 1.0, %v2561
    %v2563 = vrcp.pop %v2536
    %v2564 = vmul.f32 1.0, %v2563
    %v2565 = vrcp.pop %v2537
    %v2566 = vmul.f32 1.0, %v2565
    %v2567 = vrcp.pop %v2538
    %v2568 = vmul.f32 1.0, %v2567
    %v2569 = vrcp.pop %v2539
    %v2570 = vmul.f32 1.0, %v2569
    %v2571 = vrcp.pop %v2540
    %v2572 = vmul.f32 1.0, %v2571
    %v2573 = vpack.c.bf16 %v1477, %v1474
    %v2574 = vpack.c.bf16 %v2170, %v2167
    %v2575 = vpack.c.bf16 %v1485, %v1482
    %v2576 = vpack.c.bf16 %v2178, %v2175
    %v2577 = vpack.c.bf16 %v1493, %v1490
    %v2578 = vpack.c.bf16 %v2186, %v2183
    %v2579 = vpack.c.bf16 %v1501, %v1498
    %v2580 = vpack.c.bf16 %v2194, %v2191
    %v2581 = vpack.c.bf16 %v1509, %v1506
    %v2582 = vpack.c.bf16 %v2202, %v2199
    %v2583 = vpack.c.bf16 %v1517, %v1514
    %v2584 = vpack.c.bf16 %v2210, %v2207
    %v2585 = vpack.c.bf16 %v1525, %v1522
    %v2586 = vpack.c.bf16 %v2218, %v2215
    %v2587 = vpack.c.bf16 %v1533, %v1530
    %v2588 = vpack.c.bf16 %v2226, %v2223
    %v2589 = vld [vmem:[%s37] sm:$0xf]
    %v2590 = vld [vmem:[%s37 + $0x4] sm:$0xf]
    %v2591 = vld [vmem:[%s37 + $0x8] sm:$0xf]
    %v2592 = vld [vmem:[%s37 + $0xc] sm:$0xf]
    %v2593 = vld [vmem:[%s37 + $0x10] sm:$0xf]
    %v2594 = vld [vmem:[%s37 + $0x14] sm:$0xf]
    %v2595 = vld [vmem:[%s37 + $0x18] sm:$0xf]
    %v2596 = vld [vmem:[%s37 + $0x1c] sm:$0xf]
    %v2597 = vld [vmem:[%s37 + $0x20] sm:$0xf]
    %v2598 = vld [vmem:[%s37 + $0x24] sm:$0xf]
    %v2599 = vld [vmem:[%s37 + $0x28] sm:$0xf]
    %v2600 = vld [vmem:[%s37 + $0x2c] sm:$0xf]
    %v2601 = vld [vmem:[%s37 + $0x30] sm:$0xf]
    %v2602 = vld [vmem:[%s37 + $0x34] sm:$0xf]
    %v2603 = vld [vmem:[%s37 + $0x38] sm:$0xf]
    %v2604 = vld [vmem:[%s37 + $0x3c] sm:$0xf]
    %v2605 = vld [vmem:[%s37 + $0x40] sm:$0xf]
    %v2606 = vld [vmem:[%s37 + $0x44] sm:$0xf]
    %v2607 = vld [vmem:[%s37 + $0x48] sm:$0xf]
    %v2608 = vld [vmem:[%s37 + $0x4c] sm:$0xf]
    %v2609 = vld [vmem:[%s37 + $0x50] sm:$0xf]
    %v2610 = vld [vmem:[%s37 + $0x54] sm:$0xf]
    %v2611 = vld [vmem:[%s37 + $0x58] sm:$0xf]
    %v2612 = vld [vmem:[%s37 + $0x5c] sm:$0xf]
    %v2613 = vld [vmem:[%s37 + $0x60] sm:$0xf]
    %v2614 = vld [vmem:[%s37 + $0x64] sm:$0xf]
    %v2615 = vld [vmem:[%s37 + $0x68] sm:$0xf]
    %v2616 = vld [vmem:[%s37 + $0x6c] sm:$0xf]
    %v2617 = vld [vmem:[%s37 + $0x70] sm:$0xf]
    %v2618 = vld [vmem:[%s37 + $0x74] sm:$0xf]
    %v2619 = vld [vmem:[%s37 + $0x78] sm:$0xf]
    %v2620 = vld [vmem:[%s37 + $0x7c] sm:$0xf]
    %v2621 = vld [vmem:[%s39] sm:$0x1]
    %v2623 = vlaneseq
    %v2624 = vshrl.u32 %v2623, 7
    %v2625 = vsub.s32 0, %v2624
    %v2626 = vrot.slane %v2621, %v2625
    %v2660 = vunpack.c.l.b16 %v2589
    %v2661 = vunpack.c.l.b16 %v2590
    %v2662 = vunpack.c.l.b16 %v2591
    %v2663 = vunpack.c.l.b16 %v2592
    %v2664 = vunpack.c.l.b16 %v2593
    %v2665 = vunpack.c.l.b16 %v2594
    %v2666 = vunpack.c.l.b16 %v2595
    %v2667 = vunpack.c.l.b16 %v2596
    %v2668 = vunpack.c.l.b16 %v2597
    %v2669 = vunpack.c.l.b16 %v2598
    %v2670 = vunpack.c.l.b16 %v2599
    %v2671 = vunpack.c.l.b16 %v2600
    %v2672 = vunpack.c.l.b16 %v2601
    %v2673 = vunpack.c.l.b16 %v2602
    %v2674 = vunpack.c.l.b16 %v2603
    %v2675 = vunpack.c.l.b16 %v2604
    %v2676 = vunpack.c.l.b16 %v2605
    %v2677 = vunpack.c.l.b16 %v2606
    %v2678 = vunpack.c.l.b16 %v2607
    %v2679 = vunpack.c.l.b16 %v2608
    %v2680 = vunpack.c.l.b16 %v2609
    %v2681 = vunpack.c.l.b16 %v2610
    %v2682 = vunpack.c.l.b16 %v2611
    %v2683 = vunpack.c.l.b16 %v2612
    %v2684 = vunpack.c.l.b16 %v2613
    %v2685 = vunpack.c.l.b16 %v2614
    %v2686 = vunpack.c.l.b16 %v2615
    %v2687 = vunpack.c.l.b16 %v2616
    %v2688 = vunpack.c.l.b16 %v2617
    %v2689 = vunpack.c.l.b16 %v2618
    %v2690 = vunpack.c.l.b16 %v2619
    %v2691 = vunpack.c.l.b16 %v2620
    %v2692 = vpack.c.b16 %v2661, %v2660
    %v2693 = vpack.c.b16 %v2663, %v2662
    %v2694 = vpack.c.b16 %v2665, %v2664
    %v2695 = vpack.c.b16 %v2667, %v2666
    %v2696 = vpack.c.b16 %v2669, %v2668
    %v2697 = vpack.c.b16 %v2671, %v2670
    %v2698 = vpack.c.b16 %v2673, %v2672
    %v2699 = vpack.c.b16 %v2675, %v2674
    %v2700 = vpack.c.b16 %v2677, %v2676
    %v2701 = vpack.c.b16 %v2679, %v2678
    %v2702 = vpack.c.b16 %v2681, %v2680
    %v2703 = vpack.c.b16 %v2683, %v2682
    %v2704 = vpack.c.b16 %v2685, %v2684
    %v2705 = vpack.c.b16 %v2687, %v2686
    %v2706 = vpack.c.b16 %v2689, %v2688
    %v2707 = vpack.c.b16 %v2691, %v2690
    %2724 = vmatprep.subr.bf16.mxu0 0
    %2725 = vmatpush1.bf16.msra.mxu0 %v2692
    %2726 = vmatprep.subr.bf16.mxu0 0
    %2727 = vmatpush1.bf16.msra.mxu0 %v2693
    %2728 = vmatprep.subr.bf16.mxu0 0
    %2729 = vmatpush1.bf16.msra.mxu0 %v2694
    %2730 = vmatprep.subr.bf16.mxu0 0
    %2731 = vmatpush1.bf16.msra.mxu0 %v2695
    %2732 = vmatprep.subr.bf16.mxu0 0
    %2733 = vmatpush1.bf16.msra.mxu0 %v2696
    %2734 = vmatprep.subr.bf16.mxu0 0
    %2735 = vmatpush1.bf16.msra.mxu0 %v2697
    %2736 = vmatprep.subr.bf16.mxu0 0
    %2737 = vmatpush1.bf16.msra.mxu0 %v2698
    %2738 = vmatprep.subr.bf16.mxu0 0
    %2739 = vmatpush1.bf16.msra.mxu0 %v2699
    %2740 = vmatprep.subr.bf16.mxu0 0
    %2741 = vmatpush1.bf16.msra.mxu0 %v2700
    %2742 = vmatprep.subr.bf16.mxu0 0
    %2743 = vmatpush1.bf16.msra.mxu0 %v2701
    %2744 = vmatprep.subr.bf16.mxu0 0
    %2745 = vmatpush1.bf16.msra.mxu0 %v2702
    %2746 = vmatprep.subr.bf16.mxu0 0
    %2747 = vmatpush1.bf16.msra.mxu0 %v2703
    %2748 = vmatprep.subr.bf16.mxu0 0
    %2749 = vmatpush1.bf16.msra.mxu0 %v2704
    %2750 = vmatprep.subr.bf16.mxu0 0
    %2751 = vmatpush1.bf16.msra.mxu0 %v2705
    %2752 = vmatprep.subr.bf16.mxu0 0
    %2753 = vmatpush1.bf16.msra.mxu0 %v2706
    %2754 = vmatprep.subr.bf16.mxu0 0
    %2755 = vmatpush1.bf16.msra.mxu0 %v2707
    %2756 = vmatprep.mubr.bf16.mxu0 %v2574
    %2757 = vmatmul.mubr.bf16.gmra.mrb[0].mxu0 %v2573
    %v2758 = vpop.f32.mrb[0].mxu0
    %v2759 = vadd.f32 %v2626, %v2758
    %v2760 = vpop.f32.mrb[0].mxu0
    %v2761 = vpop.f32.mrb[0].mxu0
    %v2762 = vadd.f32 %v2626, %v2761
    %v2763 = vpop.f32.mrb[0].mxu0
    %2764 = vmatprep.mubr.bf16.mxu0 %v2576
    %2765 = vmatmul.mubr.bf16.gmra.mrb[0].mxu0 %v2575
    %v2766 = vpop.f32.mrb[0].mxu0
    %v2767 = vadd.f32 %v2626, %v2766
    %v2768 = vpop.f32.mrb[0].mxu0
    %v2769 = vpop.f32.mrb[0].mxu0
    %v2770 = vadd.f32 %v2626, %v2769
    %v2771 = vpop.f32.mrb[0].mxu0
    %2772 = vmatprep.mubr.bf16.mxu0 %v2578
    %2773 = vmatmul.mubr.bf16.gmra.mrb[0].mxu0 %v2577
    %v2774 = vpop.f32.mrb[0].mxu0
    %v2775 = vadd.f32 %v2626, %v2774
    %v2776 = vpop.f32.mrb[0].mxu0
    %v2777 = vpop.f32.mrb[0].mxu0
    %v2778 = vadd.f32 %v2626, %v2777
    %v2779 = vpop.f32.mrb[0].mxu0
    %2780 = vmatprep.mubr.bf16.mxu0 %v2580
    %2781 = vmatmul.mubr.bf16.gmra.mrb[0].mxu0 %v2579
    %v2782 = vpop.f32.mrb[0].mxu0
    %v2783 = vadd.f32 %v2626, %v2782
    %v2784 = vpop.f32.mrb[0].mxu0
    %v2785 = vpop.f32.mrb[0].mxu0
    %v2786 = vadd.f32 %v2626, %v2785
    %v2787 = vpop.f32.mrb[0].mxu0
    %2788 = vmatprep.mubr.bf16.mxu0 %v2582
    %2789 = vmatmul.mubr.bf16.gmra.mrb[0].mxu0 %v2581
    %v2790 = vpop.f32.mrb[0].mxu0
    %v2791 = vadd.f32 %v2626, %v2790
    %v2792 = vpop.f32.mrb[0].mxu0
    %v2793 = vpop.f32.mrb[0].mxu0
    %v2794 = vadd.f32 %v2626, %v2793
    %v2795 = vpop.f32.mrb[0].mxu0
    %2796 = vmatprep.mubr.bf16.mxu0 %v2584
    %2797 = vmatmul.mubr.bf16.gmra.mrb[0].mxu0 %v2583
    %v2798 = vpop.f32.mrb[0].mxu0
    %v2799 = vadd.f32 %v2626, %v2798
    %v2800 = vpop.f32.mrb[0].mxu0
    %v2801 = vpop.f32.mrb[0].mxu0
    %v2802 = vadd.f32 %v2626, %v2801
    %v2803 = vpop.f32.mrb[0].mxu0
    %2804 = vmatprep.mubr.bf16.mxu0 %v2586
    %2805 = vmatmul.mubr.bf16.gmra.mrb[0].mxu0 %v2585
    %v2806 = vpop.f32.mrb[0].mxu0
    %v2807 = vadd.f32 %v2626, %v2806
    %v2808 = vpop.f32.mrb[0].mxu0
    %v2809 = vpop.f32.mrb[0].mxu0
    %v2810 = vadd.f32 %v2626, %v2809
    %v2811 = vpop.f32.mrb[0].mxu0
    %2812 = vmatprep.mubr.bf16.mxu0 %v2588
    %2813 = vmatmul.mubr.bf16.gmra.mrb[0].mxu0 %v2587
    %v2814 = vpop.f32.mrb[0].mxu0
    %v2815 = vadd.f32 %v2626, %v2814
    %v2816 = vpop.f32.mrb[0].mxu0
    %v2817 = vpop.f32.mrb[0].mxu0
    %v2818 = vadd.f32 %v2626, %v2817
    %v2819 = vpop.f32.mrb[0].mxu0
    %2820 = vdwg.mxu0
    %v2821 = vxor.u32 %v2759, 2147483648
    %v2822 = vxor.u32 %v2762, 2147483648
    %v2823 = vxor.u32 %v2767, 2147483648
    %v2824 = vxor.u32 %v2770, 2147483648
    %v2825 = vxor.u32 %v2775, 2147483648
    %v2826 = vxor.u32 %v2778, 2147483648
    %v2827 = vxor.u32 %v2783, 2147483648
    %v2828 = vxor.u32 %v2786, 2147483648
    %v2829 = vxor.u32 %v2791, 2147483648
    %v2830 = vxor.u32 %v2794, 2147483648
    %v2831 = vxor.u32 %v2799, 2147483648
    %v2832 = vxor.u32 %v2802, 2147483648
    %v2833 = vxor.u32 %v2807, 2147483648
    %v2834 = vxor.u32 %v2810, 2147483648
    %v2835 = vxor.u32 %v2815, 2147483648
    %v2836 = vxor.u32 %v2818, 2147483648
    %v2837 = vmul.f32 %v2821, 1.442695
    %v2838 = vpow.pop %v2837
    %v2839 = vmul.f32 %v2822, 1.442695
    %v2840 = vpow.pop %v2839
    %v2841 = vmul.f32 %v2823, 1.442695
    %v2842 = vpow.pop %v2841
    %v2843 = vmul.f32 %v2824, 1.442695
    %v2844 = vpow.pop %v2843
    %v2845 = vmul.f32 %v2825, 1.442695
    %v2846 = vpow.pop %v2845
    %v2847 = vmul.f32 %v2826, 1.442695
    %v2848 = vpow.pop %v2847
    %v2849 = vmul.f32 %v2827, 1.442695
    %v2850 = vpow.pop %v2849
    %v2851 = vmul.f32 %v2828, 1.442695
    %v2852 = vpow.pop %v2851
    %v2853 = vmul.f32 %v2829, 1.442695
    %v2854 = vpow.pop %v2853
    %v2855 = vmul.f32 %v2830, 1.442695
    %v2856 = vpow.pop %v2855
    %v2857 = vmul.f32 %v2831, 1.442695
    %v2858 = vpow.pop %v2857
    %v2859 = vmul.f32 %v2832, 1.442695
    %v2860 = vpow.pop %v2859
    %v2861 = vmul.f32 %v2833, 1.442695
    %v2862 = vpow.pop %v2861
    %v2863 = vmul.f32 %v2834, 1.442695
    %v2864 = vpow.pop %v2863
    %v2865 = vmul.f32 %v2835, 1.442695
    %v2866 = vpow.pop %v2865
    %v2867 = vmul.f32 %v2836, 1.442695
    %v2868 = vpow.pop %v2867
    %v2869 = vadd.f32 %v2838, 1.0
    %v2870 = vadd.f32 %v2840, 1.0
    %v2871 = vadd.f32 %v2842, 1.0
    %v2872 = vadd.f32 %v2844, 1.0
    %v2873 = vadd.f32 %v2846, 1.0
    %v2874 = vadd.f32 %v2848, 1.0
    %v2875 = vadd.f32 %v2850, 1.0
    %v2876 = vadd.f32 %v2852, 1.0
    %v2877 = vadd.f32 %v2854, 1.0
    %v2878 = vadd.f32 %v2856, 1.0
    %v2879 = vadd.f32 %v2858, 1.0
    %v2880 = vadd.f32 %v2860, 1.0
    %v2881 = vadd.f32 %v2862, 1.0
    %v2882 = vadd.f32 %v2864, 1.0
    %v2883 = vadd.f32 %v2866, 1.0
    %v2884 = vadd.f32 %v2868, 1.0
    %v2885 = vrcp.pop %v2869
    %v2886 = vmul.f32 1.0, %v2885
    %v2887 = vrcp.pop %v2870
    %v2888 = vmul.f32 1.0, %v2887
    %v2889 = vrcp.pop %v2871
    %v2890 = vmul.f32 1.0, %v2889
    %v2891 = vrcp.pop %v2872
    %v2892 = vmul.f32 1.0, %v2891
    %v2893 = vrcp.pop %v2873
    %v2894 = vmul.f32 1.0, %v2893
    %v2895 = vrcp.pop %v2874
    %v2896 = vmul.f32 1.0, %v2895
    %v2897 = vrcp.pop %v2875
    %v2898 = vmul.f32 1.0, %v2897
    %v2899 = vrcp.pop %v2876
    %v2900 = vmul.f32 1.0, %v2899
    %v2901 = vrcp.pop %v2877
    %v2902 = vmul.f32 1.0, %v2901
    %v2903 = vrcp.pop %v2878
    %v2904 = vmul.f32 1.0, %v2903
    %v2905 = vrcp.pop %v2879
    %v2906 = vmul.f32 1.0, %v2905
    %v2907 = vrcp.pop %v2880
    %v2908 = vmul.f32 1.0, %v2907
    %v2909 = vrcp.pop %v2881
    %v2910 = vmul.f32 1.0, %v2909
    %v2911 = vrcp.pop %v2882
    %v2912 = vmul.f32 1.0, %v2911
    %v2913 = vrcp.pop %v2883
    %v2914 = vmul.f32 1.0, %v2913
    %v2915 = vrcp.pop %v2884
    %v2916 = vmul.f32 1.0, %v2915
    %v2917 = vmul.f32 %v2103, %v2542
    %v2918 = vmul.f32 %v2106, %v2544
    %v2919 = vmul.f32 %v2111, %v2546
    %v2920 = vmul.f32 %v2114, %v2548
    %v2921 = vmul.f32 %v2119, %v2550
    %v2922 = vmul.f32 %v2122, %v2552
    %v2923 = vmul.f32 %v2127, %v2554
    %v2924 = vmul.f32 %v2130, %v2556
    %v2925 = vmul.f32 %v2135, %v2558
    %v2926 = vmul.f32 %v2138, %v2560
    %v2927 = vmul.f32 %v2143, %v2562
    %v2928 = vmul.f32 %v2146, %v2564
    %v2929 = vmul.f32 %v2151, %v2566
    %v2930 = vmul.f32 %v2154, %v2568
    %v2931 = vmul.f32 %v2159, %v2570
    %v2932 = vmul.f32 %v2162, %v2572
    %v2933 = vadd.f32 %v1122, %v2917
    %v2934 = vadd.f32 %v1125, %v2918
    %v2935 = vadd.f32 %v1130, %v2919
    %v2936 = vadd.f32 %v1133, %v2920
    %v2937 = vadd.f32 %v1138, %v2921
    %v2938 = vadd.f32 %v1141, %v2922
    %v2939 = vadd.f32 %v1146, %v2923
    %v2940 = vadd.f32 %v1149, %v2924
    %v2941 = vadd.f32 %v1154, %v2925
    %v2942 = vadd.f32 %v1157, %v2926
    %v2943 = vadd.f32 %v1162, %v2927
    %v2944 = vadd.f32 %v1165, %v2928
    %v2945 = vadd.f32 %v1170, %v2929
    %v2946 = vadd.f32 %v1173, %v2930
    %v2947 = vadd.f32 %v1178, %v2931
    %v2948 = vadd.f32 %v1181, %v2932
    %v2949 = vmul.f32 %v2167, %v2886
    %v2950 = vmul.f32 %v2170, %v2888
    %v2951 = vmul.f32 %v2175, %v2890
    %v2952 = vmul.f32 %v2178, %v2892
    %v2953 = vmul.f32 %v2183, %v2894
    %v2954 = vmul.f32 %v2186, %v2896
    %v2955 = vmul.f32 %v2191, %v2898
    %v2956 = vmul.f32 %v2194, %v2900
    %v2957 = vmul.f32 %v2199, %v2902
    %v2958 = vmul.f32 %v2202, %v2904
    %v2959 = vmul.f32 %v2207, %v2906
    %v2960 = vmul.f32 %v2210, %v2908
    %v2961 = vmul.f32 %v2215, %v2910
    %v2962 = vmul.f32 %v2218, %v2912
    %v2963 = vmul.f32 %v2223, %v2914
    %v2964 = vmul.f32 %v2226, %v2916
    %v2965 = vadd.f32 %v1474, %v2949
    %v2966 = vadd.f32 %v1477, %v2950
    %v2967 = vadd.f32 %v1482, %v2951
    %v2968 = vadd.f32 %v1485, %v2952
    %v2969 = vadd.f32 %v1490, %v2953
    %v2970 = vadd.f32 %v1493, %v2954
    %v2971 = vadd.f32 %v1498, %v2955
    %v2972 = vadd.f32 %v1501, %v2956
    %v2973 = vadd.f32 %v1506, %v2957
    %v2974 = vadd.f32 %v1509, %v2958
    %v2975 = vadd.f32 %v1514, %v2959
    %v2976 = vadd.f32 %v1517, %v2960
    %v2977 = vadd.f32 %v1522, %v2961
    %v2978 = vadd.f32 %v1525, %v2962
    %v2979 = vadd.f32 %v1530, %v2963
    %v2980 = vadd.f32 %v1533, %v2964
    %v2981 = vpack.c.bf16 %v2934, %v2933
    %v2982 = vpack.c.bf16 %v2936, %v2935
    %v2983 = vpack.c.bf16 %v2938, %v2937
    %v2984 = vpack.c.bf16 %v2940, %v2939
    %v2985 = vpack.c.bf16 %v2942, %v2941
    %v2986 = vpack.c.bf16 %v2944, %v2943
    %v2987 = vpack.c.bf16 %v2946, %v2945
    %v2988 = vpack.c.bf16 %v2948, %v2947
    %v2989 = vld [vmem:[#allocation26] sm:$0xf]
    %v2990 = vld [vmem:[#allocation26 + $0x4] sm:$0xf]
    %v2991 = vld [vmem:[#allocation26 + $0x8] sm:$0xf]
    %v2992 = vld [vmem:[#allocation26 + $0xc] sm:$0xf]
    %v2993 = vld [vmem:[#allocation26 + $0x10] sm:$0xf]
    %v2994 = vld [vmem:[#allocation26 + $0x14] sm:$0xf]
    %v2995 = vld [vmem:[#allocation26 + $0x18] sm:$0xf]
    %v2996 = vld [vmem:[#allocation26 + $0x1c] sm:$0xf]
    %v2997 = vld [vmem:[#allocation26 + $0x20] sm:$0xf]
    %v2998 = vld [vmem:[#allocation26 + $0x24] sm:$0xf]
    %v2999 = vld [vmem:[#allocation26 + $0x28] sm:$0xf]
    %v3000 = vld [vmem:[#allocation26 + $0x2c] sm:$0xf]
    %v3001 = vld [vmem:[#allocation26 + $0x30] sm:$0xf]
    %v3002 = vld [vmem:[#allocation26 + $0x34] sm:$0xf]
    %v3003 = vld [vmem:[#allocation26 + $0x38] sm:$0xf]
    %v3004 = vld [vmem:[#allocation26 + $0x3c] sm:$0xf]
    %v3005 = vld [vmem:[%s43] sm:$0x1]
    %v3007 = vlaneseq
    %v3008 = vshrl.u32 %v3007, 7
    %v3009 = vsub.s32 0, %v3008
    %v3010 = vrot.slane %v3005, %v3009
    %v3028 = vunpack.c.l.b16 %v2989
    %v3029 = vunpack.c.l.b16 %v2990
    %v3030 = vunpack.c.l.b16 %v2991
    %v3031 = vunpack.c.l.b16 %v2992
    %v3032 = vunpack.c.l.b16 %v2993
    %v3033 = vunpack.c.l.b16 %v2994
    %v3034 = vunpack.c.l.b16 %v2995
    %v3035 = vunpack.c.l.b16 %v2996
    %v3036 = vunpack.c.l.b16 %v2997
    %v3037 = vunpack.c.l.b16 %v2998
    %v3038 = vunpack.c.l.b16 %v2999
    %v3039 = vunpack.c.l.b16 %v3000
    %v3040 = vunpack.c.l.b16 %v3001
    %v3041 = vunpack.c.l.b16 %v3002
    %v3042 = vunpack.c.l.b16 %v3003
    %v3043 = vunpack.c.l.b16 %v3004
    %v3044 = vpack.c.b16 %v3029, %v3028
    %v3045 = vpack.c.b16 %v3031, %v3030
    %v3046 = vpack.c.b16 %v3033, %v3032
    %v3047 = vpack.c.b16 %v3035, %v3034
    %v3048 = vpack.c.b16 %v3037, %v3036
    %v3049 = vpack.c.b16 %v3039, %v3038
    %v3050 = vpack.c.b16 %v3041, %v3040
    %v3051 = vpack.c.b16 %v3043, %v3042
    %3060 = vmatprep.subr.bf16.mxu0 0
    %3061 = vmatpush1.bf16.msra.mxu0 %v3044
    %3062 = vmatprep.subr.bf16.mxu0 0
    %3063 = vmatpush1.bf16.msra.mxu0 %v3045
    %3064 = vmatprep.subr.bf16.mxu0 0
    %3065 = vmatpush1.bf16.msra.mxu0 %v3046
    %3066 = vmatprep.subr.bf16.mxu0 0
    %3067 = vmatpush1.bf16.msra.mxu0 %v3047
    %3068 = vmatprep.subr.bf16.mxu0 0
    %3069 = vmatpush1.bf16.msra.mxu0 %v3048
    %3070 = vmatprep.subr.bf16.mxu0 0
    %3071 = vmatpush1.bf16.msra.mxu0 %v3049
    %3072 = vmatprep.subr.bf16.mxu0 0
    %3073 = vmatpush1.bf16.msra.mxu0 %v3050
    %3074 = vmatprep.subr.bf16.mxu0 0
    %3075 = vmatpush1.bf16.msra.mxu0 %v3051
    %3076 = vmatprep.subr.bf16.mxu0 0
    %3077 = vmatpush1.bf16.msra.mxu0 0
    %3078 = vmatprep.subr.bf16.mxu0 0
    %3079 = vmatpush1.bf16.msra.mxu0 0
    %3080 = vmatprep.subr.bf16.mxu0 0
    %3081 = vmatpush1.bf16.msra.mxu0 0
    %3082 = vmatprep.subr.bf16.mxu0 0
    %3083 = vmatpush1.bf16.msra.mxu0 0
    %3084 = vmatprep.subr.bf16.mxu0 0
    %3085 = vmatpush1.bf16.msra.mxu0 0
    %3086 = vmatprep.subr.bf16.mxu0 0
    %3087 = vmatpush1.bf16.msra.mxu0 0
    %3088 = vmatprep.subr.bf16.mxu0 0
    %3089 = vmatpush1.bf16.msra.mxu0 0
    %3090 = vmatprep.subr.bf16.mxu0 0
    %3091 = vmatpush1.bf16.msra.mxu0 0
    %3092 = vmatprep.mubr.bf16.mxu0 0
    %3093 = vmatmul.mubr.bf16.gmra.mrb[0].mxu0 %v2981
    %v3094 = vpop.f32.mrb[0].mxu0
    %v3095 = vadd.f32 %v3010, %v3094
    %v3096 = vpop.f32.mrb[0].mxu0
    %v3097 = vpop.f32.mrb[0].mxu0
    %v3098 = vadd.f32 %v3010, %v3097
    %v3099 = vpop.f32.mrb[0].mxu0
    %3100 = vmatprep.mubr.bf16.mxu0 0
    %3101 = vmatmul.mubr.bf16.gmra.mrb[0].mxu0 %v2982
    %v3102 = vpop.f32.mrb[0].mxu0
    %v3103 = vadd.f32 %v3010, %v3102
    %v3104 = vpop.f32.mrb[0].mxu0
    %v3105 = vpop.f32.mrb[0].mxu0
    %v3106 = vadd.f32 %v3010, %v3105
    %v3107 = vpop.f32.mrb[0].mxu0
    %3108 = vmatprep.mubr.bf16.mxu0 0
    %3109 = vmatmul.mubr.bf16.gmra.mrb[0].mxu0 %v2983
    %v3110 = vpop.f32.mrb[0].mxu0
    %v3111 = vadd.f32 %v3010, %v3110
    %v3112 = vpop.f32.mrb[0].mxu0
    %v3113 = vpop.f32.mrb[0].mxu0
    %v3114 = vadd.f32 %v3010, %v3113
    %v3115 = vpop.f32.mrb[0].mxu0
    %3116 = vmatprep.mubr.bf16.mxu0 0
    %3117 = vmatmul.mubr.bf16.gmra.mrb[0].mxu0 %v2984
    %v3118 = vpop.f32.mrb[0].mxu0
    %v3119 = vadd.f32 %v3010, %v3118
    %v3120 = vpop.f32.mrb[0].mxu0
    %v3121 = vpop.f32.mrb[0].mxu0
    %v3122 = vadd.f32 %v3010, %v3121
    %v3123 = vpop.f32.mrb[0].mxu0
    %3124 = vmatprep.mubr.bf16.mxu0 0
    %3125 = vmatmul.mubr.bf16.gmra.mrb[0].mxu0 %v2985
    %v3126 = vpop.f32.mrb[0].mxu0
    %v3127 = vadd.f32 %v3010, %v3126
    %v3128 = vpop.f32.mrb[0].mxu0
    %v3129 = vpop.f32.mrb[0].mxu0
    %v3130 = vadd.f32 %v3010, %v3129
    %v3131 = vpop.f32.mrb[0].mxu0
    %3132 = vmatprep.mubr.bf16.mxu0 0
    %3133 = vmatmul.mubr.bf16.gmra.mrb[0].mxu0 %v2986
    %v3134 = vpop.f32.mrb[0].mxu0
    %v3135 = vadd.f32 %v3010, %v3134
    %v3136 = vpop.f32.mrb[0].mxu0
    %v3137 = vpop.f32.mrb[0].mxu0
    %v3138 = vadd.f32 %v3010, %v3137
    %v3139 = vpop.f32.mrb[0].mxu0
    %3140 = vmatprep.mubr.bf16.mxu0 0
    %3141 = vmatmul.mubr.bf16.gmra.mrb[0].mxu0 %v2987
    %v3142 = vpop.f32.mrb[0].mxu0
    %v3143 = vadd.f32 %v3010, %v3142
    %v3144 = vpop.f32.mrb[0].mxu0
    %v3145 = vpop.f32.mrb[0].mxu0
    %v3146 = vadd.f32 %v3010, %v3145
    %v3147 = vpop.f32.mrb[0].mxu0
    %3148 = vmatprep.mubr.bf16.mxu0 0
    %3149 = vmatmul.mubr.bf16.gmra.mrb[0].mxu0 %v2988
    %v3150 = vpop.f32.mrb[0].mxu0
    %v3151 = vadd.f32 %v3010, %v3150
    %v3152 = vpop.f32.mrb[0].mxu0
    %v3153 = vpop.f32.mrb[0].mxu0
    %v3154 = vadd.f32 %v3010, %v3153
    %v3155 = vpop.f32.mrb[0].mxu0
    %3156 = vdwg.mxu0
    %v3157 = vmax.f32 %v3095, 0.0
    %v3158 = vmax.f32 %v3098, 0.0
    %v3159 = vmax.f32 %v3103, 0.0
    %v3160 = vmax.f32 %v3106, 0.0
    %v3161 = vmax.f32 %v3111, 0.0
    %v3162 = vmax.f32 %v3114, 0.0
    %v3163 = vmax.f32 %v3119, 0.0
    %v3164 = vmax.f32 %v3122, 0.0
    %v3165 = vmax.f32 %v3127, 0.0
    %v3166 = vmax.f32 %v3130, 0.0
    %v3167 = vmax.f32 %v3135, 0.0
    %v3168 = vmax.f32 %v3138, 0.0
    %v3169 = vmax.f32 %v3143, 0.0
    %v3170 = vmax.f32 %v3146, 0.0
    %v3171 = vmax.f32 %v3151, 0.0
    %v3172 = vmax.f32 %v3154, 0.0
    %v3173 = vadd.f32 %v3157, %v2933
    %v3174 = vadd.f32 %v3158, %v2934
    %v3175 = vadd.f32 %v3159, %v2935
    %v3176 = vadd.f32 %v3160, %v2936
    %v3177 = vadd.f32 %v3161, %v2937
    %v3178 = vadd.f32 %v3162, %v2938
    %v3179 = vadd.f32 %v3163, %v2939
    %v3180 = vadd.f32 %v3164, %v2940
    %v3181 = vadd.f32 %v3165, %v2941
    %v3182 = vadd.f32 %v3166, %v2942
    %v3183 = vadd.f32 %v3167, %v2943
    %v3184 = vadd.f32 %v3168, %v2944
    %v3185 = vadd.f32 %v3169, %v2945
    %v3186 = vadd.f32 %v3170, %v2946
    %v3187 = vadd.f32 %v3171, %v2947
    %v3188 = vadd.f32 %v3172, %v2948
    %v3189 = vld [vmem:[%s49] sm:$0x1]
    %v3190 = vld [vmem:[%s51] sm:$0x1]
    %3191 = vadd.xlane.f32.xlu0 %v3173
    %v3192 = vpop.xlane.xlu0 %3191
    %3193 = vadd.xlane.f32.xlu0 %v3174
    %v3194 = vpop.xlane.xlu0 %3193
    %3195 = vadd.xlane.f32.xlu0 %v3175
    %v3196 = vpop.xlane.xlu0 %3195
    %3197 = vadd.xlane.f32.xlu0 %v3176
    %v3198 = vpop.xlane.xlu0 %3197
    %3199 = vadd.xlane.f32.xlu0 %v3177
    %v3200 = vpop.xlane.xlu0 %3199
    %3201 = vadd.xlane.f32.xlu0 %v3178
    %v3202 = vpop.xlane.xlu0 %3201
    %3203 = vadd.xlane.f32.xlu0 %v3179
    %v3204 = vpop.xlane.xlu0 %3203
    %3205 = vadd.xlane.f32.xlu0 %v3180
    %v3206 = vpop.xlane.xlu0 %3205
    %3207 = vadd.xlane.f32.xlu0 %v3181
    %v3208 = vpop.xlane.xlu0 %3207
    %3209 = vadd.xlane.f32.xlu0 %v3182
    %v3210 = vpop.xlane.xlu0 %3209
    %3211 = vadd.xlane.f32.xlu0 %v3183
    %v3212 = vpop.xlane.xlu0 %3211
    %3213 = vadd.xlane.f32.xlu0 %v3184
    %v3214 = vpop.xlane.xlu0 %3213
    %3215 = vadd.xlane.f32.xlu0 %v3185
    %v3216 = vpop.xlane.xlu0 %3215
    %3217 = vadd.xlane.f32.xlu0 %v3186
    %v3218 = vpop.xlane.xlu0 %3217
    %3219 = vadd.xlane.f32.xlu0 %v3187
    %v3220 = vpop.xlane.xlu0 %3219
    %3221 = vadd.xlane.f32.xlu0 %v3188
    %v3222 = vpop.xlane.xlu0 %3221
    %v3223 = vrcp.pop 128.0
    %v3224 = vmul.f32 %v3192, %v3223
    %v3225 = vmul.f32 %v3194, %v3223
    %v3226 = vmul.f32 %v3196, %v3223
    %v3227 = vmul.f32 %v3198, %v3223
    %v3228 = vmul.f32 %v3200, %v3223
    %v3229 = vmul.f32 %v3202, %v3223
    %v3230 = vmul.f32 %v3204, %v3223
    %v3231 = vmul.f32 %v3206, %v3223
    %v3232 = vmul.f32 %v3208, %v3223
    %v3233 = vmul.f32 %v3210, %v3223
    %v3234 = vmul.f32 %v3212, %v3223
    %v3235 = vmul.f32 %v3214, %v3223
    %v3236 = vmul.f32 %v3216, %v3223
    %v3237 = vmul.f32 %v3218, %v3223
    %v3238 = vmul.f32 %v3220, %v3223
    %v3239 = vmul.f32 %v3222, %v3223
    %v3240 = vsub.f32 %v3173, %v3224
    %v3241 = vsub.f32 %v3174, %v3225
    %v3242 = vsub.f32 %v3175, %v3226
    %v3243 = vsub.f32 %v3176, %v3227
    %v3244 = vsub.f32 %v3177, %v3228
    %v3245 = vsub.f32 %v3178, %v3229
    %v3246 = vsub.f32 %v3179, %v3230
    %v3247 = vsub.f32 %v3180, %v3231
    %v3248 = vsub.f32 %v3181, %v3232
    %v3249 = vsub.f32 %v3182, %v3233
    %v3250 = vsub.f32 %v3183, %v3234
    %v3251 = vsub.f32 %v3184, %v3235
    %v3252 = vsub.f32 %v3185, %v3236
    %v3253 = vsub.f32 %v3186, %v3237
    %v3254 = vsub.f32 %v3187, %v3238
    %v3255 = vsub.f32 %v3188, %v3239
    %v3256 = vmul.f32 %v3240, %v3240
    %v3257 = vmul.f32 %v3241, %v3241
    %v3258 = vmul.f32 %v3242, %v3242
    %v3259 = vmul.f32 %v3243, %v3243
    %v3260 = vmul.f32 %v3244, %v3244
    %v3261 = vmul.f32 %v3245, %v3245
    %v3262 = vmul.f32 %v3246, %v3246
    %v3263 = vmul.f32 %v3247, %v3247
    %v3264 = vmul.f32 %v3248, %v3248
    %v3265 = vmul.f32 %v3249, %v3249
    %v3266 = vmul.f32 %v3250, %v3250
    %v3267 = vmul.f32 %v3251, %v3251
    %v3268 = vmul.f32 %v3252, %v3252
    %v3269 = vmul.f32 %v3253, %v3253
    %v3270 = vmul.f32 %v3254, %v3254
    %v3271 = vmul.f32 %v3255, %v3255
    %3272 = vadd.xlane.f32.xlu0 %v3256
    %v3273 = vpop.xlane.xlu0 %3272
    %3274 = vadd.xlane.f32.xlu0 %v3257
    %v3275 = vpop.xlane.xlu0 %3274
    %3276 = vadd.xlane.f32.xlu0 %v3258
    %v3277 = vpop.xlane.xlu0 %3276
    %3278 = vadd.xlane.f32.xlu0 %v3259
    %v3279 = vpop.xlane.xlu0 %3278
    %3280 = vadd.xlane.f32.xlu0 %v3260
    %v3281 = vpop.xlane.xlu0 %3280
    %3282 = vadd.xlane.f32.xlu0 %v3261
    %v3283 = vpop.xlane.xlu0 %3282
    %3284 = vadd.xlane.f32.xlu0 %v3262
    %v3285 = vpop.xlane.xlu0 %3284
    %3286 = vadd.xlane.f32.xlu0 %v3263
    %v3287 = vpop.xlane.xlu0 %3286
    %3288 = vadd.xlane.f32.xlu0 %v3264
    %v3289 = vpop.xlane.xlu0 %3288
    %3290 = vadd.xlane.f32.xlu0 %v3265
    %v3291 = vpop.xlane.xlu0 %3290
    %3292 = vadd.xlane.f32.xlu0 %v3266
    %v3293 = vpop.xlane.xlu0 %3292
    %3294 = vadd.xlane.f32.xlu0 %v3267
    %v3295 = vpop.xlane.xlu0 %3294
    %3296 = vadd.xlane.f32.xlu0 %v3268
    %v3297 = vpop.xlane.xlu0 %3296
    %3298 = vadd.xlane.f32.xlu0 %v3269
    %v3299 = vpop.xlane.xlu0 %3298
    %3300 = vadd.xlane.f32.xlu0 %v3270
    %v3301 = vpop.xlane.xlu0 %3300
    %3302 = vadd.xlane.f32.xlu0 %v3271
    %v3303 = vpop.xlane.xlu0 %3302
    %v3304 = vmul.f32 %v3273, %v3223
    %v3305 = vmul.f32 %v3275, %v3223
    %v3306 = vmul.f32 %v3277, %v3223
    %v3307 = vmul.f32 %v3279, %v3223
    %v3308 = vmul.f32 %v3281, %v3223
    %v3309 = vmul.f32 %v3283, %v3223
    %v3310 = vmul.f32 %v3285, %v3223
    %v3311 = vmul.f32 %v3287, %v3223
    %v3312 = vmul.f32 %v3289, %v3223
    %v3313 = vmul.f32 %v3291, %v3223
    %v3314 = vmul.f32 %v3293, %v3223
    %v3315 = vmul.f32 %v3295, %v3223
    %v3316 = vmul.f32 %v3297, %v3223
    %v3317 = vmul.f32 %v3299, %v3223
    %v3318 = vmul.f32 %v3301, %v3223
    %v3319 = vmul.f32 %v3303, %v3223
    %v3320 = vadd.f32 %v3304, 1e-05
    %v3321 = vadd.f32 %v3305, 1e-05
    %v3322 = vadd.f32 %v3306, 1e-05
    %v3323 = vadd.f32 %v3307, 1e-05
    %v3324 = vadd.f32 %v3308, 1e-05
    %v3325 = vadd.f32 %v3309, 1e-05
    %v3326 = vadd.f32 %v3310, 1e-05
    %v3327 = vadd.f32 %v3311, 1e-05
    %v3328 = vadd.f32 %v3312, 1e-05
    %v3329 = vadd.f32 %v3313, 1e-05
    %v3330 = vadd.f32 %v3314, 1e-05
    %v3331 = vadd.f32 %v3315, 1e-05
    %v3332 = vadd.f32 %v3316, 1e-05
    %v3333 = vadd.f32 %v3317, 1e-05
    %v3334 = vadd.f32 %v3318, 1e-05
    %v3335 = vadd.f32 %v3319, 1e-05
    %v3336 = vrsqrt.pop %v3320
    %v3337 = vrsqrt.pop %v3321
    %v3338 = vrsqrt.pop %v3322
    %v3339 = vrsqrt.pop %v3323
    %v3340 = vrsqrt.pop %v3324
    %v3341 = vrsqrt.pop %v3325
    %v3342 = vrsqrt.pop %v3326
    %v3343 = vrsqrt.pop %v3327
    %v3344 = vrsqrt.pop %v3328
    %v3345 = vrsqrt.pop %v3329
    %v3346 = vrsqrt.pop %v3330
    %v3347 = vrsqrt.pop %v3331
    %v3348 = vrsqrt.pop %v3332
    %v3349 = vrsqrt.pop %v3333
    %v3350 = vrsqrt.pop %v3334
    %v3351 = vrsqrt.pop %v3335
    %v3352 = vmul.f32 %v3240, %v3336
    %v3353 = vmul.f32 %v3241, %v3337
    %v3354 = vmul.f32 %v3242, %v3338
    %v3355 = vmul.f32 %v3243, %v3339
    %v3356 = vmul.f32 %v3244, %v3340
    %v3357 = vmul.f32 %v3245, %v3341
    %v3358 = vmul.f32 %v3246, %v3342
    %v3359 = vmul.f32 %v3247, %v3343
    %v3360 = vmul.f32 %v3248, %v3344
    %v3361 = vmul.f32 %v3249, %v3345
    %v3362 = vmul.f32 %v3250, %v3346
    %v3363 = vmul.f32 %v3251, %v3347
    %v3364 = vmul.f32 %v3252, %v3348
    %v3365 = vmul.f32 %v3253, %v3349
    %v3366 = vmul.f32 %v3254, %v3350
    %v3367 = vmul.f32 %v3255, %v3351
    %v3369 = vlaneseq
    %v3370 = vshrl.u32 %v3369, 7
    %v3371 = vsub.s32 0, %v3370
    %v3372 = vrot.slane %v3189, %v3371
    %v3374 = vmul.f32 %v3352, %v3372
    %v3375 = vmul.f32 %v3353, %v3372
    %v3376 = vmul.f32 %v3354, %v3372
    %v3377 = vmul.f32 %v3355, %v3372
    %v3378 = vmul.f32 %v3356, %v3372
    %v3379 = vmul.f32 %v3357, %v3372
    %v3380 = vmul.f32 %v3358, %v3372
    %v3381 = vmul.f32 %v3359, %v3372
    %v3382 = vmul.f32 %v3360, %v3372
    %v3383 = vmul.f32 %v3361, %v3372
    %v3384 = vmul.f32 %v3362, %v3372
    %v3385 = vmul.f32 %v3363, %v3372
    %v3386 = vmul.f32 %v3364, %v3372
    %v3387 = vmul.f32 %v3365, %v3372
    %v3388 = vmul.f32 %v3366, %v3372
    %v3389 = vmul.f32 %v3367, %v3372
    %v3391 = vlaneseq
    %v3392 = vshrl.u32 %v3391, 7
    %v3393 = vsub.s32 0, %v3392
    %v3394 = vrot.slane %v3190, %v3393
    %v3396 = vadd.f32 %v3374, %v3394
    %v3397 = vadd.f32 %v3375, %v3394
    %v3398 = vadd.f32 %v3376, %v3394
    %v3399 = vadd.f32 %v3377, %v3394
    %v3400 = vadd.f32 %v3378, %v3394
    %v3401 = vadd.f32 %v3379, %v3394
    %v3402 = vadd.f32 %v3380, %v3394
    %v3403 = vadd.f32 %v3381, %v3394
    %v3404 = vadd.f32 %v3382, %v3394
    %v3405 = vadd.f32 %v3383, %v3394
    %v3406 = vadd.f32 %v3384, %v3394
    %v3407 = vadd.f32 %v3385, %v3394
    %v3408 = vadd.f32 %v3386, %v3394
    %v3409 = vadd.f32 %v3387, %v3394
    %v3410 = vadd.f32 %v3388, %v3394
    %v3411 = vadd.f32 %v3389, %v3394
    %v3412 = vpack.c.bf16 %v2966, %v2965
    %v3413 = vpack.c.bf16 %v2968, %v2967
    %v3414 = vpack.c.bf16 %v2970, %v2969
    %v3415 = vpack.c.bf16 %v2972, %v2971
    %v3416 = vpack.c.bf16 %v2974, %v2973
    %v3417 = vpack.c.bf16 %v2976, %v2975
    %v3418 = vpack.c.bf16 %v2978, %v2977
    %v3419 = vpack.c.bf16 %v2980, %v2979
    %v3420 = vld [vmem:[#allocation28] sm:$0xf]
    %v3421 = vld [vmem:[#allocation28 + $0x4] sm:$0xf]
    %v3422 = vld [vmem:[#allocation28 + $0x8] sm:$0xf]
    %v3423 = vld [vmem:[#allocation28 + $0xc] sm:$0xf]
    %v3424 = vld [vmem:[#allocation28 + $0x10] sm:$0xf]
    %v3425 = vld [vmem:[#allocation28 + $0x14] sm:$0xf]
    %v3426 = vld [vmem:[#allocation28 + $0x18] sm:$0xf]
    %v3427 = vld [vmem:[#allocation28 + $0x1c] sm:$0xf]
    %v3428 = vld [vmem:[#allocation28 + $0x20] sm:$0xf]
    %v3429 = vld [vmem:[#allocation28 + $0x24] sm:$0xf]
    %v3430 = vld [vmem:[#allocation28 + $0x28] sm:$0xf]
    %v3431 = vld [vmem:[#allocation28 + $0x2c] sm:$0xf]
    %v3432 = vld [vmem:[#allocation28 + $0x30] sm:$0xf]
    %v3433 = vld [vmem:[#allocation28 + $0x34] sm:$0xf]
    %v3434 = vld [vmem:[#allocation28 + $0x38] sm:$0xf]
    %v3435 = vld [vmem:[#allocation28 + $0x3c] sm:$0xf]
    %v3436 = vld [vmem:[%s47] sm:$0x1]
    %v3438 = vlaneseq
    %v3439 = vshrl.u32 %v3438, 7
    %v3440 = vsub.s32 0, %v3439
    %v3441 = vrot.slane %v3436, %v3440
    %v3459 = vunpack.c.l.b16 %v3420
    %v3460 = vunpack.c.l.b16 %v3421
    %v3461 = vunpack.c.l.b16 %v3422
    %v3462 = vunpack.c.l.b16 %v3423
    %v3463 = vunpack.c.l.b16 %v3424
    %v3464 = vunpack.c.l.b16 %v3425
    %v3465 = vunpack.c.l.b16 %v3426
    %v3466 = vunpack.c.l.b16 %v3427
    %v3467 = vunpack.c.l.b16 %v3428
    %v3468 = vunpack.c.l.b16 %v3429
    %v3469 = vunpack.c.l.b16 %v3430
    %v3470 = vunpack.c.l.b16 %v3431
    %v3471 = vunpack.c.l.b16 %v3432
    %v3472 = vunpack.c.l.b16 %v3433
    %v3473 = vunpack.c.l.b16 %v3434
    %v3474 = vunpack.c.l.b16 %v3435
    %v3475 = vpack.c.b16 %v3460, %v3459
    %v3476 = vpack.c.b16 %v3462, %v3461
    %v3477 = vpack.c.b16 %v3464, %v3463
    %v3478 = vpack.c.b16 %v3466, %v3465
    %v3479 = vpack.c.b16 %v3468, %v3467
    %v3480 = vpack.c.b16 %v3470, %v3469
    %v3481 = vpack.c.b16 %v3472, %v3471
    %v3482 = vpack.c.b16 %v3474, %v3473
    %3491 = vmatprep.subr.bf16.mxu0 0
    %3492 = vmatpush1.bf16.msra.mxu0 %v3475
    %3493 = vmatprep.subr.bf16.mxu0 0
    %3494 = vmatpush1.bf16.msra.mxu0 %v3476
    %3495 = vmatprep.subr.bf16.mxu0 0
    %3496 = vmatpush1.bf16.msra.mxu0 %v3477
    %3497 = vmatprep.subr.bf16.mxu0 0
    %3498 = vmatpush1.bf16.msra.mxu0 %v3478
    %3499 = vmatprep.subr.bf16.mxu0 0
    %3500 = vmatpush1.bf16.msra.mxu0 %v3479
    %3501 = vmatprep.subr.bf16.mxu0 0
    %3502 = vmatpush1.bf16.msra.mxu0 %v3480
    %3503 = vmatprep.subr.bf16.mxu0 0
    %3504 = vmatpush1.bf16.msra.mxu0 %v3481
    %3505 = vmatprep.subr.bf16.mxu0 0
    %3506 = vmatpush1.bf16.msra.mxu0 %v3482
    %3507 = vmatprep.subr.bf16.mxu0 0
    %3508 = vmatpush1.bf16.msra.mxu0 0
    %3509 = vmatprep.subr.bf16.mxu0 0
    %3510 = vmatpush1.bf16.msra.mxu0 0
    %3511 = vmatprep.subr.bf16.mxu0 0
    %3512 = vmatpush1.bf16.msra.mxu0 0
    %3513 = vmatprep.subr.bf16.mxu0 0
    %3514 = vmatpush1.bf16.msra.mxu0 0
    %3515 = vmatprep.subr.bf16.mxu0 0
    %3516 = vmatpush1.bf16.msra.mxu0 0
    %3517 = vmatprep.subr.bf16.mxu0 0
    %3518 = vmatpush1.bf16.msra.mxu0 0
    %3519 = vmatprep.subr.bf16.mxu0 0
    %3520 = vmatpush1.bf16.msra.mxu0 0
    %3521 = vmatprep.subr.bf16.mxu0 0
    %3522 = vmatpush1.bf16.msra.mxu0 0
    %3523 = vmatprep.mubr.bf16.mxu0 0
    %3524 = vmatmul.mubr.bf16.gmra.mrb[0].mxu0 %v3412
    %v3525 = vpop.f32.mrb[0].mxu0
    %v3526 = vadd.f32 %v3441, %v3525
    %v3527 = vpop.f32.mrb[0].mxu0
    %v3528 = vpop.f32.mrb[0].mxu0
    %v3529 = vadd.f32 %v3441, %v3528
    %v3530 = vpop.f32.mrb[0].mxu0
    %3531 = vmatprep.mubr.bf16.mxu0 0
    %3532 = vmatmul.mubr.bf16.gmra.mrb[0].mxu0 %v3413
    %v3533 = vpop.f32.mrb[0].mxu0
    %v3534 = vadd.f32 %v3441, %v3533
    %v3535 = vpop.f32.mrb[0].mxu0
    %v3536 = vpop.f32.mrb[0].mxu0
    %v3537 = vadd.f32 %v3441, %v3536
    %v3538 = vpop.f32.mrb[0].mxu0
    %3539 = vmatprep.mubr.bf16.mxu0 0
    %3540 = vmatmul.mubr.bf16.gmra.mrb[0].mxu0 %v3414
    %v3541 = vpop.f32.mrb[0].mxu0
    %v3542 = vadd.f32 %v3441, %v3541
    %v3543 = vpop.f32.mrb[0].mxu0
    %v3544 = vpop.f32.mrb[0].mxu0
    %v3545 = vadd.f32 %v3441, %v3544
    %v3546 = vpop.f32.mrb[0].mxu0
    %3547 = vmatprep.mubr.bf16.mxu0 0
    %3548 = vmatmul.mubr.bf16.gmra.mrb[0].mxu0 %v3415
    %v3549 = vpop.f32.mrb[0].mxu0
    %v3550 = vadd.f32 %v3441, %v3549
    %v3551 = vpop.f32.mrb[0].mxu0
    %v3552 = vpop.f32.mrb[0].mxu0
    %v3553 = vadd.f32 %v3441, %v3552
    %v3554 = vpop.f32.mrb[0].mxu0
    %3555 = vmatprep.mubr.bf16.mxu0 0
    %3556 = vmatmul.mubr.bf16.gmra.mrb[0].mxu0 %v3416
    %v3557 = vpop.f32.mrb[0].mxu0
    %v3558 = vadd.f32 %v3441, %v3557
    %v3559 = vpop.f32.mrb[0].mxu0
    %v3560 = vpop.f32.mrb[0].mxu0
    %v3561 = vadd.f32 %v3441, %v3560
    %v3562 = vpop.f32.mrb[0].mxu0
    %3563 = vmatprep.mubr.bf16.mxu0 0
    %3564 = vmatmul.mubr.bf16.gmra.mrb[0].mxu0 %v3417
    %v3565 = vpop.f32.mrb[0].mxu0
    %v3566 = vadd.f32 %v3441, %v3565
    %v3567 = vpop.f32.mrb[0].mxu0
    %v3568 = vpop.f32.mrb[0].mxu0
    %v3569 = vadd.f32 %v3441, %v3568
    %v3570 = vpop.f32.mrb[0].mxu0
    %3571 = vmatprep.mubr.bf16.mxu0 0
    %3572 = vmatmul.mubr.bf16.gmra.mrb[0].mxu0 %v3418
    %v3573 = vpop.f32.mrb[0].mxu0
    %v3574 = vadd.f32 %v3441, %v3573
    %v3575 = vpop.f32.mrb[0].mxu0
    %v3576 = vpop.f32.mrb[0].mxu0
    %v3577 = vadd.f32 %v3441, %v3576
    %v3578 = vpop.f32.mrb[0].mxu0
    %3579 = vmatprep.mubr.bf16.mxu0 0
    %3580 = vmatmul.mubr.bf16.gmra.mrb[0].mxu0 %v3419
    %v3581 = vpop.f32.mrb[0].mxu0
    %v3582 = vadd.f32 %v3441, %v3581
    %v3583 = vpop.f32.mrb[0].mxu0
    %v3584 = vpop.f32.mrb[0].mxu0
    %v3585 = vadd.f32 %v3441, %v3584
    %v3586 = vpop.f32.mrb[0].mxu0
    %3587 = vdwg.mxu0
    %v3588 = vmax.f32 %v3526, 0.0
    %v3589 = vmax.f32 %v3529, 0.0
    %v3590 = vmax.f32 %v3534, 0.0
    %v3591 = vmax.f32 %v3537, 0.0
    %v3592 = vmax.f32 %v3542, 0.0
    %v3593 = vmax.f32 %v3545, 0.0
    %v3594 = vmax.f32 %v3550, 0.0
    %v3595 = vmax.f32 %v3553, 0.0
    %v3596 = vmax.f32 %v3558, 0.0
    %v3597 = vmax.f32 %v3561, 0.0
    %v3598 = vmax.f32 %v3566, 0.0
    %v3599 = vmax.f32 %v3569, 0.0
    %v3600 = vmax.f32 %v3574, 0.0
    %v3601 = vmax.f32 %v3577, 0.0
    %v3602 = vmax.f32 %v3582, 0.0
    %v3603 = vmax.f32 %v3585, 0.0
    %v3604 = vadd.f32 %v3588, %v2965
    %v3605 = vadd.f32 %v3589, %v2966
    %v3606 = vadd.f32 %v3590, %v2967
    %v3607 = vadd.f32 %v3591, %v2968
    %v3608 = vadd.f32 %v3592, %v2969
    %v3609 = vadd.f32 %v3593, %v2970
    %v3610 = vadd.f32 %v3594, %v2971
    %v3611 = vadd.f32 %v3595, %v2972
    %v3612 = vadd.f32 %v3596, %v2973
    %v3613 = vadd.f32 %v3597, %v2974
    %v3614 = vadd.f32 %v3598, %v2975
    %v3615 = vadd.f32 %v3599, %v2976
    %v3616 = vadd.f32 %v3600, %v2977
    %v3617 = vadd.f32 %v3601, %v2978
    %v3618 = vadd.f32 %v3602, %v2979
    %v3619 = vadd.f32 %v3603, %v2980
    %v3620 = vld [vmem:[%s53] sm:$0x1]
    %v3621 = vld [vmem:[%s55] sm:$0x1]
    %3622 = vadd.xlane.f32.xlu0 %v3604
    %v3623 = vpop.xlane.xlu0 %3622
    %3624 = vadd.xlane.f32.xlu0 %v3605
    %v3625 = vpop.xlane.xlu0 %3624
    %3626 = vadd.xlane.f32.xlu0 %v3606
    %v3627 = vpop.xlane.xlu0 %3626
    %3628 = vadd.xlane.f32.xlu0 %v3607
    %v3629 = vpop.xlane.xlu0 %3628
    %3630 = vadd.xlane.f32.xlu0 %v3608
    %v3631 = vpop.xlane.xlu0 %3630
    %3632 = vadd.xlane.f32.xlu0 %v3609
    %v3633 = vpop.xlane.xlu0 %3632
    %3634 = vadd.xlane.f32.xlu0 %v3610
    %v3635 = vpop.xlane.xlu0 %3634
    %3636 = vadd.xlane.f32.xlu0 %v3611
    %v3637 = vpop.xlane.xlu0 %3636
    %3638 = vadd.xlane.f32.xlu0 %v3612
    %v3639 = vpop.xlane.xlu0 %3638
    %3640 = vadd.xlane.f32.xlu0 %v3613
    %v3641 = vpop.xlane.xlu0 %3640
    %3642 = vadd.xlane.f32.xlu0 %v3614
    %v3643 = vpop.xlane.xlu0 %3642
    %3644 = vadd.xlane.f32.xlu0 %v3615
    %v3645 = vpop.xlane.xlu0 %3644
    %3646 = vadd.xlane.f32.xlu0 %v3616
    %v3647 = vpop.xlane.xlu0 %3646
    %3648 = vadd.xlane.f32.xlu0 %v3617
    %v3649 = vpop.xlane.xlu0 %3648
    %3650 = vadd.xlane.f32.xlu0 %v3618
    %v3651 = vpop.xlane.xlu0 %3650
    %3652 = vadd.xlane.f32.xlu0 %v3619
    %v3653 = vpop.xlane.xlu0 %3652
    %v3654 = vmul.f32 %v3623, %v3223
    %v3655 = vmul.f32 %v3625, %v3223
    %v3656 = vmul.f32 %v3627, %v3223
    %v3657 = vmul.f32 %v3629, %v3223
    %v3658 = vmul.f32 %v3631, %v3223
    %v3659 = vmul.f32 %v3633, %v3223
    %v3660 = vmul.f32 %v3635, %v3223
    %v3661 = vmul.f32 %v3637, %v3223
    %v3662 = vmul.f32 %v3639, %v3223
    %v3663 = vmul.f32 %v3641, %v3223
    %v3664 = vmul.f32 %v3643, %v3223
    %v3665 = vmul.f32 %v3645, %v3223
    %v3666 = vmul.f32 %v3647, %v3223
    %v3667 = vmul.f32 %v3649, %v3223
    %v3668 = vmul.f32 %v3651, %v3223
    %v3669 = vmul.f32 %v3653, %v3223
    %v3670 = vsub.f32 %v3604, %v3654
    %v3671 = vsub.f32 %v3605, %v3655
    %v3672 = vsub.f32 %v3606, %v3656
    %v3673 = vsub.f32 %v3607, %v3657
    %v3674 = vsub.f32 %v3608, %v3658
    %v3675 = vsub.f32 %v3609, %v3659
    %v3676 = vsub.f32 %v3610, %v3660
    %v3677 = vsub.f32 %v3611, %v3661
    %v3678 = vsub.f32 %v3612, %v3662
    %v3679 = vsub.f32 %v3613, %v3663
    %v3680 = vsub.f32 %v3614, %v3664
    %v3681 = vsub.f32 %v3615, %v3665
    %v3682 = vsub.f32 %v3616, %v3666
    %v3683 = vsub.f32 %v3617, %v3667
    %v3684 = vsub.f32 %v3618, %v3668
    %v3685 = vsub.f32 %v3619, %v3669
    %v3686 = vmul.f32 %v3670, %v3670
    %v3687 = vmul.f32 %v3671, %v3671
    %v3688 = vmul.f32 %v3672, %v3672
    %v3689 = vmul.f32 %v3673, %v3673
    %v3690 = vmul.f32 %v3674, %v3674
    %v3691 = vmul.f32 %v3675, %v3675
    %v3692 = vmul.f32 %v3676, %v3676
    %v3693 = vmul.f32 %v3677, %v3677
    %v3694 = vmul.f32 %v3678, %v3678
    %v3695 = vmul.f32 %v3679, %v3679
    %v3696 = vmul.f32 %v3680, %v3680
    %v3697 = vmul.f32 %v3681, %v3681
    %v3698 = vmul.f32 %v3682, %v3682
    %v3699 = vmul.f32 %v3683, %v3683
    %v3700 = vmul.f32 %v3684, %v3684
    %v3701 = vmul.f32 %v3685, %v3685
    %3702 = vadd.xlane.f32.xlu0 %v3686
    %v3703 = vpop.xlane.xlu0 %3702
    %3704 = vadd.xlane.f32.xlu0 %v3687
    %v3705 = vpop.xlane.xlu0 %3704
    %3706 = vadd.xlane.f32.xlu0 %v3688
    %v3707 = vpop.xlane.xlu0 %3706
    %3708 = vadd.xlane.f32.xlu0 %v3689
    %v3709 = vpop.xlane.xlu0 %3708
    %3710 = vadd.xlane.f32.xlu0 %v3690
    %v3711 = vpop.xlane.xlu0 %3710
    %3712 = vadd.xlane.f32.xlu0 %v3691
    %v3713 = vpop.xlane.xlu0 %3712
    %3714 = vadd.xlane.f32.xlu0 %v3692
    %v3715 = vpop.xlane.xlu0 %3714
    %3716 = vadd.xlane.f32.xlu0 %v3693
    %v3717 = vpop.xlane.xlu0 %3716
    %3718 = vadd.xlane.f32.xlu0 %v3694
    %v3719 = vpop.xlane.xlu0 %3718
    %3720 = vadd.xlane.f32.xlu0 %v3695
    %v3721 = vpop.xlane.xlu0 %3720
    %3722 = vadd.xlane.f32.xlu0 %v3696
    %v3723 = vpop.xlane.xlu0 %3722
    %3724 = vadd.xlane.f32.xlu0 %v3697
    %v3725 = vpop.xlane.xlu0 %3724
    %3726 = vadd.xlane.f32.xlu0 %v3698
    %v3727 = vpop.xlane.xlu0 %3726
    %3728 = vadd.xlane.f32.xlu0 %v3699
    %v3729 = vpop.xlane.xlu0 %3728
    %3730 = vadd.xlane.f32.xlu0 %v3700
    %v3731 = vpop.xlane.xlu0 %3730
    %3732 = vadd.xlane.f32.xlu0 %v3701
    %v3733 = vpop.xlane.xlu0 %3732
    %v3734 = vmul.f32 %v3703, %v3223
    %v3735 = vmul.f32 %v3705, %v3223
    %v3736 = vmul.f32 %v3707, %v3223
    %v3737 = vmul.f32 %v3709, %v3223
    %v3738 = vmul.f32 %v3711, %v3223
    %v3739 = vmul.f32 %v3713, %v3223
    %v3740 = vmul.f32 %v3715, %v3223
    %v3741 = vmul.f32 %v3717, %v3223
    %v3742 = vmul.f32 %v3719, %v3223
    %v3743 = vmul.f32 %v3721, %v3223
    %v3744 = vmul.f32 %v3723, %v3223
    %v3745 = vmul.f32 %v3725, %v3223
    %v3746 = vmul.f32 %v3727, %v3223
    %v3747 = vmul.f32 %v3729, %v3223
    %v3748 = vmul.f32 %v3731, %v3223
    %v3749 = vmul.f32 %v3733, %v3223
    %v3750 = vadd.f32 %v3734, 1e-05
    %v3751 = vadd.f32 %v3735, 1e-05
    %v3752 = vadd.f32 %v3736, 1e-05
    %v3753 = vadd.f32 %v3737, 1e-05
    %v3754 = vadd.f32 %v3738, 1e-05
    %v3755 = vadd.f32 %v3739, 1e-05
    %v3756 = vadd.f32 %v3740, 1e-05
    %v3757 = vadd.f32 %v3741, 1e-05
    %v3758 = vadd.f32 %v3742, 1e-05
    %v3759 = vadd.f32 %v3743, 1e-05
    %v3760 = vadd.f32 %v3744, 1e-05
    %v3761 = vadd.f32 %v3745, 1e-05
    %v3762 = vadd.f32 %v3746, 1e-05
    %v3763 = vadd.f32 %v3747, 1e-05
    %v3764 = vadd.f32 %v3748, 1e-05
    %v3765 = vadd.f32 %v3749, 1e-05
    %v3766 = vrsqrt.pop %v3750
    %v3767 = vrsqrt.pop %v3751
    %v3768 = vrsqrt.pop %v3752
    %v3769 = vrsqrt.pop %v3753
    %v3770 = vrsqrt.pop %v3754
    %v3771 = vrsqrt.pop %v3755
    %v3772 = vrsqrt.pop %v3756
    %v3773 = vrsqrt.pop %v3757
    %v3774 = vrsqrt.pop %v3758
    %v3775 = vrsqrt.pop %v3759
    %v3776 = vrsqrt.pop %v3760
    %v3777 = vrsqrt.pop %v3761
    %v3778 = vrsqrt.pop %v3762
    %v3779 = vrsqrt.pop %v3763
    %v3780 = vrsqrt.pop %v3764
    %v3781 = vrsqrt.pop %v3765
    %v3782 = vmul.f32 %v3670, %v3766
    %v3783 = vmul.f32 %v3671, %v3767
    %v3784 = vmul.f32 %v3672, %v3768
    %v3785 = vmul.f32 %v3673, %v3769
    %v3786 = vmul.f32 %v3674, %v3770
    %v3787 = vmul.f32 %v3675, %v3771
    %v3788 = vmul.f32 %v3676, %v3772
    %v3789 = vmul.f32 %v3677, %v3773
    %v3790 = vmul.f32 %v3678, %v3774
    %v3791 = vmul.f32 %v3679, %v3775
    %v3792 = vmul.f32 %v3680, %v3776
    %v3793 = vmul.f32 %v3681, %v3777
    %v3794 = vmul.f32 %v3682, %v3778
    %v3795 = vmul.f32 %v3683, %v3779
    %v3796 = vmul.f32 %v3684, %v3780
    %v3797 = vmul.f32 %v3685, %v3781
    %v3799 = vlaneseq
    %v3800 = vshrl.u32 %v3799, 7
    %v3801 = vsub.s32 0, %v3800
    %v3802 = vrot.slane %v3620, %v3801
    %v3804 = vmul.f32 %v3782, %v3802
    %v3805 = vmul.f32 %v3783, %v3802
    %v3806 = vmul.f32 %v3784, %v3802
    %v3807 = vmul.f32 %v3785, %v3802
    %v3808 = vmul.f32 %v3786, %v3802
    %v3809 = vmul.f32 %v3787, %v3802
    %v3810 = vmul.f32 %v3788, %v3802
    %v3811 = vmul.f32 %v3789, %v3802
    %v3812 = vmul.f32 %v3790, %v3802
    %v3813 = vmul.f32 %v3791, %v3802
    %v3814 = vmul.f32 %v3792, %v3802
    %v3815 = vmul.f32 %v3793, %v3802
    %v3816 = vmul.f32 %v3794, %v3802
    %v3817 = vmul.f32 %v3795, %v3802
    %v3818 = vmul.f32 %v3796, %v3802
    %v3819 = vmul.f32 %v3797, %v3802
    %v3821 = vlaneseq
    %v3822 = vshrl.u32 %v3821, 7
    %v3823 = vsub.s32 0, %v3822
    %v3824 = vrot.slane %v3621, %v3823
    %v3826 = vadd.f32 %v3804, %v3824
    %v3827 = vadd.f32 %v3805, %v3824
    %v3828 = vadd.f32 %v3806, %v3824
    %v3829 = vadd.f32 %v3807, %v3824
    %v3830 = vadd.f32 %v3808, %v3824
    %v3831 = vadd.f32 %v3809, %v3824
    %v3832 = vadd.f32 %v3810, %v3824
    %v3833 = vadd.f32 %v3811, %v3824
    %v3834 = vadd.f32 %v3812, %v3824
    %v3835 = vadd.f32 %v3813, %v3824
    %v3836 = vadd.f32 %v3814, %v3824
    %v3837 = vadd.f32 %v3815, %v3824
    %v3838 = vadd.f32 %v3816, %v3824
    %v3839 = vadd.f32 %v3817, %v3824
    %v3840 = vadd.f32 %v3818, %v3824
    %v3841 = vadd.f32 %v3819, %v3824
    %3842 = vst [vmem:[#allocation29] sm:$0xff] %v3396
    %3843 = vst [vmem:[#allocation29 + $0x8] sm:$0xff] %v3397
    %3844 = vst [vmem:[#allocation29 + $0x10] sm:$0xff] %v3398
    %3845 = vst [vmem:[#allocation29 + $0x18] sm:$0xff] %v3399
    %3846 = vst [vmem:[#allocation29 + $0x20] sm:$0xff] %v3400
    %3847 = vst [vmem:[#allocation29 + $0x28] sm:$0xff] %v3401
    %3848 = vst [vmem:[#allocation29 + $0x30] sm:$0xff] %v3402
    %3849 = vst [vmem:[#allocation29 + $0x38] sm:$0xff] %v3403
    %3850 = vst [vmem:[#allocation29 + $0x40] sm:$0xff] %v3404
    %3851 = vst [vmem:[#allocation29 + $0x48] sm:$0xff] %v3405
    %3852 = vst [vmem:[#allocation29 + $0x50] sm:$0xff] %v3406
    %3853 = vst [vmem:[#allocation29 + $0x58] sm:$0xff] %v3407
    %3854 = vst [vmem:[#allocation29 + $0x60] sm:$0xff] %v3408
    %3855 = vst [vmem:[#allocation29 + $0x68] sm:$0xff] %v3409
    %3856 = vst [vmem:[#allocation29 + $0x70] sm:$0xff] %v3410
    %3857 = vst [vmem:[#allocation29 + $0x78] sm:$0xff] %v3411
    %3858 = vst [vmem:[#allocation30] sm:$0xff] %v3826
    %3859 = vst [vmem:[#allocation30 + $0x8] sm:$0xff] %v3827
    %3860 = vst [vmem:[#allocation30 + $0x10] sm:$0xff] %v3828
    %3861 = vst [vmem:[#allocation30 + $0x18] sm:$0xff] %v3829
    %3862 = vst [vmem:[#allocation30 + $0x20] sm:$0xff] %v3830
    %3863 = vst [vmem:[#allocation30 + $0x28] sm:$0xff] %v3831
    %3864 = vst [vmem:[#allocation30 + $0x30] sm:$0xff] %v3832
    %3865 = vst [vmem:[#allocation30 + $0x38] sm:$0xff] %v3833
    %3866 = vst [vmem:[#allocation30 + $0x40] sm:$0xff] %v3834
    %3867 = vst [vmem:[#allocation30 + $0x48] sm:$0xff] %v3835
    %3868 = vst [vmem:[#allocation30 + $0x50] sm:$0xff] %v3836
    %3869 = vst [vmem:[#allocation30 + $0x58] sm:$0xff] %v3837
    %3870 = vst [vmem:[#allocation30 + $0x60] sm:$0xff] %v3838
    %3871 = vst [vmem:[#allocation30 + $0x68] sm:$0xff] %v3839
    %3872 = vst [vmem:[#allocation30 + $0x70] sm:$0xff] %v3840
    %3873 = vst [vmem:[#allocation30 + $0x78] sm:$0xff] %v3841
    // Predicated region
    $region182: #{tpu_custom_call.1} parent=1 // pred_check
      _
    $region183: #{tpu_custom_call.1} parent=1 // pred_check_branch
      %3875 = sbr.rel (0) target = $region185
    $region184: #{tpu_custom_call.1} parent=1 // pred_region
      %s3877 = ssub.s32 2048, 2048
      %3878 = vsyncadd [#allocation4], %s3877
      %s3879 = sshll.u32 [#allocation29], 4
      %s3880 = int_to_ptr.vmem [resolvable:$true] %s3879
      %3885 = dma.vmem_to_hbm [thread:$0]  %s3880, 2048, %s57, [#allocation4], 128, 128, 8
    $region185: #{tpu_custom_call.1} parent=1 // pred_fallthru
      _
    // Predicated region
    $region186: #{tpu_custom_call.1} parent=1 // pred_check
      _
    $region187: #{tpu_custom_call.1} parent=1 // pred_check_branch
      %3887 = sbr.rel (0) target = $region189
    $region188: #{tpu_custom_call.1} parent=1 // pred_region
      %s3889 = ssub.s32 2048, 2048
      %3890 = vsyncadd [#allocation31], %s3889
      %s3891 = sshll.u32 [#allocation30], 4
      %s3892 = int_to_ptr.vmem [resolvable:$true] %s3891
      %3897 = dma.vmem_to_hbm [thread:$0]  %s3892, 2048, %s59, [#allocation31], 128, 128, 8
    $region189: #{tpu_custom_call.1} parent=1 // pred_fallthru
      _
    // Predicated region
    $region190: #{tpu_custom_call.1} parent=1 // pred_check
      _
    $region191: #{tpu_custom_call.1} parent=1 // pred_check_branch
      %3899 = sbr.rel (0) target = $region193
    $region192: #{tpu_custom_call.1} parent=1 // pred_region
      %3900 = dma.done [#allocation4], 2048
    $region193: #{tpu_custom_call.1} parent=1 // pred_fallthru
      _
    // Predicated region
    $region194: #{tpu_custom_call.1} parent=1 // pred_check
      _
    $region195: #{tpu_custom_call.1} parent=1 // pred_check_branch
      %3902 = sbr.rel (0) target = $region197
    $region196: #{tpu_custom_call.1} parent=1 // pred_region
      %3903 = dma.done [#allocation31], 2048
    $region197: #{tpu_custom_call.1} parent=1 // pred_fallthru
      _
    %3904 = vsyncpa [#allocation3], 1
    %3905 = vsyncpa [#allocation6], 1
    %3906 = vsyncpa [#allocation9], 1
    %3907 = vsyncpa [#allocation12], 1
    %3908 = vsyncpa [#allocation15], 1
    %3909 = vsyncpa [#allocation18], 1
    %3910 = vsyncpa [#allocation21], 1
    %3911 = vsyncpa [#allocation24], 1
    %3912 = vsyncpa [#allocation27], 1
    %3913 = vsyncpa [#allocation4], 1
    %3914 = vsyncpa [#allocation31], 1

</llo_original>
